<compile_context>
chip_gen: v7x
topology: tpu7x:2x2x1
jax: 0.10.0
libtpu: 0.0.40
codegen_flags: <defaults>
</compile_context>

<pallas_src>
import functools
import math

import jax
import jax.numpy as jnp
from jax import lax
from jax.experimental import pallas as pl
from jax.experimental.pallas import tpu as pltpu

MXU_DTYPE = jnp.bfloat16   # MXU operand dtype (accumulation is always f32)


# ---------------------------------------------------------------------------
# In-kernel helpers
# ---------------------------------------------------------------------------

def _apply_activation(y, activation):
    if activation is None:
        return y
    if activation == "relu":
        return jnp.maximum(y, 0.0)
    if activation == "gelu":
        # TODO(synk): torch nn.GELU defaults to exact erf; tanh approx used here.
        c = math.sqrt(2.0 / math.pi)
        return 0.5 * y * (1.0 + jnp.tanh(c * (y + 0.044715 * y * y * y)))
    if activation == "elu":
        return jnp.where(y > 0.0, y, jnp.exp(y) - 1.0)
    # TODO(synk): 'prelu' needs a learnable slope parameter; not implemented.
    raise ValueError(f"unsupported activation {activation}")


def _layernorm(x, g, b, eps=1e-5):
    mean = jnp.mean(x, axis=-1, keepdims=True)
    xc = x - mean
    var = jnp.mean(xc * xc, axis=-1, keepdims=True)
    return xc * lax.rsqrt(var + eps) * g + b


def _tile_m(M, target=256):
    """Largest M-tile <= target (multiple of 8); force >=2 grid steps when
    possible so v7x can shard the parallel axis across both TensorCores."""
    if M <= 8:
        return M
    tm = min(target, M)
    if tm == M and M >= 16:
        tm = M // 2
    return max(8, (tm // 8) * 8)


# ---------------------------------------------------------------------------
# Pallas kernels
# ---------------------------------------------------------------------------

def embed_proj_kernel(ids_ref, tbl_ref, wp_ref, bp_ref, pe_ref, o_ref, *,
                      activation, pos_flag, embed_scale):
    """Per-batch: embedding gather (one-hot matmul) + Linear + act + pos-enc."""
    ids = ids_ref[...]                                        # (L, 1) int32
    L = ids.shape[0]
    V = tbl_ref.shape[0]
    # exact row-select: one-hot (f32) @ table (f32)
    onehot = (lax.broadcasted_iota(jnp.int32, (L, V), 1) == ids).astype(jnp.float32)
    emb = jnp.dot(onehot, tbl_ref[...], preferred_element_type=jnp.float32)  # (L, Wv)
    y = jnp.dot(emb.astype(wp_ref.dtype), wp_ref[...],
                preferred_element_type=jnp.float32) + bp_ref[...]            # (L, E)
    y = _apply_activation(y, activation)
    if pos_flag:
        y = y * embed_scale + pe_ref[...]
    o_ref[...] = y.astype(o_ref.dtype)


def attn_block_kernel(lens_ref, x_ref, ln_g_ref, ln_b_ref,
                      wq_ref, bq_ref, wk_ref, bk_ref, wv_ref, bv_ref,
                      wo_ref, bo_ref, o_ref, *, num_heads):
    """Per-batch fused self-attention residual block (pre-LN)."""
    bi = pl.program_id(0)
    x = x_ref[...]                                            # (L, E) f32
    L, E = x.shape
    Dh = E // num_heads

    h = _layernorm(x, ln_g_ref[...], ln_b_ref[...])
    hm = h.astype(wq_ref.dtype)
    q = jnp.dot(hm, wq_ref[...], preferred_element_type=jnp.float32) + bq_ref[...]
    k = jnp.dot(hm, wk_ref[...], preferred_element_type=jnp.float32) + bk_ref[...]
    v = jnp.dot(hm, wv_ref[...], preferred_element_type=jnp.float32) + bv_ref[...]

    # fold 1/sqrt(Dh) into q (L*E mults instead of L*L per head)
    q = q * (1.0 / math.sqrt(Dh))

    # key-padding mask built in-kernel from the scalar-prefetched text_len
    seqlen = lens_ref[bi]
    col = lax.broadcasted_iota(jnp.int32, (1, L), 1)
    kbias = jnp.where(col < seqlen, 0.0, -1e9).astype(jnp.float32)   # (1, L)

    heads = []
    for hd in range(num_heads):
        sl = slice(hd * Dh, (hd + 1) * Dh)
        qh = q[:, sl].astype(MXU_DTYPE)
        kh = k[:, sl].astype(MXU_DTYPE)
        vh = v[:, sl].astype(MXU_DTYPE)
        # contract head dims directly — no in-kernel transpose
        s = lax.dot_general(qh, kh, (((1,), (1,)), ((), ())),
                            preferred_element_type=jnp.float32)      # (L, L)
        s = s + kbias
        m = jnp.max(s, axis=-1, keepdims=True)
        p = jnp.exp(s - m)
        denom = jnp.sum(p, axis=-1, keepdims=True)
        oh = jnp.dot(p.astype(MXU_DTYPE), vh, preferred_element_type=jnp.float32)
        heads.append(oh * pl.reciprocal(denom, approx=True))
    attn = jnp.concatenate(heads, axis=-1)                            # (L, E)

    proj = jnp.dot(attn.astype(wo_ref.dtype), wo_ref[...],
                   preferred_element_type=jnp.float32) + bo_ref[...]
    o_ref[...] = (x + proj).astype(o_ref.dtype)                       # residual fused


def ffn_block_kernel(x_ref, ln_g_ref, ln_b_ref, w1_ref, b1_ref, w2_ref, b2_ref,
                     o_ref, *, activation):
    """M-tiled fused FFN residual block (pre-LN)."""
    x = x_ref[...]                                            # (tm, E) f32
    h = _layernorm(x, ln_g_ref[...], ln_b_ref[...])
    h1 = jnp.dot(h.astype(w1_ref.dtype), w1_ref[...],
                 preferred_element_type=jnp.float32) + b1_ref[...]
    h1 = _apply_activation(h1, activation)
    y = jnp.dot(h1.astype(w2_ref.dtype), w2_ref[...],
                preferred_element_type=jnp.float32) + b2_ref[...]
    o_ref[...] = (x + y).astype(o_ref.dtype)                  # residual fused


def final_kernel(x_ref, ln_g_ref, ln_b_ref, w_ref, bw_ref, o_ref):
    """M-tiled fused final LayerNorm + t_l Linear."""
    x = x_ref[...]
    h = _layernorm(x, ln_g_ref[...], ln_b_ref[...])
    y = jnp.dot(h.astype(w_ref.dtype), w_ref[...],
                preferred_element_type=jnp.float32) + bw_ref[...]
    o_ref[...] = y.astype(o_ref.dtype)


# ---------------------------------------------------------------------------
# Pallas wrappers
# ---------------------------------------------------------------------------

def pallas_embed_proj(ids, table, wp, bp, pe, *, activation, pos_flag, embed_scale):
    B, L, _ = ids.shape
    V, Wv = table.shape
    E = wp.shape[1]
    return pl.pallas_call(
        functools.partial(embed_proj_kernel, activation=activation,
                          pos_flag=pos_flag, embed_scale=embed_scale),
        grid=(B,),
        in_specs=[pl.BlockSpec((None, L, 1), lambda b: (b, 0, 0)),
                  pl.BlockSpec((V, Wv), lambda b: (0, 0)),
                  pl.BlockSpec((Wv, E), lambda b: (0, 0)),
                  pl.BlockSpec((1, E), lambda b: (0, 0)),
                  pl.BlockSpec((L, E), lambda b: (0, 0))],
        out_specs=pl.BlockSpec((None, L, E), lambda b: (b, 0, 0)),
        out_shape=jax.ShapeDtypeStruct((B, L, E), jnp.float32),
        compiler_params=pltpu.CompilerParams(dimension_semantics=("parallel",)),
    )(ids, table, wp, bp, pe)


def pallas_attn_block(x, text_len, lp, *, num_heads):
    B, L, E = x.shape
    x_spec = pl.BlockSpec((None, L, E), lambda b, lens: (b, 0, 0))
    w_spec = pl.BlockSpec((E, E), lambda b, lens: (0, 0))
    v_spec = pl.BlockSpec((1, E), lambda b, lens: (0, 0))
    return pl.pallas_call(
        functools.partial(attn_block_kernel, num_heads=num_heads),
        grid_spec=pltpu.PrefetchScalarGridSpec(
            num_scalar_prefetch=1,
            grid=(B,),
            in_specs=[x_spec, v_spec, v_spec,
                      w_spec, v_spec, w_spec, v_spec, w_spec, v_spec,
                      w_spec, v_spec],
            out_specs=x_spec),
        out_shape=jax.ShapeDtypeStruct((B, L, E), jnp.float32),
        compiler_params=pltpu.CompilerParams(dimension_semantics=("parallel",)),
    )(text_len, x, lp["ln1_g"], lp["ln1_b"],
      lp["wq"], lp["bq"], lp["wk"], lp["bk"], lp["wv"], lp["bv"],
      lp["wo"], lp["bo"])


def pallas_ffn_block(x, lp, *, activation):
    M, E = x.shape
    F = lp["w1"].shape[1]
    tm = _tile_m(M)
    x_spec = pl.BlockSpec((tm, E), lambda i: (i, 0))
    return pl.pallas_call(
        functools.partial(ffn_block_kernel, activation=activation),
        grid=(pl.cdiv(M, tm),),
        in_specs=[x_spec,
                  pl.BlockSpec((1, E), lambda i: (0, 0)),
                  pl.BlockSpec((1, E), lambda i: (0, 0)),
                  pl.BlockSpec((E, F), lambda i: (0, 0)),
                  pl.BlockSpec((1, F), lambda i: (0, 0)),
                  pl.BlockSpec((F, E), lambda i: (0, 0)),
                  pl.BlockSpec((1, E), lambda i: (0, 0))],
        out_specs=x_spec,
        out_shape=jax.ShapeDtypeStruct((M, E), jnp.float32),
        compiler_params=pltpu.CompilerParams(dimension_semantics=("parallel",)),
    )(x, lp["ln2_g"], lp["ln2_b"], lp["w1"], lp["b1"], lp["w2"], lp["b2"])


def pallas_final(x, g, b, w, bw):
    M, E = x.shape
    D = w.shape[1]
    tm = _tile_m(M)
    return pl.pallas_call(
        final_kernel,
        grid=(pl.cdiv(M, tm),),
        in_specs=[pl.BlockSpec((tm, E), lambda i: (i, 0)),
                  pl.BlockSpec((1, E), lambda i: (0, 0)),
                  pl.BlockSpec((1, E), lambda i: (0, 0)),
                  pl.BlockSpec((E, D), lambda i: (0, 0)),
                  pl.BlockSpec((1, D), lambda i: (0, 0))],
        out_specs=pl.BlockSpec((tm, D), lambda i: (i, 0)),
        out_shape=jax.ShapeDtypeStruct((M, D), jnp.float32),
        compiler_params=pltpu.CompilerParams(dimension_semantics=("parallel",)),
    )(x, g, b, w, bw)


# ---------------------------------------------------------------------------
# Parameters (deterministic, synthetic) & positional encoding
# ---------------------------------------------------------------------------

def _xavier(key, fan_in, fan_out):
    std = math.sqrt(2.0 / (fan_in + fan_out))
    return std * jax.random.normal(key, (fan_in, fan_out), jnp.float32)


def init_params(key, *, dim, embed_dim, vocab_size, wordvec_dim,
                num_heads, num_layers, ffn_mult=4):
    keys = jax.random.split(key, 4 + num_layers)
    params = {}
    params["embed"] = jax.random.normal(keys[0], (vocab_size, wordvec_dim),
                                        jnp.float32)        # nn.Embedding N(0,1)
    params["proj_w"] = _xavier(keys[1], wordvec_dim, embed_dim).astype(MXU_DTYPE)
    params["proj_b"] = jnp.zeros((1, embed_dim), jnp.float32)
    params["t_w"] = _xavier(keys[2], embed_dim, dim).astype(MXU_DTYPE)
    params["t_b"] = jnp.zeros((1, dim), jnp.float32)
    params["sentence_token"] = jnp.zeros((1, 1, embed_dim), jnp.float32)  # unused in forward

    layers = []
    ffn_dim = ffn_mult * embed_dim
    for l in range(num_layers):
        lk = jax.random.split(keys[4 + l], 6)
        layers.append(dict(
            ln1_g=jnp.ones((1, embed_dim), jnp.float32),
            ln1_b=jnp.zeros((1, embed_dim), jnp.float32),
            wq=_xavier(lk[0], embed_dim, embed_dim).astype(MXU_DTYPE),
            bq=jnp.zeros((1, embed_dim), jnp.float32),
            wk=_xavier(lk[1], embed_dim, embed_dim).astype(MXU_DTYPE),
            bk=jnp.zeros((1, embed_dim), jnp.float32),
            wv=_xavier(lk[2], embed_dim, embed_dim).astype(MXU_DTYPE),
            bv=jnp.zeros((1, embed_dim), jnp.float32),
            wo=_xavier(lk[3], embed_dim, embed_dim).astype(MXU_DTYPE),
            bo=jnp.zeros((1, embed_dim), jnp.float32),
            ln2_g=jnp.ones((1, embed_dim), jnp.float32),
            ln2_b=jnp.zeros((1, embed_dim), jnp.float32),
            w1=_xavier(lk[4], embed_dim, ffn_dim).astype(MXU_DTYPE),
            b1=jnp.zeros((1, ffn_dim), jnp.float32),
            w2=_xavier(lk[5], ffn_dim, embed_dim).astype(MXU_DTYPE),
            b2=jnp.zeros((1, embed_dim), jnp.float32),
        ))
    params["layers"] = layers
    params["lnf_g"] = jnp.ones((1, embed_dim), jnp.float32)
    params["lnf_b"] = jnp.zeros((1, embed_dim), jnp.float32)
    return params


def sinusoidal_pos_encoding(L, D):
    """Standard interleaved sin/cos positional encoding (precomputed, no jit)."""
    pos = jnp.arange(L, dtype=jnp.float32)[:, None]
    div = jnp.exp(jnp.arange(0, D, 2, dtype=jnp.float32) * (-math.log(10000.0) / D))
    ang = pos * div[None, :]
    pe = jnp.zeros((L, D), jnp.float32)
    pe = pe.at[:, 0::2].set(jnp.sin(ang))
    pe = pe.at[:, 1::2].set(jnp.cos(ang))
    return pe


# ---------------------------------------------------------------------------
# Forward pass
# ---------------------------------------------------------------------------

def textembedding_forward(params, text, text_len, pos_enc, *, embed_dim,
                          num_heads, activation, pos_flag=True):
    B, L = text.shape
    ids = text.reshape(B, L, 1).astype(jnp.int32)

    # embed + proj_l (Linear + act; Dropout = identity) + pos-enc scale/add
    x = pallas_embed_proj(ids, params["embed"], params["proj_w"],
                          params["proj_b"], pos_enc,
                          activation=activation, pos_flag=pos_flag,
                          embed_scale=math.sqrt(embed_dim))       # (B, L, E)

    # TransformerEncoder (MulT-style pre-LN), 2 fused kernels per layer
    for lp in params["layers"]:
        x = pallas_attn_block(x, text_len, lp, num_heads=num_heads)
        x = pallas_ffn_block(x.reshape(B * L, embed_dim), lp,
                             activation=activation).reshape(B, L, embed_dim)

    # final LayerNorm + t_l Linear
    out = pallas_final(x.reshape(B * L, embed_dim), params["lnf_g"],
                       params["lnf_b"], params["t_w"], params["t_b"])
    return out.reshape(B, L, -1)                                  # (batch, seq, dim)


# ---------------------------------------------------------------------------
# Main
# ---------------------------------------------------------------------------

if __name__ == "__main__":
    # module config (small)
    dim = 16
    embed_dim = 32
    activation = "relu"
    vocab_size = 100
    wordvec_dim = 32
    num_heads = 4
    num_layers = 2
    pos_flag = True

    # inputs
    B, L = 2, 8
    key = jax.random.PRNGKey(0)
    k_param, k_text = jax.random.split(key)
    params = init_params(k_param, dim=dim, embed_dim=embed_dim,
                         vocab_size=vocab_size, wordvec_dim=wordvec_dim,
                         num_heads=num_heads, num_layers=num_layers)
    text = jax.random.randint(k_text, (B, L), 0, vocab_size, dtype=jnp.int32)
    text_len = jnp.array([8, 5], dtype=jnp.int32)
    pos_enc = sinusoidal_pos_encoding(L, embed_dim)   # hoisted out of jit

    fwd = jax.jit(functools.partial(textembedding_forward,
                                    embed_dim=embed_dim, num_heads=num_heads,
                                    activation=activation, pos_flag=pos_flag))
    out = fwd(params, text, text_len, pos_enc)
    out = jax.block_until_ready(out)

    assert out.shape == (B, L, dim), out.shape
    assert jnp.all(jnp.isfinite(out))
    print("KERNEL_OK")
</pallas_src>

<mosaic_0001>
module attributes {stable_mosaic.version = 11 : i64} {
  func.func @embed_proj_kernel(%arg0: i32, %arg1: memref<1x8x1xi32, #tpu.memory_space<vmem>>, %arg2: memref<100x32xf32, #tpu.memory_space<vmem>>, %arg3: memref<32x32xbf16, #tpu.memory_space<vmem>>, %arg4: memref<1x32xf32, #tpu.memory_space<vmem>>, %arg5: memref<8x32xf32, #tpu.memory_space<vmem>>, %arg6: memref<1x8x32xf32, #tpu.memory_space<vmem>>) attributes {dimension_semantics = [#tpu.dimension_semantics<parallel>], iteration_bounds = array<i64: 2>, scalar_prefetch = 0 : i64, scratch_operands = 0 : i64, tpu.core_type = #tpu.core_type<tc>, window_params = [{transform_indices = @transform_0, window_bounds = array<i64: 1, 8, 1>}, {pipeline_mode = #tpu.pipeline_mode<synchronous>, transform_indices = @transform_1, window_bounds = array<i64: 100, 32>}, {pipeline_mode = #tpu.pipeline_mode<synchronous>, transform_indices = @transform_2, window_bounds = array<i64: 32, 32>}, {pipeline_mode = #tpu.pipeline_mode<synchronous>, transform_indices = @transform_3, window_bounds = array<i64: 1, 32>}, {pipeline_mode = #tpu.pipeline_mode<synchronous>, transform_indices = @transform_4, window_bounds = array<i64: 8, 32>}, {transform_indices = @transform_5, window_bounds = array<i64: 1, 8, 32>}]} {
    %c0 = arith.constant 0 : index
    %c0_0 = arith.constant 0 : index
    %c0_1 = arith.constant 0 : index
    %0 = vector.load %arg1[%c0, %c0_0, %c0_1] : memref<1x8x1xi32, #tpu.memory_space<vmem>>, vector<1x8x1xi32>
    %1 = vector.shape_cast %0 : vector<1x8x1xi32> to vector<8x1xi32>
    %2 = tpu.iota {dimensions = array<i32: 1>} : vector<8x100xi32>
    %3 = vector.broadcast %1 : vector<8x1xi32> to vector<8x100xi32>
    %4 = arith.cmpi eq, %2, %3 : vector<8x100xi32>
    %5 = arith.extui %4 : vector<8x100xi1> to vector<8x100xi32>
    %6 = arith.sitofp %5 : vector<8x100xi32> to vector<8x100xf32>
    %c0_2 = arith.constant 0 : index
    %c0_3 = arith.constant 0 : index
    %7 = vector.load %arg2[%c0_2, %c0_3] : memref<100x32xf32, #tpu.memory_space<vmem>>, vector<100x32xf32>
    %cst = arith.constant dense<0.000000e+00> : vector<8x32xf32>
    %8 = tpu.matmul %6, %7, %cst {dimension_numbers = #tpu.dot_dimension_numbers<[1], [0], [0], [1], [0, 0, 1, 1], [], []>} : vector<8x100xf32>, vector<100x32xf32>, vector<8x32xf32> -> vector<8x32xf32>
    %9 = arith.truncf %8 : vector<8x32xf32> to vector<8x32xbf16>
    %c0_4 = arith.constant 0 : index
    %c0_5 = arith.constant 0 : index
    %10 = vector.load %arg3[%c0_4, %c0_5] : memref<32x32xbf16, #tpu.memory_space<vmem>>, vector<32x32xbf16>
    %cst_6 = arith.constant dense<0.000000e+00> : vector<8x32xf32>
    %11 = tpu.matmul %9, %10, %cst_6 {dimension_numbers = #tpu.dot_dimension_numbers<[1], [0], [0], [1], [0, 0, 1, 1], [], []>} : vector<8x32xbf16>, vector<32x32xbf16>, vector<8x32xf32> -> vector<8x32xf32>
    %c0_7 = arith.constant 0 : index
    %c0_8 = arith.constant 0 : index
    %12 = vector.load %arg4[%c0_7, %c0_8] : memref<1x32xf32, #tpu.memory_space<vmem>>, vector<1x32xf32>
    %13 = vector.broadcast %12 : vector<1x32xf32> to vector<8x32xf32>
    %14 = arith.addf %11, %13 : vector<8x32xf32>
    %cst_9 = arith.constant 0.000000e+00 : f32
    %15 = vector.broadcast %cst_9 : f32 to vector<8x32xf32>
    %16 = arith.maximumf %14, %15 : vector<8x32xf32>
    %cst_10 = arith.constant 5.65685415 : f32
    %17 = vector.broadcast %cst_10 : f32 to vector<8x32xf32>
    %18 = arith.mulf %16, %17 : vector<8x32xf32>
    %c0_11 = arith.constant 0 : index
    %c0_12 = arith.constant 0 : index
    %19 = vector.load %arg5[%c0_11, %c0_12] : memref<8x32xf32, #tpu.memory_space<vmem>>, vector<8x32xf32>
    %20 = arith.addf %18, %19 : vector<8x32xf32>
    %c0_13 = arith.constant 0 : index
    %c0_14 = arith.constant 0 : index
    %c0_15 = arith.constant 0 : index
    %21 = vector.load %arg6[%c0_13, %c0_14, %c0_15] : memref<1x8x32xf32, #tpu.memory_space<vmem>>, vector<1x8x32xf32>
    %22 = vector.shape_cast %21 : vector<1x8x32xf32> to vector<8x32xf32>
    %23 = vector.shape_cast %20 : vector<8x32xf32> to vector<1x8x32xf32>
    tpu.vector_store %arg6[%c0_13, %c0_14, %c0_15], %23 {strides = array<i32>} : memref<1x8x32xf32, #tpu.memory_space<vmem>>, vector<1x8x32xf32>,
    return
  }
  func.func @transform_0(%arg0: i32) -> (i32, i32, i32) {
    %c0_i32 = arith.constant 0 : i32
    %c0_i32_0 = arith.constant 0 : i32
    %c0_i32_1 = arith.constant 0 : i32
    return %arg0, %c0_i32, %c0_i32_0 : i32, i32, i32
  }
  func.func @transform_1(%arg0: i32) -> (i32, i32) {
    %c0_i32 = arith.constant 0 : i32
    %c0_i32_0 = arith.constant 0 : i32
    %c0_i32_1 = arith.constant 0 : i32
    return %c0_i32, %c0_i32_0 : i32, i32
  }
  func.func @transform_2(%arg0: i32) -> (i32, i32) {
    %c0_i32 = arith.constant 0 : i32
    %c0_i32_0 = arith.constant 0 : i32
    %c0_i32_1 = arith.constant 0 : i32
    return %c0_i32, %c0_i32_0 : i32, i32
  }
  func.func @transform_3(%arg0: i32) -> (i32, i32) {
    %c0_i32 = arith.constant 0 : i32
    %c0_i32_0 = arith.constant 0 : i32
    %c0_i32_1 = arith.constant 0 : i32
    return %c0_i32, %c0_i32_0 : i32, i32
  }
  func.func @transform_4(%arg0: i32) -> (i32, i32) {
    %c0_i32 = arith.constant 0 : i32
    %c0_i32_0 = arith.constant 0 : i32
    %c0_i32_1 = arith.constant 0 : i32
    return %c0_i32, %c0_i32_0 : i32, i32
  }
  func.func @transform_5(%arg0: i32) -> (i32, i32, i32) {
    %c0_i32 = arith.constant 0 : i32
    %c0_i32_0 = arith.constant 0 : i32
    %c0_i32_1 = arith.constant 0 : i32
    return %arg0, %c0_i32, %c0_i32_0 : i32, i32, i32
  }
}

module attributes {stable_mosaic.version = 11 : i64} {
  func.func @attn_block_kernel(%arg0: i32, %arg1: memref<2xi32, #tpu.memory_space<smem>>, %arg2: memref<1x8x32xf32, #tpu.memory_space<vmem>>, %arg3: memref<1x32xf32, #tpu.memory_space<vmem>>, %arg4: memref<1x32xf32, #tpu.memory_space<vmem>>, %arg5: memref<32x32xbf16, #tpu.memory_space<vmem>>, %arg6: memref<1x32xf32, #tpu.memory_space<vmem>>, %arg7: memref<32x32xbf16, #tpu.memory_space<vmem>>, %arg8: memref<1x32xf32, #tpu.memory_space<vmem>>, %arg9: memref<32x32xbf16, #tpu.memory_space<vmem>>, %arg10: memref<1x32xf32, #tpu.memory_space<vmem>>, %arg11: memref<32x32xbf16, #tpu.memory_space<vmem>>, %arg12: memref<1x32xf32, #tpu.memory_space<vmem>>, %arg13: memref<1x8x32xf32, #tpu.memory_space<vmem>>) attributes {dimension_semantics = [#tpu.dimension_semantics<parallel>], iteration_bounds = array<i64: 2>, scalar_prefetch = 1 : i64, scratch_operands = 0 : i64, tpu.core_type = #tpu.core_type<tc>, window_params = [{transform_indices = @transform_0, window_bounds = array<i64: 1, 8, 32>}, {pipeline_mode = #tpu.pipeline_mode<synchronous>, transform_indices = @transform_1, window_bounds = array<i64: 1, 32>}, {pipeline_mode = #tpu.pipeline_mode<synchronous>, transform_indices = @transform_2, window_bounds = array<i64: 1, 32>}, {pipeline_mode = #tpu.pipeline_mode<synchronous>, transform_indices = @transform_3, window_bounds = array<i64: 32, 32>}, {pipeline_mode = #tpu.pipeline_mode<synchronous>, transform_indices = @transform_4, window_bounds = array<i64: 1, 32>}, {pipeline_mode = #tpu.pipeline_mode<synchronous>, transform_indices = @transform_5, window_bounds = array<i64: 32, 32>}, {pipeline_mode = #tpu.pipeline_mode<synchronous>, transform_indices = @transform_6, window_bounds = array<i64: 1, 32>}, {pipeline_mode = #tpu.pipeline_mode<synchronous>, transform_indices = @transform_7, window_bounds = array<i64: 32, 32>}, {pipeline_mode = #tpu.pipeline_mode<synchronous>, transform_indices = @transform_8, window_bounds = array<i64: 1, 32>}, {pipeline_mode = #tpu.pipeline_mode<synchronous>, transform_indices = @transform_9, window_bounds = array<i64: 32, 32>}, {pipeline_mode = #tpu.pipeline_mode<synchronous>, transform_indices = @transform_10, window_bounds = array<i64: 1, 32>}, {transform_indices = @transform_11, window_bounds = array<i64: 1, 8, 32>}]} {
    %c0 = arith.constant 0 : index
    %c0_0 = arith.constant 0 : index
    %c0_1 = arith.constant 0 : index
    %0 = vector.load %arg2[%c0, %c0_0, %c0_1] : memref<1x8x32xf32, #tpu.memory_space<vmem>>, vector<1x8x32xf32>
    %1 = vector.shape_cast %0 : vector<1x8x32xf32> to vector<8x32xf32>
    %c0_2 = arith.constant 0 : index
    %c0_3 = arith.constant 0 : index
    %2 = vector.load %arg3[%c0_2, %c0_3] : memref<1x32xf32, #tpu.memory_space<vmem>>, vector<1x32xf32>
    %c0_4 = arith.constant 0 : index
    %c0_5 = arith.constant 0 : index
    %3 = vector.load %arg4[%c0_4, %c0_5] : memref<1x32xf32, #tpu.memory_space<vmem>>, vector<1x32xf32>
    %cst = arith.constant dense<0.000000e+00> : vector<8xf32>
    %4 = vector.multi_reduction <add>, %1, %cst [1] : vector<8x32xf32> to vector<8xf32>
    %5 = vector.shape_cast %4 : vector<8xf32> to vector<8x1xf32>
    %cst_6 = arith.constant 3.200000e+01 : f32
    %6 = vector.broadcast %cst_6 : f32 to vector<8x1xf32>
    %7 = arith.divf %5, %6 : vector<8x1xf32>
    %8 = vector.broadcast %7 : vector<8x1xf32> to vector<8x32xf32>
    %9 = arith.subf %1, %8 : vector<8x32xf32>
    %10 = arith.mulf %9, %9 : vector<8x32xf32>
    %cst_7 = arith.constant dense<0.000000e+00> : vector<8xf32>
    %11 = vector.multi_reduction <add>, %10, %cst_7 [1] : vector<8x32xf32> to vector<8xf32>
    %12 = vector.shape_cast %11 : vector<8xf32> to vector<8x1xf32>
    %cst_8 = arith.constant 3.200000e+01 : f32
    %13 = vector.broadcast %cst_8 : f32 to vector<8x1xf32>
    %14 = arith.divf %12, %13 : vector<8x1xf32>
    %cst_9 = arith.constant 9.99999974E-6 : f32
    %15 = vector.broadcast %cst_9 : f32 to vector<8x1xf32>
    %16 = arith.addf %14, %15 : vector<8x1xf32>
    %17 = math.rsqrt %16 : vector<8x1xf32>
    %18 = vector.broadcast %17 : vector<8x1xf32> to vector<8x32xf32>
    %19 = arith.mulf %9, %18 : vector<8x32xf32>
    %20 = vector.broadcast %2 : vector<1x32xf32> to vector<8x32xf32>
    %21 = arith.mulf %19, %20 : vector<8x32xf32>
    %22 = vector.broadcast %3 : vector<1x32xf32> to vector<8x32xf32>
    %23 = arith.addf %21, %22 : vector<8x32xf32>
    %24 = arith.truncf %23 : vector<8x32xf32> to vector<8x32xbf16>
    %c0_10 = arith.constant 0 : index
    %c0_11 = arith.constant 0 : index
    %25 = vector.load %arg5[%c0_10, %c0_11] : memref<32x32xbf16, #tpu.memory_space<vmem>>, vector<32x32xbf16>
    %cst_12 = arith.constant dense<0.000000e+00> : vector<8x32xf32>
    %26 = tpu.matmul %24, %25, %cst_12 {dimension_numbers = #tpu.dot_dimension_numbers<[1], [0], [0], [1], [0, 0, 1, 1], [], []>} : vector<8x32xbf16>, vector<32x32xbf16>, vector<8x32xf32> -> vector<8x32xf32>
    %c0_13 = arith.constant 0 : index
    %c0_14 = arith.constant 0 : index
    %27 = vector.load %arg6[%c0_13, %c0_14] : memref<1x32xf32, #tpu.memory_space<vmem>>, vector<1x32xf32>
    %28 = vector.broadcast %27 : vector<1x32xf32> to vector<8x32xf32>
    %29 = arith.addf %26, %28 : vector<8x32xf32>
    %c0_15 = arith.constant 0 : index
    %c0_16 = arith.constant 0 : index
    %30 = vector.load %arg7[%c0_15, %c0_16] : memref<32x32xbf16, #tpu.memory_space<vmem>>, vector<32x32xbf16>
    %cst_17 = arith.constant dense<0.000000e+00> : vector<8x32xf32>
    %31 = tpu.matmul %24, %30, %cst_17 {dimension_numbers = #tpu.dot_dimension_numbers<[1], [0], [0], [1], [0, 0, 1, 1], [], []>} : vector<8x32xbf16>, vector<32x32xbf16>, vector<8x32xf32> -> vector<8x32xf32>
    %c0_18 = arith.constant 0 : index
    %c0_19 = arith.constant 0 : index
    %32 = vector.load %arg8[%c0_18, %c0_19] : memref<1x32xf32, #tpu.memory_space<vmem>>, vector<1x32xf32>
    %33 = vector.broadcast %32 : vector<1x32xf32> to vector<8x32xf32>
    %34 = arith.addf %31, %33 : vector<8x32xf32>
    %c0_20 = arith.constant 0 : index
    %c0_21 = arith.constant 0 : index
    %35 = vector.load %arg9[%c0_20, %c0_21] : memref<32x32xbf16, #tpu.memory_space<vmem>>, vector<32x32xbf16>
    %cst_22 = arith.constant dense<0.000000e+00> : vector<8x32xf32>
    %36 = tpu.matmul %24, %35, %cst_22 {dimension_numbers = #tpu.dot_dimension_numbers<[1], [0], [0], [1], [0, 0, 1, 1], [], []>} : vector<8x32xbf16>, vector<32x32xbf16>, vector<8x32xf32> -> vector<8x32xf32>
    %c0_23 = arith.constant 0 : index
    %c0_24 = arith.constant 0 : index
    %37 = vector.load %arg10[%c0_23, %c0_24] : memref<1x32xf32, #tpu.memory_space<vmem>>, vector<1x32xf32>
    %38 = vector.broadcast %37 : vector<1x32xf32> to vector<8x32xf32>
    %39 = arith.addf %36, %38 : vector<8x32xf32>
    %cst_25 = arith.constant 0.353553385 : f32
    %40 = vector.broadcast %cst_25 : f32 to vector<8x32xf32>
    %41 = arith.mulf %29, %40 : vector<8x32xf32>
    %42 = arith.index_cast %arg0 : i32 to index
    %43 = memref.load %arg1[%42] : memref<2xi32, #tpu.memory_space<smem>>
    %44 = tpu.iota {dimensions = array<i32: 1>} : vector<1x8xi32>
    %45 = vector.broadcast %43 : i32 to vector<1x8xi32>
    %46 = arith.cmpi slt, %44, %45 : vector<1x8xi32>
    %cst_26 = arith.constant 0.000000e+00 : f32
    %cst_27 = arith.constant -1.000000e+09 : f32
    %47 = vector.broadcast %cst_26 : f32 to vector<1x8xf32>
    %48 = vector.broadcast %cst_27 : f32 to vector<1x8xf32>
    %49 = arith.select %46, %47, %48 : vector<1x8xi1>, vector<1x8xf32>
    %50 = vector.extract_strided_slice %41 {offsets = [0, 0], sizes = [8, 8], strides = [1, 1]} : vector<8x32xf32> to vector<8x8xf32>
    %51 = arith.truncf %50 : vector<8x8xf32> to vector<8x8xbf16>
    %52 = vector.extract_strided_slice %34 {offsets = [0, 0], sizes = [8, 8], strides = [1, 1]} : vector<8x32xf32> to vector<8x8xf32>
    %53 = arith.truncf %52 : vector<8x8xf32> to vector<8x8xbf16>
    %54 = vector.extract_strided_slice %39 {offsets = [0, 0], sizes = [8, 8], strides = [1, 1]} : vector<8x32xf32> to vector<8x8xf32>
    %55 = arith.truncf %54 : vector<8x8xf32> to vector<8x8xbf16>
    %cst_28 = arith.constant dense<0.000000e+00> : vector<8x8xf32>
    %56 = tpu.matmul %51, %53, %cst_28 {dimension_numbers = #tpu.dot_dimension_numbers<[1], [1], [0], [0], [0, 0, 1, 0], [], []>} : vector<8x8xbf16>, vector<8x8xbf16>, vector<8x8xf32> -> vector<8x8xf32>
    %57 = vector.broadcast %49 : vector<1x8xf32> to vector<8x8xf32>
    %58 = arith.addf %56, %57 : vector<8x8xf32>
    %cst_29 = arith.constant dense<0xFF800000> : vector<8xf32>
    %59 = vector.multi_reduction <maximumf>, %58, %cst_29 [1] : vector<8x8xf32> to vector<8xf32>
    %60 = vector.shape_cast %59 : vector<8xf32> to vector<8x1xf32>
    %61 = vector.broadcast %60 : vector<8x1xf32> to vector<8x8xf32>
    %62 = arith.subf %58, %61 : vector<8x8xf32>
    %63 = math.exp %62 : vector<8x8xf32>
    %cst_30 = arith.constant dense<0.000000e+00> : vector<8xf32>
    %64 = vector.multi_reduction <add>, %63, %cst_30 [1] : vector<8x8xf32> to vector<8xf32>
    %65 = vector.shape_cast %64 : vector<8xf32> to vector<8x1xf32>
    %66 = arith.truncf %63 : vector<8x8xf32> to vector<8x8xbf16>
    %cst_31 = arith.constant dense<0.000000e+00> : vector<8x8xf32>
    %67 = tpu.matmul %66, %55, %cst_31 {dimension_numbers = #tpu.dot_dimension_numbers<[1], [0], [0], [1], [0, 0, 1, 1], [], []>} : vector<8x8xbf16>, vector<8x8xbf16>, vector<8x8xf32> -> vector<8x8xf32>
    %68 = tpu.reciprocal %65 {approx = true} : vector<8x1xf32> -> vector<8x1xf32>
    %69 = vector.broadcast %68 : vector<8x1xf32> to vector<8x8xf32>
    %70 = arith.mulf %67, %69 : vector<8x8xf32>
    %71 = vector.extract_strided_slice %41 {offsets = [0, 8], sizes = [8, 8], strides = [1, 1]} : vector<8x32xf32> to vector<8x8xf32>
    %72 = arith.truncf %71 : vector<8x8xf32> to vector<8x8xbf16>
    %73 = vector.extract_strided_slice %34 {offsets = [0, 8], sizes = [8, 8], strides = [1, 1]} : vector<8x32xf32> to vector<8x8xf32>
    %74 = arith.truncf %73 : vector<8x8xf32> to vector<8x8xbf16>
    %75 = vector.extract_strided_slice %39 {offsets = [0, 8], sizes = [8, 8], strides = [1, 1]} : vector<8x32xf32> to vector<8x8xf32>
    %76 = arith.truncf %75 : vector<8x8xf32> to vector<8x8xbf16>
    %cst_32 = arith.constant dense<0.000000e+00> : vector<8x8xf32>
    %77 = tpu.matmul %72, %74, %cst_32 {dimension_numbers = #tpu.dot_dimension_numbers<[1], [1], [0], [0], [0, 0, 1, 0], [], []>} : vector<8x8xbf16>, vector<8x8xbf16>, vector<8x8xf32> -> vector<8x8xf32>
    %78 = vector.broadcast %49 : vector<1x8xf32> to vector<8x8xf32>
    %79 = arith.addf %77, %78 : vector<8x8xf32>
    %cst_33 = arith.constant dense<0xFF800000> : vector<8xf32>
    %80 = vector.multi_reduction <maximumf>, %79, %cst_33 [1] : vector<8x8xf32> to vector<8xf32>
    %81 = vector.shape_cast %80 : vector<8xf32> to vector<8x1xf32>
    %82 = vector.broadcast %81 : vector<8x1xf32> to vector<8x8xf32>
    %83 = arith.subf %79, %82 : vector<8x8xf32>
    %84 = math.exp %83 : vector<8x8xf32>
    %cst_34 = arith.constant dense<0.000000e+00> : vector<8xf32>
    %85 = vector.multi_reduction <add>, %84, %cst_34 [1] : vector<8x8xf32> to vector<8xf32>
    %86 = vector.shape_cast %85 : vector<8xf32> to vector<8x1xf32>
    %87 = arith.truncf %84 : vector<8x8xf32> to vector<8x8xbf16>
    %cst_35 = arith.constant dense<0.000000e+00> : vector<8x8xf32>
    %88 = tpu.matmul %87, %76, %cst_35 {dimension_numbers = #tpu.dot_dimension_numbers<[1], [0], [0], [1], [0, 0, 1, 1], [], []>} : vector<8x8xbf16>, vector<8x8xbf16>, vector<8x8xf32> -> vector<8x8xf32>
    %89 = tpu.reciprocal %86 {approx = true} : vector<8x1xf32> -> vector<8x1xf32>
    %90 = vector.broadcast %89 : vector<8x1xf32> to vector<8x8xf32>
    %91 = arith.mulf %88, %90 : vector<8x8xf32>
    %92 = vector.extract_strided_slice %41 {offsets = [0, 16], sizes = [8, 8], strides = [1, 1]} : vector<8x32xf32> to vector<8x8xf32>
    %93 = arith.truncf %92 : vector<8x8xf32> to vector<8x8xbf16>
    %94 = vector.extract_strided_slice %34 {offsets = [0, 16], sizes = [8, 8], strides = [1, 1]} : vector<8x32xf32> to vector<8x8xf32>
    %95 = arith.truncf %94 : vector<8x8xf32> to vector<8x8xbf16>
    %96 = vector.extract_strided_slice %39 {offsets = [0, 16], sizes = [8, 8], strides = [1, 1]} : vector<8x32xf32> to vector<8x8xf32>
    %97 = arith.truncf %96 : vector<8x8xf32> to vector<8x8xbf16>
    %cst_36 = arith.constant dense<0.000000e+00> : vector<8x8xf32>
    %98 = tpu.matmul %93, %95, %cst_36 {dimension_numbers = #tpu.dot_dimension_numbers<[1], [1], [0], [0], [0, 0, 1, 0], [], []>} : vector<8x8xbf16>, vector<8x8xbf16>, vector<8x8xf32> -> vector<8x8xf32>
    %99 = vector.broadcast %49 : vector<1x8xf32> to vector<8x8xf32>
    %100 = arith.addf %98, %99 : vector<8x8xf32>
    %cst_37 = arith.constant dense<0xFF800000> : vector<8xf32>
    %101 = vector.multi_reduction <maximumf>, %100, %cst_37 [1] : vector<8x8xf32> to vector<8xf32>
    %102 = vector.shape_cast %101 : vector<8xf32> to vector<8x1xf32>
    %103 = vector.broadcast %102 : vector<8x1xf32> to vector<8x8xf32>
    %104 = arith.subf %100, %103 : vector<8x8xf32>
    %105 = math.exp %104 : vector<8x8xf32>
    %cst_38 = arith.constant dense<0.000000e+00> : vector<8xf32>
    %106 = vector.multi_reduction <add>, %105, %cst_38 [1] : vector<8x8xf32> to vector<8xf32>
    %107 = vector.shape_cast %106 : vector<8xf32> to vector<8x1xf32>
    %108 = arith.truncf %105 : vector<8x8xf32> to vector<8x8xbf16>
    %cst_39 = arith.constant dense<0.000000e+00> : vector<8x8xf32>
    %109 = tpu.matmul %108, %97, %cst_39 {dimension_numbers = #tpu.dot_dimension_numbers<[1], [0], [0], [1], [0, 0, 1, 1], [], []>} : vector<8x8xbf16>, vector<8x8xbf16>, vector<8x8xf32> -> vector<8x8xf32>
    %110 = tpu.reciprocal %107 {approx = true} : vector<8x1xf32> -> vector<8x1xf32>
    %111 = vector.broadcast %110 : vector<8x1xf32> to vector<8x8xf32>
    %112 = arith.mulf %109, %111 : vector<8x8xf32>
    %113 = vector.extract_strided_slice %41 {offsets = [0, 24], sizes = [8, 8], strides = [1, 1]} : vector<8x32xf32> to vector<8x8xf32>
    %114 = arith.truncf %113 : vector<8x8xf32> to vector<8x8xbf16>
    %115 = vector.extract_strided_slice %34 {offsets = [0, 24], sizes = [8, 8], strides = [1, 1]} : vector<8x32xf32> to vector<8x8xf32>
    %116 = arith.truncf %115 : vector<8x8xf32> to vector<8x8xbf16>
    %117 = vector.extract_strided_slice %39 {offsets = [0, 24], sizes = [8, 8], strides = [1, 1]} : vector<8x32xf32> to vector<8x8xf32>
    %118 = arith.truncf %117 : vector<8x8xf32> to vector<8x8xbf16>
    %cst_40 = arith.constant dense<0.000000e+00> : vector<8x8xf32>
    %119 = tpu.matmul %114, %116, %cst_40 {dimension_numbers = #tpu.dot_dimension_numbers<[1], [1], [0], [0], [0, 0, 1, 0], [], []>} : vector<8x8xbf16>, vector<8x8xbf16>, vector<8x8xf32> -> vector<8x8xf32>
    %120 = vector.broadcast %49 : vector<1x8xf32> to vector<8x8xf32>
    %121 = arith.addf %119, %120 : vector<8x8xf32>
    %cst_41 = arith.constant dense<0xFF800000> : vector<8xf32>
    %122 = vector.multi_reduction <maximumf>, %121, %cst_41 [1] : vector<8x8xf32> to vector<8xf32>
    %123 = vector.shape_cast %122 : vector<8xf32> to vector<8x1xf32>
    %124 = vector.broadcast %123 : vector<8x1xf32> to vector<8x8xf32>
    %125 = arith.subf %121, %124 : vector<8x8xf32>
    %126 = math.exp %125 : vector<8x8xf32>
    %cst_42 = arith.constant dense<0.000000e+00> : vector<8xf32>
    %127 = vector.multi_reduction <add>, %126, %cst_42 [1] : vector<8x8xf32> to vector<8xf32>
    %128 = vector.shape_cast %127 : vector<8xf32> to vector<8x1xf32>
    %129 = arith.truncf %126 : vector<8x8xf32> to vector<8x8xbf16>
    %cst_43 = arith.constant dense<0.000000e+00> : vector<8x8xf32>
    %130 = tpu.matmul %129, %118, %cst_43 {dimension_numbers = #tpu.dot_dimension_numbers<[1], [0], [0], [1], [0, 0, 1, 1], [], []>} : vector<8x8xbf16>, vector<8x8xbf16>, vector<8x8xf32> -> vector<8x8xf32>
    %131 = tpu.reciprocal %128 {approx = true} : vector<8x1xf32> -> vector<8x1xf32>
    %132 = vector.broadcast %131 : vector<8x1xf32> to vector<8x8xf32>
    %133 = arith.mulf %130, %132 : vector<8x8xf32>
    %134 = tpu.concatenate %70, %91, %112, %133 in 1 : vector<8x8xf32>, vector<8x8xf32>, vector<8x8xf32>, vector<8x8xf32> -> vector<8x32xf32>
    %135 = arith.truncf %134 : vector<8x32xf32> to vector<8x32xbf16>
    %c0_44 = arith.constant 0 : index
    %c0_45 = arith.constant 0 : index
    %136 = vector.load %arg11[%c0_44, %c0_45] : memref<32x32xbf16, #tpu.memory_space<vmem>>, vector<32x32xbf16>
    %cst_46 = arith.constant dense<0.000000e+00> : vector<8x32xf32>
    %137 = tpu.matmul %135, %136, %cst_46 {dimension_numbers = #tpu.dot_dimension_numbers<[1], [0], [0], [1], [0, 0, 1, 1], [], []>} : vector<8x32xbf16>, vector<32x32xbf16>, vector<8x32xf32> -> vector<8x32xf32>
    %c0_47 = arith.constant 0 : index
    %c0_48 = arith.constant 0 : index
    %138 = vector.load %arg12[%c0_47, %c0_48] : memref<1x32xf32, #tpu.memory_space<vmem>>, vector<1x32xf32>
    %139 = vector.broadcast %138 : vector<1x32xf32> to vector<8x32xf32>
    %140 = arith.addf %137, %139 : vector<8x32xf32>
    %141 = arith.addf %1, %140 : vector<8x32xf32>
    %c0_49 = arith.constant 0 : index
    %c0_50 = arith.constant 0 : index
    %c0_51 = arith.constant 0 : index
    %142 = vector.load %arg13[%c0_49, %c0_50, %c0_51] : memref<1x8x32xf32, #tpu.memory_space<vmem>>, vector<1x8x32xf32>
    %143 = vector.shape_cast %142 : vector<1x8x32xf32> to vector<8x32xf32>
    %144 = vector.shape_cast %141 : vector<8x32xf32> to vector<1x8x32xf32>
    tpu.vector_store %arg13[%c0_49, %c0_50, %c0_51], %144 {strides = array<i32>} : memref<1x8x32xf32, #tpu.memory_space<vmem>>, vector<1x8x32xf32>,
    return
  }
  func.func @transform_0(%arg0: i32, %arg1: memref<2xi32, #tpu.memory_space<smem>>) -> (i32, i32, i32) {
    %c0_i32 = arith.constant 0 : i32
    %c0_i32_0 = arith.constant 0 : i32
    %c0_i32_1 = arith.constant 0 : i32
    return %arg0, %c0_i32, %c0_i32_0 : i32, i32, i32
  }
  func.func @transform_1(%arg0: i32, %arg1: memref<2xi32, #tpu.memory_space<smem>>) -> (i32, i32) {
    %c0_i32 = arith.constant 0 : i32
    %c0_i32_0 = arith.constant 0 : i32
    %c0_i32_1 = arith.constant 0 : i32
    return %c0_i32, %c0_i32_0 : i32, i32
  }
  func.func @transform_2(%arg0: i32, %arg1: memref<2xi32, #tpu.memory_space<smem>>) -> (i32, i32) {
    %c0_i32 = arith.constant 0 : i32
    %c0_i32_0 = arith.constant 0 : i32
    %c0_i32_1 = arith.constant 0 : i32
    return %c0_i32, %c0_i32_0 : i32, i32
  }
  func.func @transform_3(%arg0: i32, %arg1: memref<2xi32, #tpu.memory_space<smem>>) -> (i32, i32) {
    %c0_i32 = arith.constant 0 : i32
    %c0_i32_0 = arith.constant 0 : i32
    %c0_i32_1 = arith.constant 0 : i32
    return %c0_i32, %c0_i32_0 : i32, i32
  }
  func.func @transform_4(%arg0: i32, %arg1: memref<2xi32, #tpu.memory_space<smem>>) -> (i32, i32) {
    %c0_i32 = arith.constant 0 : i32
    %c0_i32_0 = arith.constant 0 : i32
    %c0_i32_1 = arith.constant 0 : i32
    return %c0_i32, %c0_i32_0 : i32, i32
  }
  func.func @transform_5(%arg0: i32, %arg1: memref<2xi32, #tpu.memory_space<smem>>) -> (i32, i32) {
    %c0_i32 = arith.constant 0 : i32
    %c0_i32_0 = arith.constant 0 : i32
    %c0_i32_1 = arith.constant 0 : i32
    return %c0_i32, %c0_i32_0 : i32, i32
  }
  func.func @transform_6(%arg0: i32, %arg1: memref<2xi32, #tpu.memory_space<smem>>) -> (i32, i32) {
    %c0_i32 = arith.constant 0 : i32
    %c0_i32_0 = arith.constant 0 : i32
    %c0_i32_1 = arith.constant 0 : i32
    return %c0_i32, %c0_i32_0 : i32, i32
  }
  func.func @transform_7(%arg0: i32, %arg1: memref<2xi32, #tpu.memory_space<smem>>) -> (i32, i32) {
    %c0_i32 = arith.constant 0 : i32
    %c0_i32_0 = arith.constant 0 : i32
    %c0_i32_1 = arith.constant 0 : i32
    return %c0_i32, %c0_i32_0 : i32, i32
  }
  func.func @transform_8(%arg0: i32, %arg1: memref<2xi32, #tpu.memory_space<smem>>) -> (i32, i32) {
    %c0_i32 = arith.constant 0 : i32
    %c0_i32_0 = arith.constant 0 : i32
    %c0_i32_1 = arith.constant 0 : i32
    return %c0_i32, %c0_i32_0 : i32, i32
  }
  func.func @transform_9(%arg0: i32, %arg1: memref<2xi32, #tpu.memory_space<smem>>) -> (i32, i32) {
    %c0_i32 = arith.constant 0 : i32
    %c0_i32_0 = arith.constant 0 : i32
    %c0_i32_1 = arith.constant 0 : i32
    return %c0_i32, %c0_i32_0 : i32, i32
  }
  func.func @transform_10(%arg0: i32, %arg1: memref<2xi32, #tpu.memory_space<smem>>) -> (i32, i32) {
    %c0_i32 = arith.constant 0 : i32
    %c0_i32_0 = arith.constant 0 : i32
    %c0_i32_1 = arith.constant 0 : i32
    return %c0_i32, %c0_i32_0 : i32, i32
  }
  func.func @transform_11(%arg0: i32, %arg1: memref<2xi32, #tpu.memory_space<smem>>) -> (i32, i32, i32) {
    %c0_i32 = arith.constant 0 : i32
    %c0_i32_0 = arith.constant 0 : i32
    %c0_i32_1 = arith.constant 0 : i32
    return %arg0, %c0_i32, %c0_i32_0 : i32, i32, i32
  }
}

module attributes {stable_mosaic.version = 11 : i64} {
  func.func @ffn_block_kernel(%arg0: i32, %arg1: memref<8x32xf32, #tpu.memory_space<vmem>>, %arg2: memref<1x32xf32, #tpu.memory_space<vmem>>, %arg3: memref<1x32xf32, #tpu.memory_space<vmem>>, %arg4: memref<32x128xbf16, #tpu.memory_space<vmem>>, %arg5: memref<1x128xf32, #tpu.memory_space<vmem>>, %arg6: memref<128x32xbf16, #tpu.memory_space<vmem>>, %arg7: memref<1x32xf32, #tpu.memory_space<vmem>>, %arg8: memref<8x32xf32, #tpu.memory_space<vmem>>) attributes {dimension_semantics = [#tpu.dimension_semantics<parallel>], iteration_bounds = array<i64: 2>, scalar_prefetch = 0 : i64, scratch_operands = 0 : i64, tpu.core_type = #tpu.core_type<tc>, window_params = [{transform_indices = @transform_0, window_bounds = array<i64: 8, 32>}, {pipeline_mode = #tpu.pipeline_mode<synchronous>, transform_indices = @transform_1, window_bounds = array<i64: 1, 32>}, {pipeline_mode = #tpu.pipeline_mode<synchronous>, transform_indices = @transform_2, window_bounds = array<i64: 1, 32>}, {pipeline_mode = #tpu.pipeline_mode<synchronous>, transform_indices = @transform_3, window_bounds = array<i64: 32, 128>}, {pipeline_mode = #tpu.pipeline_mode<synchronous>, transform_indices = @transform_4, window_bounds = array<i64: 1, 128>}, {pipeline_mode = #tpu.pipeline_mode<synchronous>, transform_indices = @transform_5, window_bounds = array<i64: 128, 32>}, {pipeline_mode = #tpu.pipeline_mode<synchronous>, transform_indices = @transform_6, window_bounds = array<i64: 1, 32>}, {transform_indices = @transform_7, window_bounds = array<i64: 8, 32>}]} {
    %c0 = arith.constant 0 : index
    %c0_0 = arith.constant 0 : index
    %0 = vector.load %arg1[%c0, %c0_0] : memref<8x32xf32, #tpu.memory_space<vmem>>, vector<8x32xf32>
    %c0_1 = arith.constant 0 : index
    %c0_2 = arith.constant 0 : index
    %1 = vector.load %arg2[%c0_1, %c0_2] : memref<1x32xf32, #tpu.memory_space<vmem>>, vector<1x32xf32>
    %c0_3 = arith.constant 0 : index
    %c0_4 = arith.constant 0 : index
    %2 = vector.load %arg3[%c0_3, %c0_4] : memref<1x32xf32, #tpu.memory_space<vmem>>, vector<1x32xf32>
    %cst = arith.constant dense<0.000000e+00> : vector<8xf32>
    %3 = vector.multi_reduction <add>, %0, %cst [1] : vector<8x32xf32> to vector<8xf32>
    %4 = vector.shape_cast %3 : vector<8xf32> to vector<8x1xf32>
    %cst_5 = arith.constant 3.200000e+01 : f32
    %5 = vector.broadcast %cst_5 : f32 to vector<8x1xf32>
    %6 = arith.divf %4, %5 : vector<8x1xf32>
    %7 = vector.broadcast %6 : vector<8x1xf32> to vector<8x32xf32>
    %8 = arith.subf %0, %7 : vector<8x32xf32>
    %9 = arith.mulf %8, %8 : vector<8x32xf32>
    %cst_6 = arith.constant dense<0.000000e+00> : vector<8xf32>
    %10 = vector.multi_reduction <add>, %9, %cst_6 [1] : vector<8x32xf32> to vector<8xf32>
    %11 = vector.shape_cast %10 : vector<8xf32> to vector<8x1xf32>
    %cst_7 = arith.constant 3.200000e+01 : f32
    %12 = vector.broadcast %cst_7 : f32 to vector<8x1xf32>
    %13 = arith.divf %11, %12 : vector<8x1xf32>
    %cst_8 = arith.constant 9.99999974E-6 : f32
    %14 = vector.broadcast %cst_8 : f32 to vector<8x1xf32>
    %15 = arith.addf %13, %14 : vector<8x1xf32>
    %16 = math.rsqrt %15 : vector<8x1xf32>
    %17 = vector.broadcast %16 : vector<8x1xf32> to vector<8x32xf32>
    %18 = arith.mulf %8, %17 : vector<8x32xf32>
    %19 = vector.broadcast %1 : vector<1x32xf32> to vector<8x32xf32>
    %20 = arith.mulf %18, %19 : vector<8x32xf32>
    %21 = vector.broadcast %2 : vector<1x32xf32> to vector<8x32xf32>
    %22 = arith.addf %20, %21 : vector<8x32xf32>
    %23 = arith.truncf %22 : vector<8x32xf32> to vector<8x32xbf16>
    %c0_9 = arith.constant 0 : index
    %c0_10 = arith.constant 0 : index
    %24 = vector.load %arg4[%c0_9, %c0_10] : memref<32x128xbf16, #tpu.memory_space<vmem>>, vector<32x128xbf16>
    %cst_11 = arith.constant dense<0.000000e+00> : vector<8x128xf32>
    %25 = tpu.matmul %23, %24, %cst_11 {dimension_numbers = #tpu.dot_dimension_numbers<[1], [0], [0], [1], [0, 0, 1, 1], [], []>} : vector<8x32xbf16>, vector<32x128xbf16>, vector<8x128xf32> -> vector<8x128xf32>
    %c0_12 = arith.constant 0 : index
    %c0_13 = arith.constant 0 : index
    %26 = vector.load %arg5[%c0_12, %c0_13] : memref<1x128xf32, #tpu.memory_space<vmem>>, vector<1x128xf32>
    %27 = vector.broadcast %26 : vector<1x128xf32> to vector<8x128xf32>
    %28 = arith.addf %25, %27 : vector<8x128xf32>
    %cst_14 = arith.constant 0.000000e+00 : f32
    %29 = vector.broadcast %cst_14 : f32 to vector<8x128xf32>
    %30 = arith.maximumf %28, %29 : vector<8x128xf32>
    %31 = arith.truncf %30 : vector<8x128xf32> to vector<8x128xbf16>
    %c0_15 = arith.constant 0 : index
    %c0_16 = arith.constant 0 : index
    %32 = vector.load %arg6[%c0_15, %c0_16] : memref<128x32xbf16, #tpu.memory_space<vmem>>, vector<128x32xbf16>
    %cst_17 = arith.constant dense<0.000000e+00> : vector<8x32xf32>
    %33 = tpu.matmul %31, %32, %cst_17 {dimension_numbers = #tpu.dot_dimension_numbers<[1], [0], [0], [1], [0, 0, 1, 1], [], []>} : vector<8x128xbf16>, vector<128x32xbf16>, vector<8x32xf32> -> vector<8x32xf32>
    %c0_18 = arith.constant 0 : index
    %c0_19 = arith.constant 0 : index
    %34 = vector.load %arg7[%c0_18, %c0_19] : memref<1x32xf32, #tpu.memory_space<vmem>>, vector<1x32xf32>
    %35 = vector.broadcast %34 : vector<1x32xf32> to vector<8x32xf32>
    %36 = arith.addf %33, %35 : vector<8x32xf32>
    %37 = arith.addf %0, %36 : vector<8x32xf32>
    %c0_20 = arith.constant 0 : index
    %c0_21 = arith.constant 0 : index
    %38 = vector.load %arg8[%c0_20, %c0_21] : memref<8x32xf32, #tpu.memory_space<vmem>>, vector<8x32xf32>
    tpu.vector_store %arg8[%c0_20, %c0_21], %37 {strides = array<i32>} : memref<8x32xf32, #tpu.memory_space<vmem>>, vector<8x32xf32>,
    return
  }
  func.func @transform_0(%arg0: i32) -> (i32, i32) {
    %c0_i32 = arith.constant 0 : i32
    %c0_i32_0 = arith.constant 0 : i32
    return %arg0, %c0_i32 : i32, i32
  }
  func.func @transform_1(%arg0: i32) -> (i32, i32) {
    %c0_i32 = arith.constant 0 : i32
    %c0_i32_0 = arith.constant 0 : i32
    %c0_i32_1 = arith.constant 0 : i32
    return %c0_i32, %c0_i32_0 : i32, i32
  }
  func.func @transform_2(%arg0: i32) -> (i32, i32) {
    %c0_i32 = arith.constant 0 : i32
    %c0_i32_0 = arith.constant 0 : i32
    %c0_i32_1 = arith.constant 0 : i32
    return %c0_i32, %c0_i32_0 : i32, i32
  }
  func.func @transform_3(%arg0: i32) -> (i32, i32) {
    %c0_i32 = arith.constant 0 : i32
    %c0_i32_0 = arith.constant 0 : i32
    %c0_i32_1 = arith.constant 0 : i32
    return %c0_i32, %c0_i32_0 : i32, i32
  }
  func.func @transform_4(%arg0: i32) -> (i32, i32) {
    %c0_i32 = arith.constant 0 : i32
    %c0_i32_0 = arith.constant 0 : i32
    %c0_i32_1 = arith.constant 0 : i32
    return %c0_i32, %c0_i32_0 : i32, i32
  }
  func.func @transform_5(%arg0: i32) -> (i32, i32) {
    %c0_i32 = arith.constant 0 : i32
    %c0_i32_0 = arith.constant 0 : i32
    %c0_i32_1 = arith.constant 0 : i32
    return %c0_i32, %c0_i32_0 : i32, i32
  }
  func.func @transform_6(%arg0: i32) -> (i32, i32) {
    %c0_i32 = arith.constant 0 : i32
    %c0_i32_0 = arith.constant 0 : i32
    %c0_i32_1 = arith.constant 0 : i32
    return %c0_i32, %c0_i32_0 : i32, i32
  }
  func.func @transform_7(%arg0: i32) -> (i32, i32) {
    %c0_i32 = arith.constant 0 : i32
    %c0_i32_0 = arith.constant 0 : i32
    return %arg0, %c0_i32 : i32, i32
  }
}

module attributes {stable_mosaic.version = 11 : i64} {
  func.func @final_kernel(%arg0: i32, %arg1: memref<8x32xf32, #tpu.memory_space<vmem>>, %arg2: memref<1x32xf32, #tpu.memory_space<vmem>>, %arg3: memref<1x32xf32, #tpu.memory_space<vmem>>, %arg4: memref<32x16xbf16, #tpu.memory_space<vmem>>, %arg5: memref<1x16xf32, #tpu.memory_space<vmem>>, %arg6: memref<8x16xf32, #tpu.memory_space<vmem>>) attributes {dimension_semantics = [#tpu.dimension_semantics<parallel>], iteration_bounds = array<i64: 2>, scalar_prefetch = 0 : i64, scratch_operands = 0 : i64, tpu.core_type = #tpu.core_type<tc>, window_params = [{transform_indices = @transform_0, window_bounds = array<i64: 8, 32>}, {pipeline_mode = #tpu.pipeline_mode<synchronous>, transform_indices = @transform_1, window_bounds = array<i64: 1, 32>}, {pipeline_mode = #tpu.pipeline_mode<synchronous>, transform_indices = @transform_2, window_bounds = array<i64: 1, 32>}, {pipeline_mode = #tpu.pipeline_mode<synchronous>, transform_indices = @transform_3, window_bounds = array<i64: 32, 16>}, {pipeline_mode = #tpu.pipeline_mode<synchronous>, transform_indices = @transform_4, window_bounds = array<i64: 1, 16>}, {transform_indices = @transform_5, window_bounds = array<i64: 8, 16>}]} {
    %c0 = arith.constant 0 : index
    %c0_0 = arith.constant 0 : index
    %0 = vector.load %arg1[%c0, %c0_0] : memref<8x32xf32, #tpu.memory_space<vmem>>, vector<8x32xf32>
    %c0_1 = arith.constant 0 : index
    %c0_2 = arith.constant 0 : index
    %1 = vector.load %arg2[%c0_1, %c0_2] : memref<1x32xf32, #tpu.memory_space<vmem>>, vector<1x32xf32>
    %c0_3 = arith.constant 0 : index
    %c0_4 = arith.constant 0 : index
    %2 = vector.load %arg3[%c0_3, %c0_4] : memref<1x32xf32, #tpu.memory_space<vmem>>, vector<1x32xf32>
    %cst = arith.constant dense<0.000000e+00> : vector<8xf32>
    %3 = vector.multi_reduction <add>, %0, %cst [1] : vector<8x32xf32> to vector<8xf32>
    %4 = vector.shape_cast %3 : vector<8xf32> to vector<8x1xf32>
    %cst_5 = arith.constant 3.200000e+01 : f32
    %5 = vector.broadcast %cst_5 : f32 to vector<8x1xf32>
    %6 = arith.divf %4, %5 : vector<8x1xf32>
    %7 = vector.broadcast %6 : vector<8x1xf32> to vector<8x32xf32>
    %8 = arith.subf %0, %7 : vector<8x32xf32>
    %9 = arith.mulf %8, %8 : vector<8x32xf32>
    %cst_6 = arith.constant dense<0.000000e+00> : vector<8xf32>
    %10 = vector.multi_reduction <add>, %9, %cst_6 [1] : vector<8x32xf32> to vector<8xf32>
    %11 = vector.shape_cast %10 : vector<8xf32> to vector<8x1xf32>
    %cst_7 = arith.constant 3.200000e+01 : f32
    %12 = vector.broadcast %cst_7 : f32 to vector<8x1xf32>
    %13 = arith.divf %11, %12 : vector<8x1xf32>
    %cst_8 = arith.constant 9.99999974E-6 : f32
    %14 = vector.broadcast %cst_8 : f32 to vector<8x1xf32>
    %15 = arith.addf %13, %14 : vector<8x1xf32>
    %16 = math.rsqrt %15 : vector<8x1xf32>
    %17 = vector.broadcast %16 : vector<8x1xf32> to vector<8x32xf32>
    %18 = arith.mulf %8, %17 : vector<8x32xf32>
    %19 = vector.broadcast %1 : vector<1x32xf32> to vector<8x32xf32>
    %20 = arith.mulf %18, %19 : vector<8x32xf32>
    %21 = vector.broadcast %2 : vector<1x32xf32> to vector<8x32xf32>
    %22 = arith.addf %20, %21 : vector<8x32xf32>
    %23 = arith.truncf %22 : vector<8x32xf32> to vector<8x32xbf16>
    %c0_9 = arith.constant 0 : index
    %c0_10 = arith.constant 0 : index
    %24 = vector.load %arg4[%c0_9, %c0_10] : memref<32x16xbf16, #tpu.memory_space<vmem>>, vector<32x16xbf16>
    %cst_11 = arith.constant dense<0.000000e+00> : vector<8x16xf32>
    %25 = tpu.matmul %23, %24, %cst_11 {dimension_numbers = #tpu.dot_dimension_numbers<[1], [0], [0], [1], [0, 0, 1, 1], [], []>} : vector<8x32xbf16>, vector<32x16xbf16>, vector<8x16xf32> -> vector<8x16xf32>
    %c0_12 = arith.constant 0 : index
    %c0_13 = arith.constant 0 : index
    %26 = vector.load %arg5[%c0_12, %c0_13] : memref<1x16xf32, #tpu.memory_space<vmem>>, vector<1x16xf32>
    %27 = vector.broadcast %26 : vector<1x16xf32> to vector<8x16xf32>
    %28 = arith.addf %25, %27 : vector<8x16xf32>
    %c0_14 = arith.constant 0 : index
    %c0_15 = arith.constant 0 : index
    %29 = vector.load %arg6[%c0_14, %c0_15] : memref<8x16xf32, #tpu.memory_space<vmem>>, vector<8x16xf32>
    tpu.vector_store %arg6[%c0_14, %c0_15], %28 {strides = array<i32>} : memref<8x16xf32, #tpu.memory_space<vmem>>, vector<8x16xf32>,
    return
  }
  func.func @transform_0(%arg0: i32) -> (i32, i32) {
    %c0_i32 = arith.constant 0 : i32
    %c0_i32_0 = arith.constant 0 : i32
    return %arg0, %c0_i32 : i32, i32
  }
  func.func @transform_1(%arg0: i32) -> (i32, i32) {
    %c0_i32 = arith.constant 0 : i32
    %c0_i32_0 = arith.constant 0 : i32
    %c0_i32_1 = arith.constant 0 : i32
    return %c0_i32, %c0_i32_0 : i32, i32
  }
  func.func @transform_2(%arg0: i32) -> (i32, i32) {
    %c0_i32 = arith.constant 0 : i32
    %c0_i32_0 = arith.constant 0 : i32
    %c0_i32_1 = arith.constant 0 : i32
    return %c0_i32, %c0_i32_0 : i32, i32
  }
  func.func @transform_3(%arg0: i32) -> (i32, i32) {
    %c0_i32 = arith.constant 0 : i32
    %c0_i32_0 = arith.constant 0 : i32
    %c0_i32_1 = arith.constant 0 : i32
    return %c0_i32, %c0_i32_0 : i32, i32
  }
  func.func @transform_4(%arg0: i32) -> (i32, i32) {
    %c0_i32 = arith.constant 0 : i32
    %c0_i32_0 = arith.constant 0 : i32
    %c0_i32_1 = arith.constant 0 : i32
    return %c0_i32, %c0_i32_0 : i32, i32
  }
  func.func @transform_5(%arg0: i32) -> (i32, i32) {
    %c0_i32 = arith.constant 0 : i32
    %c0_i32_0 = arith.constant 0 : i32
    return %arg0, %c0_i32 : i32, i32
  }
}

</mosaic_0001>

<llo_original>
// kernel: textembedding_forward.11
$region0: #{textembedding_forward.11}
  #allocation0 [shape = 'u32[]', space=smem, size = 0x4, offset = 0x4, fixed_abs, tag = 'smem constant byte address 0x4 - core index']
  #allocation1 [shape = 'u32[144,128]{1,0:T(1,128)}', space=vmem, size = 0x12000, scoped, tag = 'internal scratch']
  %s0 = inlined_call_operand.vmem [shape: f32[16,32], index: 0, kind: input, shape index: {}]
  %s1 = inlined_call_operand.vmem [shape: f32[1,32], index: 1, kind: input, shape index: {}]
  %s2 = inlined_call_operand.vmem [shape: f32[1,32], index: 2, kind: input, shape index: {}]
  %s3 = inlined_call_operand.vmem [shape: bf16[32,16], index: 3, kind: input, shape index: {}]
  %s4 = inlined_call_operand.vmem [shape: f32[1,16], index: 4, kind: input, shape index: {}]
  %s5 = inlined_call_operand.hbm [shape: f32[16,16], index: 5, kind: output, shape index: {}]
  %s6 = sld [smem:[#allocation0]]
  $region53: #{textembedding_forward.11} parent=0
    _
  %s8 = ssub.s32 1, %s6
  %s9 = scalar_select 0, %s8, %s6
  $region1: #{textembedding_forward.11} parent=0
    #allocation2 [shape = 'u8[8192]{0}', space=vmem, size = 0x2000, scoped, tag = 'output window, operand 0']
    #allocation3 [shape = 's32[2]{0}', space=sflag, size = 0x8, scoped, tag = 'scoped memory for textembedding_forward.11']
    %10 = vsyncpa [#allocation3], 0
    %s11 = scalar_lea.sflag [#allocation3], 1
    %12 = vsyncpa %s11, 0
    loop: start=0, step=1, limit=4
    $region2: #{textembedding_forward.11} parent=1 // loop_pre_header
      _
    $region3: #{textembedding_forward.11} parent=1 // loop_header
      %s14 = sphi 0, %s18
      %p15 = scmp.ge.s32.totalorder %s14, 4
      %s24 = sphi 0, %s26
      %s27 = sphi 0, %s24
      %s28 = sphi 0, %s27
      %s44 = sphi 0, %s28
      %s48 = sphi 0, %s48
      %s50 = sphi 0, %s48
      %s51 = sphi 0, %s50
      %s65 = sphi 0, %s51
      %s69 = sphi 0, %s69
      %s71 = sphi 0, %s69
      %s72 = sphi 0, %s71
      %s86 = sphi 0, %s72
      %s90 = sphi 0, %s90
      %s92 = sphi 0, %s90
      %s93 = sphi 0, %s92
      %s107 = sphi 0, %s93
      %s111 = sphi 0, %s111
      %s113 = sphi 0, %s111
      %s114 = sphi 0, %s113
      %s128 = sphi 0, %s114
      %s134 = sphi 0, %s136
      %s137 = sphi 0, %s134
      %s138 = sphi 0, %s137
      %s154 = sphi 0, %s138
    $region4: #{textembedding_forward.11} parent=1 // loop_header_branch
      %17 = sbr.rel (%p15) target = $region8
    $region5: #{textembedding_forward.11} parent=1 // loop_body
      %s19 = ssub.s32 %s14, 1
      %s20 = ssub.s32 %s14, 2
      %s21 = sadd.s32 %s14, 1
      %s22 = ssub.s32 %s14, %s21
      %p23 = scmp.eq.s32.totalorder %s22, 0
      %s25 = sadd.s32 %s24, 1
      %s26 = scalar_select %p23, %s24, %s25
      %p29 = pneg %p23
      %p30 = scmp.eq.s32.totalorder %s14, 1
      %p31 = por %p29, %p30
      %p32 = scmp.ne.s32.totalorder %s24, %s27
      %p33 = scmp.eq.s32.totalorder %s14, 0
      %p34 = por %p32, %p33
      %p35 = scmp.ne.s32.totalorder %s24, %s27
      %p36 = scmp.eq.s32.totalorder %s19, 1
      %p37 = por %p35, %p36
      %p38 = scmp.ne.s32.totalorder %s27, %s28
      %p39 = scmp.eq.s32.totalorder %s19, 0
      %p40 = por %p38, %p39
      %p41 = scmp.ne.s32.totalorder %s27, %s28
      %p42 = scmp.eq.s32.totalorder %s20, 1
      %p43 = por %p41, %p42
      %p45 = scmp.ne.s32.totalorder %s28, %s44
      %p46 = scmp.eq.s32.totalorder %s20, 0
      %p47 = por %p45, %p46
      %s49 = sadd.s32 %s48, 1
      %p52 = scmp.eq.s32.totalorder %s14, 1
      %p53 = scmp.ne.s32.totalorder %s48, %s50
      %p54 = scmp.eq.s32.totalorder %s14, 0
      %p55 = por %p53, %p54
      %p56 = scmp.ne.s32.totalorder %s48, %s50
      %p57 = scmp.eq.s32.totalorder %s19, 1
      %p58 = por %p56, %p57
      %p59 = scmp.ne.s32.totalorder %s50, %s51
      %p60 = scmp.eq.s32.totalorder %s19, 0
      %p61 = por %p59, %p60
      %p62 = scmp.ne.s32.totalorder %s50, %s51
      %p63 = scmp.eq.s32.totalorder %s20, 1
      %p64 = por %p62, %p63
      %p66 = scmp.ne.s32.totalorder %s51, %s65
      %p67 = scmp.eq.s32.totalorder %s20, 0
      %p68 = por %p66, %p67
      %s70 = sadd.s32 %s69, 1
      %p73 = scmp.eq.s32.totalorder %s14, 1
      %p74 = scmp.ne.s32.totalorder %s69, %s71
      %p75 = scmp.eq.s32.totalorder %s14, 0
      %p76 = por %p74, %p75
      %p77 = scmp.ne.s32.totalorder %s69, %s71
      %p78 = scmp.eq.s32.totalorder %s19, 1
      %p79 = por %p77, %p78
      %p80 = scmp.ne.s32.totalorder %s71, %s72
      %p81 = scmp.eq.s32.totalorder %s19, 0
      %p82 = por %p80, %p81
      %p83 = scmp.ne.s32.totalorder %s71, %s72
      %p84 = scmp.eq.s32.totalorder %s20, 1
      %p85 = por %p83, %p84
      %p87 = scmp.ne.s32.totalorder %s72, %s86
      %p88 = scmp.eq.s32.totalorder %s20, 0
      %p89 = por %p87, %p88
      %s91 = sadd.s32 %s90, 1
      %p94 = scmp.eq.s32.totalorder %s14, 1
      %p95 = scmp.ne.s32.totalorder %s90, %s92
      %p96 = scmp.eq.s32.totalorder %s14, 0
      %p97 = por %p95, %p96
      %p98 = scmp.ne.s32.totalorder %s90, %s92
      %p99 = scmp.eq.s32.totalorder %s19, 1
      %p100 = por %p98, %p99
      %p101 = scmp.ne.s32.totalorder %s92, %s93
      %p102 = scmp.eq.s32.totalorder %s19, 0
      %p103 = por %p101, %p102
      %p104 = scmp.ne.s32.totalorder %s92, %s93
      %p105 = scmp.eq.s32.totalorder %s20, 1
      %p106 = por %p104, %p105
      %p108 = scmp.ne.s32.totalorder %s93, %s107
      %p109 = scmp.eq.s32.totalorder %s20, 0
      %p110 = por %p108, %p109
      %s112 = sadd.s32 %s111, 1
      %p115 = scmp.eq.s32.totalorder %s14, 1
      %p116 = scmp.ne.s32.totalorder %s111, %s113
      %p117 = scmp.eq.s32.totalorder %s14, 0
      %p118 = por %p116, %p117
      %p119 = scmp.ne.s32.totalorder %s111, %s113
      %p120 = scmp.eq.s32.totalorder %s19, 1
      %p121 = por %p119, %p120
      %p122 = scmp.ne.s32.totalorder %s113, %s114
      %p123 = scmp.eq.s32.totalorder %s19, 0
      %p124 = por %p122, %p123
      %p125 = scmp.ne.s32.totalorder %s113, %s114
      %p126 = scmp.eq.s32.totalorder %s20, 1
      %p127 = por %p125, %p126
      %p129 = scmp.ne.s32.totalorder %s114, %s128
      %p130 = scmp.eq.s32.totalorder %s20, 0
      %p131 = por %p129, %p130
      %s132 = ssub.s32 %s14, %s21
      %p133 = scmp.eq.s32.totalorder %s132, 0
      %s135 = sadd.s32 %s134, 1
      %s136 = scalar_select %p133, %s134, %s135
      %p139 = pneg %p133
      %p140 = scmp.eq.s32.totalorder %s14, 1
      %p141 = por %p139, %p140
      %p142 = scmp.ne.s32.totalorder %s134, %s137
      %p143 = scmp.eq.s32.totalorder %s14, 0
      %p144 = por %p142, %p143
      %p145 = scmp.ne.s32.totalorder %s134, %s137
      %p146 = scmp.eq.s32.totalorder %s19, 1
      %p147 = por %p145, %p146
      %p148 = scmp.ne.s32.totalorder %s137, %s138
      %p149 = scmp.eq.s32.totalorder %s19, 0
      %p150 = por %p148, %p149
      %p151 = scmp.ne.s32.totalorder %s137, %s138
      %p152 = scmp.eq.s32.totalorder %s20, 1
      %p153 = por %p151, %p152
      %p155 = scmp.ne.s32.totalorder %s138, %s154
      %p156 = scmp.eq.s32.totalorder %s20, 0
      %p157 = por %p155, %p156
      %p158 = scmp.le.s32.totalorder 1, %s14
      %p159 = scmp.lt.s32.totalorder %s14, 3
      %p160 = pnand %p158, %p159
      %p161 = pneg %p160
      // Predicated region
      $region9: #{textembedding_forward.11} parent=5 // pred_check
        _
      $region10: #{textembedding_forward.11} parent=5 // pred_check_branch
        %163 = sbr.rel (%p160) target = $region12
      $region11: #{textembedding_forward.11} parent=5 // pred_region
        %s164 = ssub.s32 %s14, 1
        // Predicated region
        $region13: #{textembedding_forward.11} parent=11 // pred_check
          %p165 = pneg %p61
        $region14: #{textembedding_forward.11} parent=11 // pred_check_branch
          %167 = sbr.rel (%p165) target = $region16
        $region15: #{textembedding_forward.11} parent=11 // pred_region
          _
        $region16: #{textembedding_forward.11} parent=11 // pred_fallthru
          _
        // Predicated region
        $region17: #{textembedding_forward.11} parent=11 // pred_check
          %p168 = pneg %p82
        $region18: #{textembedding_forward.11} parent=11 // pred_check_branch
          %170 = sbr.rel (%p168) target = $region20
        $region19: #{textembedding_forward.11} parent=11 // pred_region
          _
        $region20: #{textembedding_forward.11} parent=11 // pred_fallthru
          _
        // Predicated region
        $region21: #{textembedding_forward.11} parent=11 // pred_check
          %p171 = pneg %p103
        $region22: #{textembedding_forward.11} parent=11 // pred_check_branch
          %173 = sbr.rel (%p171) target = $region24
        $region23: #{textembedding_forward.11} parent=11 // pred_region
          _
        $region24: #{textembedding_forward.11} parent=11 // pred_fallthru
          _
        // Predicated region
        $region25: #{textembedding_forward.11} parent=11 // pred_check
          %p174 = pneg %p124
        $region26: #{textembedding_forward.11} parent=11 // pred_check_branch
          %176 = sbr.rel (%p174) target = $region28
        $region27: #{textembedding_forward.11} parent=11 // pred_region
          _
        $region28: #{textembedding_forward.11} parent=11 // pred_fallthru
          _
      $region12: #{textembedding_forward.11} parent=5 // pred_fallthru
        _
      %p177 = scmp.lt.s32.totalorder %s14, 2
      // Predicated region
      $region29: #{textembedding_forward.11} parent=5 // pred_check
        %p178 = pneg %p177
      $region30: #{textembedding_forward.11} parent=5 // pred_check_branch
        %180 = sbr.rel (%p178) target = $region32
      $region31: #{textembedding_forward.11} parent=5 // pred_region
        // Predicated region
        $region33: #{textembedding_forward.11} parent=31 // pred_check
          %p181 = pneg %p34
        $region34: #{textembedding_forward.11} parent=31 // pred_check_branch
          %183 = sbr.rel (%p181) target = $region36
        $region35: #{textembedding_forward.11} parent=31 // pred_region
          %p184 = scmp.lt.s32.totalorder %s14, 1
          %s185 = scalar_select %p184, %s14, 1
          %s186 = smul.addr %s185, 8
          %s187 = scalar_lea.vmem %s0, %s186
        $region36: #{textembedding_forward.11} parent=31 // pred_fallthru
          _
      $region32: #{textembedding_forward.11} parent=5 // pred_fallthru
        _
      %p188 = scmp.le.s32.totalorder 1, %s14
      %p189 = scmp.lt.s32.totalorder %s14, 3
      %p190 = pnand %p188, %p189
      %p191 = pneg %p190
      // Predicated region
      $region37: #{textembedding_forward.11} parent=5 // pred_check
        _
      $region38: #{textembedding_forward.11} parent=5 // pred_check_branch
        %193 = sbr.rel (%p190) target = $region40
      $region39: #{textembedding_forward.11} parent=5 // pred_region
        %s194 = ssub.s32 %s14, 1
        %p195 = scmp.lt.s32.totalorder %s19, 1
        %s196 = scalar_select %p195, %s19, 1
        %s197 = smul.addr %s196, 8
        %s198 = scalar_lea.vmem %s0, %s197
        %p199 = pneg %p40
        %p200 = pneg %p37
        %p201 = pneg %p61
        %p202 = pneg %p58
        %p203 = pneg %p82
        %p204 = pneg %p79
        %p205 = pneg %p103
        %p206 = pneg %p100
        %p207 = pneg %p124
        %p208 = pneg %p121
        %p209 = pneg %p150
        %p210 = pneg %p147
        %s211 = sand.u32 %s137, 1
        %s212 = scalar_lea.sflag [#allocation3], %s211
        %s213 = sand.u32 %s137, 1
        %s214 = smul.addr %s213, 8
        %s215 = scalar_lea.vmem [#allocation2], %s214
        %p216 = scmp.lt.s32.totalorder %s19, 1
        %s217 = scalar_select %p216, %s19, 1
        %s218 = smul.addr %s217, 8
        %s219 = scalar_lea.vmem %s0, %s218
        %v221 = vld [vmem:[%s219] sm:$0xff]
        %v222 = vld [vmem:[%s1] sm:$0x1]
        %v223 = vld [vmem:[%s2] sm:$0x1]
        %vm224 = vcmask 261120
        %v225 = vsel %vm224, %v221, 0.0
        %226 = vadd.xlane.f32.xlu0 %v225
        %v227 = vpop.xlane.xlu0 %226
        %v228 = vrcp.pop 32.0
        %v229 = vmul.f32 %v227, %v228
        %v230 = vsub.f32 %v221, %v229
        %v231 = vmul.f32 %v230, %v230
        %v232 = vsel %vm224, %v231, 0.0
        %233 = vadd.xlane.f32.xlu0 %v232
        %v234 = vpop.xlane.xlu0 %233
        %v235 = vmul.f32 %v234, %v228
        %v236 = vadd.f32 %v235, 1e-05
        %v237 = vrsqrt.pop %v236
        %v238 = vmul.f32 %v230, %v237
        %v240 = vlaneseq
        %v241 = vshrl.u32 %v240, 7
        %v242 = vsub.s32 0, %v241
        %v243 = vrot.slane %v222, %v242
        %v245 = vmul.f32 %v238, %v243
        %v247 = vlaneseq
        %v248 = vshrl.u32 %v247, 7
        %v249 = vsub.s32 0, %v248
        %v250 = vrot.slane %v223, %v249
        %v252 = vadd.f32 %v245, %v250
        %v253 = vpack.c.bf16 %v252, %v252
        %v254 = vld [vmem:[%s3] sm:$0xf]
        %v255 = vld [vmem:[%s3 + $0x4] sm:$0xf]
        %v256 = vld [vmem:[%s3 + $0x8] sm:$0xf]
        %v257 = vld [vmem:[%s3 + $0xc] sm:$0xf]
        %v258 = vld [vmem:[%s4] sm:$0x1]
        %v260 = vlaneseq
        %v261 = vshrl.u32 %v260, 7
        %v262 = vsub.s32 0, %v261
        %v263 = vrot.slane %v258, %v262
        %v269 = vunpack.c.l.b16 %v254
        %v270 = vunpack.c.l.b16 %v255
        %v271 = vunpack.c.l.b16 %v256
        %v272 = vunpack.c.l.b16 %v257
        %v273 = vpack.c.b16 %v270, %v269
        %v274 = vpack.c.b16 %v272, %v271
        %v278 = vsel %vm224, %v253, 0
        %280 = vmatprep.subr.bf16.mxu0 0
        %281 = vmatpush1.bf16.msra.mxu0 %v273
        %282 = vmatprep.subr.bf16.mxu0 0
        %283 = vmatpush1.bf16.msra.mxu0 %v274
        %284 = vmatprep.subr.bf16.mxu0 0
        %285 = vmatpush1.bf16.msra.mxu0 0
        %286 = vmatprep.subr.bf16.mxu0 0
        %287 = vmatpush1.bf16.msra.mxu0 0
        %288 = vmatprep.subr.bf16.mxu0 0
        %289 = vmatpush1.bf16.msra.mxu0 0
        %290 = vmatprep.subr.bf16.mxu0 0
        %291 = vmatpush1.bf16.msra.mxu0 0
        %292 = vmatprep.subr.bf16.mxu0 0
        %293 = vmatpush1.bf16.msra.mxu0 0
        %294 = vmatprep.subr.bf16.mxu0 0
        %295 = vmatpush1.bf16.msra.mxu0 0
        %296 = vmatprep.subr.bf16.mxu0 0
        %297 = vmatpush1.bf16.msra.mxu0 0
        %298 = vmatprep.subr.bf16.mxu0 0
        %299 = vmatpush1.bf16.msra.mxu0 0
        %300 = vmatprep.subr.bf16.mxu0 0
        %301 = vmatpush1.bf16.msra.mxu0 0
        %302 = vmatprep.subr.bf16.mxu0 0
        %303 = vmatpush1.bf16.msra.mxu0 0
        %304 = vmatprep.subr.bf16.mxu0 0
        %305 = vmatpush1.bf16.msra.mxu0 0
        %306 = vmatprep.subr.bf16.mxu0 0
        %307 = vmatpush1.bf16.msra.mxu0 0
        %308 = vmatprep.subr.bf16.mxu0 0
        %309 = vmatpush1.bf16.msra.mxu0 0
        %310 = vmatprep.subr.bf16.mxu0 0
        %311 = vmatpush1.bf16.msra.mxu0 0
        %312 = vmatprep.mubr.bf16.mxu0 0
        %313 = vmatmul.mubr.bf16.gmra.mrb[0].mxu0 %v278
        %v314 = vpop.f32.mrb[0].mxu0
        %v315 = vadd.f32 %v263, %v314
        %v316 = vpop.f32.mrb[0].mxu0
        %v317 = vpop.f32.mrb[0].mxu0
        %v318 = vpop.f32.mrb[0].mxu0
        %319 = vdwg.mxu0
        %vm320 = vcmask 130048
        %321 = vst.msk [vmem:[%s215] sm:$0xff] %vm320, %v315
        %s322 = sand.u32 %s137, 1
        %s323 = scalar_lea.sflag [#allocation3], %s322
        %s324 = sand.u32 %s137, 1
        %s325 = smul.addr %s324, 8
        %s326 = scalar_lea.vmem [#allocation2], %s325
        // Predicated region
        $region41: #{textembedding_forward.11} parent=39 // pred_check
          %p327 = pneg %p147
        $region42: #{textembedding_forward.11} parent=39 // pred_check_branch
          %329 = sbr.rel (%p327) target = $region44
        $region43: #{textembedding_forward.11} parent=39 // pred_region
          %s331 = ssub.s32 128, 128
          %332 = vsyncadd %s323, %s331
          %s333 = smul.addr %s19, 128
          %s334 = scalar_lea.hbm %s5, %s333
          %s336 = sshll.u32 %s326, 4
          %s337 = int_to_ptr.vmem [resolvable:$true] %s336
          %339 = dma.vmem_to_hbm [thread:$0]  %s337, 128, %s334, %s323
        $region44: #{textembedding_forward.11} parent=39 // pred_fallthru
          _
      $region40: #{textembedding_forward.11} parent=5 // pred_fallthru
        _
      %p340 = scmp.le.s32.totalorder 2, %s14
      // Predicated region
      $region45: #{textembedding_forward.11} parent=5 // pred_check
        %p341 = pneg %p340
      $region46: #{textembedding_forward.11} parent=5 // pred_check_branch
        %343 = sbr.rel (%p341) target = $region48
      $region47: #{textembedding_forward.11} parent=5 // pred_region
        %s344 = ssub.s32 %s14, 2
        // Predicated region
        $region49: #{textembedding_forward.11} parent=47 // pred_check
          %p345 = pneg %p153
        $region50: #{textembedding_forward.11} parent=47 // pred_check_branch
          %347 = sbr.rel (%p345) target = $region52
        $region51: #{textembedding_forward.11} parent=47 // pred_region
          %s348 = sand.u32 %s138, 1
          %s349 = scalar_lea.sflag [#allocation3], %s348
          %s350 = sand.u32 %s138, 1
          %s351 = smul.addr %s350, 8
          %s352 = scalar_lea.vmem [#allocation2], %s351
          %353 = dma.done %s349, 128
        $region52: #{textembedding_forward.11} parent=47 // pred_fallthru
          _
      $region48: #{textembedding_forward.11} parent=5 // pred_fallthru
        _
    $region6: #{textembedding_forward.11} parent=1 // loop_footer
      %s18 = sadd.s32 1, %s14
    $region7: #{textembedding_forward.11} parent=1 // loop_footer_branch
      %13 = sbr.rel target = $region3
    $region8: #{textembedding_forward.11} parent=1 // loop_exit
      _
    %354 = vsyncpa [#allocation3], 1
    %s355 = scalar_lea.sflag [#allocation3], 1
    %356 = vsyncpa %s355, 1

// kernel: textembedding_forward.8
$region0: #{textembedding_forward.8}
  #allocation0 [shape = 'u32[]', space=smem, size = 0x4, offset = 0x4, fixed_abs, tag = 'smem constant byte address 0x4 - core index']
  #allocation1 [shape = 'u32[144,128]{1,0:T(1,128)}', space=vmem, size = 0x12000, scoped, tag = 'internal scratch']
  %s0 = inlined_call_operand.vmem [shape: f32[16,32], index: 0, kind: input, shape index: {}]
  %s1 = inlined_call_operand.vmem [shape: f32[1,32], index: 1, kind: input, shape index: {}]
  %s2 = inlined_call_operand.vmem [shape: f32[1,32], index: 2, kind: input, shape index: {}]
  %s3 = inlined_call_operand.vmem [shape: bf16[32,128], index: 3, kind: input, shape index: {}]
  %s4 = inlined_call_operand.vmem [shape: f32[1,128], index: 4, kind: input, shape index: {}]
  %s5 = inlined_call_operand.vmem [shape: bf16[128,32], index: 5, kind: input, shape index: {}]
  %s6 = inlined_call_operand.vmem [shape: f32[1,32], index: 6, kind: input, shape index: {}]
  %s7 = inlined_call_operand.vmem [shape: f32[16,32], index: 7, kind: output, shape index: {}]
  %s8 = sld [smem:[#allocation0]]
  $region61: #{textembedding_forward.8} parent=0
    _
  %s10 = ssub.s32 1, %s8
  %s11 = scalar_select 0, %s10, %s8
  loop: start=0, step=1, limit=4
  $region2: #{textembedding_forward.8} parent=0 // loop_pre_header
    _
  $region3: #{textembedding_forward.8} parent=0 // loop_header
    %s13 = sphi 0, %s17
    %p14 = scmp.ge.s32.totalorder %s13, 4
    %s23 = sphi 0, %s25
    %s26 = sphi 0, %s23
    %s27 = sphi 0, %s26
    %s43 = sphi 0, %s27
    %s47 = sphi 0, %s47
    %s49 = sphi 0, %s47
    %s50 = sphi 0, %s49
    %s64 = sphi 0, %s50
    %s68 = sphi 0, %s68
    %s70 = sphi 0, %s68
    %s71 = sphi 0, %s70
    %s85 = sphi 0, %s71
    %s89 = sphi 0, %s89
    %s91 = sphi 0, %s89
    %s92 = sphi 0, %s91
    %s106 = sphi 0, %s92
    %s110 = sphi 0, %s110
    %s112 = sphi 0, %s110
    %s113 = sphi 0, %s112
    %s127 = sphi 0, %s113
    %s131 = sphi 0, %s131
    %s133 = sphi 0, %s131
    %s134 = sphi 0, %s133
    %s148 = sphi 0, %s134
    %s152 = sphi 0, %s152
    %s154 = sphi 0, %s152
    %s155 = sphi 0, %s154
    %s169 = sphi 0, %s155
    %s175 = sphi 0, %s177
    %s178 = sphi 0, %s175
    %s179 = sphi 0, %s178
    %s195 = sphi 0, %s179
  $region4: #{textembedding_forward.8} parent=0 // loop_header_branch
    %16 = sbr.rel (%p14) target = $region8
  $region5: #{textembedding_forward.8} parent=0 // loop_body
    %s18 = ssub.s32 %s13, 1
    %s19 = ssub.s32 %s13, 2
    %s20 = sadd.s32 %s13, 1
    %s21 = ssub.s32 %s13, %s20
    %p22 = scmp.eq.s32.totalorder %s21, 0
    %s24 = sadd.s32 %s23, 1
    %s25 = scalar_select %p22, %s23, %s24
    %p28 = pneg %p22
    %p29 = scmp.eq.s32.totalorder %s13, 1
    %p30 = por %p28, %p29
    %p31 = scmp.ne.s32.totalorder %s23, %s26
    %p32 = scmp.eq.s32.totalorder %s13, 0
    %p33 = por %p31, %p32
    %p34 = scmp.ne.s32.totalorder %s23, %s26
    %p35 = scmp.eq.s32.totalorder %s18, 1
    %p36 = por %p34, %p35
    %p37 = scmp.ne.s32.totalorder %s26, %s27
    %p38 = scmp.eq.s32.totalorder %s18, 0
    %p39 = por %p37, %p38
    %p40 = scmp.ne.s32.totalorder %s26, %s27
    %p41 = scmp.eq.s32.totalorder %s19, 1
    %p42 = por %p40, %p41
    %p44 = scmp.ne.s32.totalorder %s27, %s43
    %p45 = scmp.eq.s32.totalorder %s19, 0
    %p46 = por %p44, %p45
    %s48 = sadd.s32 %s47, 1
    %p51 = scmp.eq.s32.totalorder %s13, 1
    %p52 = scmp.ne.s32.totalorder %s47, %s49
    %p53 = scmp.eq.s32.totalorder %s13, 0
    %p54 = por %p52, %p53
    %p55 = scmp.ne.s32.totalorder %s47, %s49
    %p56 = scmp.eq.s32.totalorder %s18, 1
    %p57 = por %p55, %p56
    %p58 = scmp.ne.s32.totalorder %s49, %s50
    %p59 = scmp.eq.s32.totalorder %s18, 0
    %p60 = por %p58, %p59
    %p61 = scmp.ne.s32.totalorder %s49, %s50
    %p62 = scmp.eq.s32.totalorder %s19, 1
    %p63 = por %p61, %p62
    %p65 = scmp.ne.s32.totalorder %s50, %s64
    %p66 = scmp.eq.s32.totalorder %s19, 0
    %p67 = por %p65, %p66
    %s69 = sadd.s32 %s68, 1
    %p72 = scmp.eq.s32.totalorder %s13, 1
    %p73 = scmp.ne.s32.totalorder %s68, %s70
    %p74 = scmp.eq.s32.totalorder %s13, 0
    %p75 = por %p73, %p74
    %p76 = scmp.ne.s32.totalorder %s68, %s70
    %p77 = scmp.eq.s32.totalorder %s18, 1
    %p78 = por %p76, %p77
    %p79 = scmp.ne.s32.totalorder %s70, %s71
    %p80 = scmp.eq.s32.totalorder %s18, 0
    %p81 = por %p79, %p80
    %p82 = scmp.ne.s32.totalorder %s70, %s71
    %p83 = scmp.eq.s32.totalorder %s19, 1
    %p84 = por %p82, %p83
    %p86 = scmp.ne.s32.totalorder %s71, %s85
    %p87 = scmp.eq.s32.totalorder %s19, 0
    %p88 = por %p86, %p87
    %s90 = sadd.s32 %s89, 1
    %p93 = scmp.eq.s32.totalorder %s13, 1
    %p94 = scmp.ne.s32.totalorder %s89, %s91
    %p95 = scmp.eq.s32.totalorder %s13, 0
    %p96 = por %p94, %p95
    %p97 = scmp.ne.s32.totalorder %s89, %s91
    %p98 = scmp.eq.s32.totalorder %s18, 1
    %p99 = por %p97, %p98
    %p100 = scmp.ne.s32.totalorder %s91, %s92
    %p101 = scmp.eq.s32.totalorder %s18, 0
    %p102 = por %p100, %p101
    %p103 = scmp.ne.s32.totalorder %s91, %s92
    %p104 = scmp.eq.s32.totalorder %s19, 1
    %p105 = por %p103, %p104
    %p107 = scmp.ne.s32.totalorder %s92, %s106
    %p108 = scmp.eq.s32.totalorder %s19, 0
    %p109 = por %p107, %p108
    %s111 = sadd.s32 %s110, 1
    %p114 = scmp.eq.s32.totalorder %s13, 1
    %p115 = scmp.ne.s32.totalorder %s110, %s112
    %p116 = scmp.eq.s32.totalorder %s13, 0
    %p117 = por %p115, %p116
    %p118 = scmp.ne.s32.totalorder %s110, %s112
    %p119 = scmp.eq.s32.totalorder %s18, 1
    %p120 = por %p118, %p119
    %p121 = scmp.ne.s32.totalorder %s112, %s113
    %p122 = scmp.eq.s32.totalorder %s18, 0
    %p123 = por %p121, %p122
    %p124 = scmp.ne.s32.totalorder %s112, %s113
    %p125 = scmp.eq.s32.totalorder %s19, 1
    %p126 = por %p124, %p125
    %p128 = scmp.ne.s32.totalorder %s113, %s127
    %p129 = scmp.eq.s32.totalorder %s19, 0
    %p130 = por %p128, %p129
    %s132 = sadd.s32 %s131, 1
    %p135 = scmp.eq.s32.totalorder %s13, 1
    %p136 = scmp.ne.s32.totalorder %s131, %s133
    %p137 = scmp.eq.s32.totalorder %s13, 0
    %p138 = por %p136, %p137
    %p139 = scmp.ne.s32.totalorder %s131, %s133
    %p140 = scmp.eq.s32.totalorder %s18, 1
    %p141 = por %p139, %p140
    %p142 = scmp.ne.s32.totalorder %s133, %s134
    %p143 = scmp.eq.s32.totalorder %s18, 0
    %p144 = por %p142, %p143
    %p145 = scmp.ne.s32.totalorder %s133, %s134
    %p146 = scmp.eq.s32.totalorder %s19, 1
    %p147 = por %p145, %p146
    %p149 = scmp.ne.s32.totalorder %s134, %s148
    %p150 = scmp.eq.s32.totalorder %s19, 0
    %p151 = por %p149, %p150
    %s153 = sadd.s32 %s152, 1
    %p156 = scmp.eq.s32.totalorder %s13, 1
    %p157 = scmp.ne.s32.totalorder %s152, %s154
    %p158 = scmp.eq.s32.totalorder %s13, 0
    %p159 = por %p157, %p158
    %p160 = scmp.ne.s32.totalorder %s152, %s154
    %p161 = scmp.eq.s32.totalorder %s18, 1
    %p162 = por %p160, %p161
    %p163 = scmp.ne.s32.totalorder %s154, %s155
    %p164 = scmp.eq.s32.totalorder %s18, 0
    %p165 = por %p163, %p164
    %p166 = scmp.ne.s32.totalorder %s154, %s155
    %p167 = scmp.eq.s32.totalorder %s19, 1
    %p168 = por %p166, %p167
    %p170 = scmp.ne.s32.totalorder %s155, %s169
    %p171 = scmp.eq.s32.totalorder %s19, 0
    %p172 = por %p170, %p171
    %s173 = ssub.s32 %s13, %s20
    %p174 = scmp.eq.s32.totalorder %s173, 0
    %s176 = sadd.s32 %s175, 1
    %s177 = scalar_select %p174, %s175, %s176
    %p180 = pneg %p174
    %p181 = scmp.eq.s32.totalorder %s13, 1
    %p182 = por %p180, %p181
    %p183 = scmp.ne.s32.totalorder %s175, %s178
    %p184 = scmp.eq.s32.totalorder %s13, 0
    %p185 = por %p183, %p184
    %p186 = scmp.ne.s32.totalorder %s175, %s178
    %p187 = scmp.eq.s32.totalorder %s18, 1
    %p188 = por %p186, %p187
    %p189 = scmp.ne.s32.totalorder %s178, %s179
    %p190 = scmp.eq.s32.totalorder %s18, 0
    %p191 = por %p189, %p190
    %p192 = scmp.ne.s32.totalorder %s178, %s179
    %p193 = scmp.eq.s32.totalorder %s19, 1
    %p194 = por %p192, %p193
    %p196 = scmp.ne.s32.totalorder %s179, %s195
    %p197 = scmp.eq.s32.totalorder %s19, 0
    %p198 = por %p196, %p197
    %p199 = scmp.le.s32.totalorder 1, %s13
    %p200 = scmp.lt.s32.totalorder %s13, 3
    %p201 = pnand %p199, %p200
    %p202 = pneg %p201
    // Predicated region
    $region9: #{textembedding_forward.8} parent=5 // pred_check
      _
    $region10: #{textembedding_forward.8} parent=5 // pred_check_branch
      %204 = sbr.rel (%p201) target = $region12
    $region11: #{textembedding_forward.8} parent=5 // pred_region
      %s205 = ssub.s32 %s13, 1
      // Predicated region
      $region13: #{textembedding_forward.8} parent=11 // pred_check
        %p206 = pneg %p60
      $region14: #{textembedding_forward.8} parent=11 // pred_check_branch
        %208 = sbr.rel (%p206) target = $region16
      $region15: #{textembedding_forward.8} parent=11 // pred_region
        _
      $region16: #{textembedding_forward.8} parent=11 // pred_fallthru
        _
      // Predicated region
      $region17: #{textembedding_forward.8} parent=11 // pred_check
        %p209 = pneg %p81
      $region18: #{textembedding_forward.8} parent=11 // pred_check_branch
        %211 = sbr.rel (%p209) target = $region20
      $region19: #{textembedding_forward.8} parent=11 // pred_region
        _
      $region20: #{textembedding_forward.8} parent=11 // pred_fallthru
        _
      // Predicated region
      $region21: #{textembedding_forward.8} parent=11 // pred_check
        %p212 = pneg %p102
      $region22: #{textembedding_forward.8} parent=11 // pred_check_branch
        %214 = sbr.rel (%p212) target = $region24
      $region23: #{textembedding_forward.8} parent=11 // pred_region
        _
      $region24: #{textembedding_forward.8} parent=11 // pred_fallthru
        _
      // Predicated region
      $region25: #{textembedding_forward.8} parent=11 // pred_check
        %p215 = pneg %p123
      $region26: #{textembedding_forward.8} parent=11 // pred_check_branch
        %217 = sbr.rel (%p215) target = $region28
      $region27: #{textembedding_forward.8} parent=11 // pred_region
        _
      $region28: #{textembedding_forward.8} parent=11 // pred_fallthru
        _
      // Predicated region
      $region29: #{textembedding_forward.8} parent=11 // pred_check
        %p218 = pneg %p144
      $region30: #{textembedding_forward.8} parent=11 // pred_check_branch
        %220 = sbr.rel (%p218) target = $region32
      $region31: #{textembedding_forward.8} parent=11 // pred_region
        _
      $region32: #{textembedding_forward.8} parent=11 // pred_fallthru
        _
      // Predicated region
      $region33: #{textembedding_forward.8} parent=11 // pred_check
        %p221 = pneg %p165
      $region34: #{textembedding_forward.8} parent=11 // pred_check_branch
        %223 = sbr.rel (%p221) target = $region36
      $region35: #{textembedding_forward.8} parent=11 // pred_region
        _
      $region36: #{textembedding_forward.8} parent=11 // pred_fallthru
        _
    $region12: #{textembedding_forward.8} parent=5 // pred_fallthru
      _
    %p224 = scmp.lt.s32.totalorder %s13, 2
    // Predicated region
    $region37: #{textembedding_forward.8} parent=5 // pred_check
      %p225 = pneg %p224
    $region38: #{textembedding_forward.8} parent=5 // pred_check_branch
      %227 = sbr.rel (%p225) target = $region40
    $region39: #{textembedding_forward.8} parent=5 // pred_region
      // Predicated region
      $region41: #{textembedding_forward.8} parent=39 // pred_check
        %p228 = pneg %p33
      $region42: #{textembedding_forward.8} parent=39 // pred_check_branch
        %230 = sbr.rel (%p228) target = $region44
      $region43: #{textembedding_forward.8} parent=39 // pred_region
        %p231 = scmp.lt.s32.totalorder %s13, 1
        %s232 = scalar_select %p231, %s13, 1
        %s233 = smul.addr %s232, 8
        %s234 = scalar_lea.vmem %s0, %s233
      $region44: #{textembedding_forward.8} parent=39 // pred_fallthru
        _
    $region40: #{textembedding_forward.8} parent=5 // pred_fallthru
      _
    %p235 = scmp.le.s32.totalorder 1, %s13
    %p236 = scmp.lt.s32.totalorder %s13, 3
    %p237 = pnand %p235, %p236
    %p238 = pneg %p237
    // Predicated region
    $region45: #{textembedding_forward.8} parent=5 // pred_check
      _
    $region46: #{textembedding_forward.8} parent=5 // pred_check_branch
      %240 = sbr.rel (%p237) target = $region48
    $region47: #{textembedding_forward.8} parent=5 // pred_region
      %s241 = ssub.s32 %s13, 1
      %p242 = scmp.lt.s32.totalorder %s18, 1
      %s243 = scalar_select %p242, %s18, 1
      %s244 = smul.addr %s243, 8
      %s245 = scalar_lea.vmem %s0, %s244
      %p246 = pneg %p39
      %p247 = pneg %p36
      %p248 = pneg %p60
      %p249 = pneg %p57
      %p250 = pneg %p81
      %p251 = pneg %p78
      %p252 = pneg %p102
      %p253 = pneg %p99
      %p254 = pneg %p123
      %p255 = pneg %p120
      %p256 = pneg %p144
      %p257 = pneg %p141
      %p258 = pneg %p165
      %p259 = pneg %p162
      %p260 = pneg %p191
      %p261 = pneg %p188
      %p262 = scmp.lt.s32.totalorder %s18, 1
      %s263 = scalar_select %p262, %s18, 1
      %s264 = smul.addr %s263, 8
      %s265 = scalar_lea.vmem %s7, %s264
      %p266 = scmp.lt.s32.totalorder %s18, 1
      %s267 = scalar_select %p266, %s18, 1
      %s268 = smul.addr %s267, 8
      %s269 = scalar_lea.vmem %s0, %s268
      %p270 = scmp.lt.s32.totalorder %s18, 1
      %s271 = scalar_select %p270, %s18, 1
      %s272 = smul.addr %s271, 8
      %s273 = scalar_lea.vmem %s7, %s272
      %v275 = vld [vmem:[%s269] sm:$0xff]
      %v276 = vld [vmem:[%s1] sm:$0x1]
      %v277 = vld [vmem:[%s2] sm:$0x1]
      %vm278 = vcmask 261120
      %v279 = vsel %vm278, %v275, 0.0
      %280 = vadd.xlane.f32.xlu0 %v279
      %v281 = vpop.xlane.xlu0 %280
      %v282 = vrcp.pop 32.0
      %v283 = vmul.f32 %v281, %v282
      %v284 = vsub.f32 %v275, %v283
      %v285 = vmul.f32 %v284, %v284
      %v286 = vsel %vm278, %v285, 0.0
      %287 = vadd.xlane.f32.xlu0 %v286
      %v288 = vpop.xlane.xlu0 %287
      %v289 = vmul.f32 %v288, %v282
      %v290 = vadd.f32 %v289, 1e-05
      %v291 = vrsqrt.pop %v290
      %v292 = vmul.f32 %v284, %v291
      %v294 = vlaneseq
      %v295 = vshrl.u32 %v294, 7
      %v296 = vsub.s32 0, %v295
      %v297 = vrot.slane %v276, %v296
      %v299 = vmul.f32 %v292, %v297
      %v301 = vlaneseq
      %v302 = vshrl.u32 %v301, 7
      %v303 = vsub.s32 0, %v302
      %v304 = vrot.slane %v277, %v303
      %v306 = vadd.f32 %v299, %v304
      %v307 = vpack.c.bf16 %v306, %v306
      %v308 = vld [vmem:[%s3] sm:$0xf]
      %v309 = vld [vmem:[%s3 + $0x4] sm:$0xf]
      %v310 = vld [vmem:[%s3 + $0x8] sm:$0xf]
      %v311 = vld [vmem:[%s3 + $0xc] sm:$0xf]
      %v312 = vld [vmem:[%s4] sm:$0x1]
      %v314 = vlaneseq
      %v315 = vshrl.u32 %v314, 7
      %v316 = vsub.s32 0, %v315
      %v317 = vrot.slane %v312, %v316
      %v323 = vunpack.c.l.b16 %v308
      %v324 = vunpack.c.l.b16 %v309
      %v325 = vunpack.c.l.b16 %v310
      %v326 = vunpack.c.l.b16 %v311
      %v327 = vpack.c.b16 %v324, %v323
      %v328 = vpack.c.b16 %v326, %v325
      %v332 = vsel %vm278, %v307, 0
      %334 = vmatprep.subr.bf16.mxu0 0
      %335 = vmatpush1.bf16.msra.mxu0 %v327
      %336 = vmatprep.subr.bf16.mxu0 0
      %337 = vmatpush1.bf16.msra.mxu0 %v328
      %338 = vmatprep.subr.bf16.mxu0 0
      %339 = vmatpush1.bf16.msra.mxu0 0
      %340 = vmatprep.subr.bf16.mxu0 0
      %341 = vmatpush1.bf16.msra.mxu0 0
      %342 = vmatprep.subr.bf16.mxu0 0
      %343 = vmatpush1.bf16.msra.mxu0 0
      %344 = vmatprep.subr.bf16.mxu0 0
      %345 = vmatpush1.bf16.msra.mxu0 0
      %346 = vmatprep.subr.bf16.mxu0 0
      %347 = vmatpush1.bf16.msra.mxu0 0
      %348 = vmatprep.subr.bf16.mxu0 0
      %349 = vmatpush1.bf16.msra.mxu0 0
      %350 = vmatprep.subr.bf16.mxu0 0
      %351 = vmatpush1.bf16.msra.mxu0 0
      %352 = vmatprep.subr.bf16.mxu0 0
      %353 = vmatpush1.bf16.msra.mxu0 0
      %354 = vmatprep.subr.bf16.mxu0 0
      %355 = vmatpush1.bf16.msra.mxu0 0
      %356 = vmatprep.subr.bf16.mxu0 0
      %357 = vmatpush1.bf16.msra.mxu0 0
      %358 = vmatprep.subr.bf16.mxu0 0
      %359 = vmatpush1.bf16.msra.mxu0 0
      %360 = vmatprep.subr.bf16.mxu0 0
      %361 = vmatpush1.bf16.msra.mxu0 0
      %362 = vmatprep.subr.bf16.mxu0 0
      %363 = vmatpush1.bf16.msra.mxu0 0
      %364 = vmatprep.subr.bf16.mxu0 0
      %365 = vmatpush1.bf16.msra.mxu0 0
      %366 = vmatprep.mubr.bf16.mxu0 0
      %367 = vmatmul.mubr.bf16.gmra.mrb[0].mxu0 %v332
      %v368 = vpop.f32.mrb[0].mxu0
      %v369 = vadd.f32 %v317, %v368
      %v370 = vpop.f32.mrb[0].mxu0
      %v371 = vpop.f32.mrb[0].mxu0
      %v372 = vpop.f32.mrb[0].mxu0
      %373 = vdwg.mxu0
      %v374 = vmax.f32 %v369, 0.0
      %v375 = vpack.c.bf16 %v374, %v374
      %v376 = vld [vmem:[%s5] sm:$0xf]
      %v377 = vld [vmem:[%s5 + $0x4] sm:$0xf]
      %v378 = vld [vmem:[%s5 + $0x8] sm:$0xf]
      %v379 = vld [vmem:[%s5 + $0xc] sm:$0xf]
      %v380 = vld [vmem:[%s5 + $0x10] sm:$0xf]
      %v381 = vld [vmem:[%s5 + $0x14] sm:$0xf]
      %v382 = vld [vmem:[%s5 + $0x18] sm:$0xf]
      %v383 = vld [vmem:[%s5 + $0x1c] sm:$0xf]
      %v384 = vld [vmem:[%s5 + $0x20] sm:$0xf]
      %v385 = vld [vmem:[%s5 + $0x24] sm:$0xf]
      %v386 = vld [vmem:[%s5 + $0x28] sm:$0xf]
      %v387 = vld [vmem:[%s5 + $0x2c] sm:$0xf]
      %v388 = vld [vmem:[%s5 + $0x30] sm:$0xf]
      %v389 = vld [vmem:[%s5 + $0x34] sm:$0xf]
      %v390 = vld [vmem:[%s5 + $0x38] sm:$0xf]
      %v391 = vld [vmem:[%s5 + $0x3c] sm:$0xf]
      %v392 = vld [vmem:[%s6] sm:$0x1]
      %v394 = vlaneseq
      %v395 = vshrl.u32 %v394, 7
      %v396 = vsub.s32 0, %v395
      %v397 = vrot.slane %v392, %v396
      %v415 = vunpack.c.l.b16 %v376
      %v416 = vunpack.c.l.b16 %v377
      %v417 = vunpack.c.l.b16 %v378
      %v418 = vunpack.c.l.b16 %v379
      %v419 = vunpack.c.l.b16 %v380
      %v420 = vunpack.c.l.b16 %v381
      %v421 = vunpack.c.l.b16 %v382
      %v422 = vunpack.c.l.b16 %v383
      %v423 = vunpack.c.l.b16 %v384
      %v424 = vunpack.c.l.b16 %v385
      %v425 = vunpack.c.l.b16 %v386
      %v426 = vunpack.c.l.b16 %v387
      %v427 = vunpack.c.l.b16 %v388
      %v428 = vunpack.c.l.b16 %v389
      %v429 = vunpack.c.l.b16 %v390
      %v430 = vunpack.c.l.b16 %v391
      %v431 = vpack.c.b16 %v416, %v415
      %v432 = vpack.c.b16 %v418, %v417
      %v433 = vpack.c.b16 %v420, %v419
      %v434 = vpack.c.b16 %v422, %v421
      %v435 = vpack.c.b16 %v424, %v423
      %v436 = vpack.c.b16 %v426, %v425
      %v437 = vpack.c.b16 %v428, %v427
      %v438 = vpack.c.b16 %v430, %v429
      %447 = vmatprep.subr.bf16.mxu0 0
      %448 = vmatpush1.bf16.msra.mxu0 %v431
      %449 = vmatprep.subr.bf16.mxu0 0
      %450 = vmatpush1.bf16.msra.mxu0 %v432
      %451 = vmatprep.subr.bf16.mxu0 0
      %452 = vmatpush1.bf16.msra.mxu0 %v433
      %453 = vmatprep.subr.bf16.mxu0 0
      %454 = vmatpush1.bf16.msra.mxu0 %v434
      %455 = vmatprep.subr.bf16.mxu0 0
      %456 = vmatpush1.bf16.msra.mxu0 %v435
      %457 = vmatprep.subr.bf16.mxu0 0
      %458 = vmatpush1.bf16.msra.mxu0 %v436
      %459 = vmatprep.subr.bf16.mxu0 0
      %460 = vmatpush1.bf16.msra.mxu0 %v437
      %461 = vmatprep.subr.bf16.mxu0 0
      %462 = vmatpush1.bf16.msra.mxu0 %v438
      %463 = vmatprep.subr.bf16.mxu0 0
      %464 = vmatpush1.bf16.msra.mxu0 0
      %465 = vmatprep.subr.bf16.mxu0 0
      %466 = vmatpush1.bf16.msra.mxu0 0
      %467 = vmatprep.subr.bf16.mxu0 0
      %468 = vmatpush1.bf16.msra.mxu0 0
      %469 = vmatprep.subr.bf16.mxu0 0
      %470 = vmatpush1.bf16.msra.mxu0 0
      %471 = vmatprep.subr.bf16.mxu0 0
      %472 = vmatpush1.bf16.msra.mxu0 0
      %473 = vmatprep.subr.bf16.mxu0 0
      %474 = vmatpush1.bf16.msra.mxu0 0
      %475 = vmatprep.subr.bf16.mxu0 0
      %476 = vmatpush1.bf16.msra.mxu0 0
      %477 = vmatprep.subr.bf16.mxu0 0
      %478 = vmatpush1.bf16.msra.mxu0 0
      %479 = vmatprep.mubr.bf16.mxu0 0
      %480 = vmatmul.mubr.bf16.gmra.mrb[0].mxu0 %v375
      %v481 = vpop.f32.mrb[0].mxu0
      %v482 = vadd.f32 %v397, %v481
      %v483 = vpop.f32.mrb[0].mxu0
      %v484 = vpop.f32.mrb[0].mxu0
      %v485 = vpop.f32.mrb[0].mxu0
      %486 = vdwg.mxu0
      %v487 = vadd.f32 %v275, %v482
      %488 = vst.msk [vmem:[%s273] sm:$0xff] %vm278, %v487
      %p489 = scmp.lt.s32.totalorder %s18, 1
      %s490 = scalar_select %p489, %s18, 1
      %s491 = smul.addr %s490, 8
      %s492 = scalar_lea.vmem %s7, %s491
      // Predicated region
      $region49: #{textembedding_forward.8} parent=47 // pred_check
        %p493 = pneg %p188
      $region50: #{textembedding_forward.8} parent=47 // pred_check_branch
        %495 = sbr.rel (%p493) target = $region52
      $region51: #{textembedding_forward.8} parent=47 // pred_region
        _
      $region52: #{textembedding_forward.8} parent=47 // pred_fallthru
        _
    $region48: #{textembedding_forward.8} parent=5 // pred_fallthru
      _
    %p496 = scmp.le.s32.totalorder 2, %s13
    // Predicated region
    $region53: #{textembedding_forward.8} parent=5 // pred_check
      %p497 = pneg %p496
    $region54: #{textembedding_forward.8} parent=5 // pred_check_branch
      %499 = sbr.rel (%p497) target = $region56
    $region55: #{textembedding_forward.8} parent=5 // pred_region
      %s500 = ssub.s32 %s13, 2
      // Predicated region
      $region57: #{textembedding_forward.8} parent=55 // pred_check
        %p501 = pneg %p194
      $region58: #{textembedding_forward.8} parent=55 // pred_check_branch
        %503 = sbr.rel (%p501) target = $region60
      $region59: #{textembedding_forward.8} parent=55 // pred_region
        %p504 = scmp.lt.s32.totalorder %s19, 1
        %s505 = scalar_select %p504, %s19, 1
        %s506 = smul.addr %s505, 8
        %s507 = scalar_lea.vmem %s7, %s506
      $region60: #{textembedding_forward.8} parent=55 // pred_fallthru
        _
    $region56: #{textembedding_forward.8} parent=5 // pred_fallthru
      _
  $region6: #{textembedding_forward.8} parent=0 // loop_footer
    %s17 = sadd.s32 1, %s13
  $region7: #{textembedding_forward.8} parent=0 // loop_footer_branch
    %12 = sbr.rel target = $region3
  $region8: #{textembedding_forward.8} parent=0 // loop_exit
    _

// kernel: textembedding_forward.6
$region0: #{textembedding_forward.6}
  #allocation0 [shape = 'u32[]', space=smem, size = 0x4, offset = 0x4, fixed_abs, tag = 'smem constant byte address 0x4 - core index']
  #allocation1 [shape = 'u32[144,128]{1,0:T(1,128)}', space=vmem, size = 0x12000, scoped, tag = 'internal scratch']
  %s0 = inlined_call_operand.vmem [shape: s32[2,8,1], index: 0, kind: input, shape index: {}]
  %s1 = inlined_call_operand.vmem [shape: f32[100,32], index: 1, kind: input, shape index: {}]
  %s2 = inlined_call_operand.vmem [shape: bf16[32,32], index: 2, kind: input, shape index: {}]
  %s3 = inlined_call_operand.vmem [shape: f32[1,32], index: 3, kind: input, shape index: {}]
  %s4 = inlined_call_operand.vmem [shape: f32[8,32], index: 4, kind: input, shape index: {}]
  %s5 = inlined_call_operand.vmem [shape: f32[2,8,32], index: 5, kind: output, shape index: {}]
  %s6 = sld [smem:[#allocation0]]
  $region53: #{textembedding_forward.6} parent=0
    _
  %s8 = ssub.s32 1, %s6
  %s9 = scalar_select 0, %s8, %s6
  loop: start=0, step=1, limit=4
  $region2: #{textembedding_forward.6} parent=0 // loop_pre_header
    _
  $region3: #{textembedding_forward.6} parent=0 // loop_header
    %s11 = sphi 0, %s15
    %p12 = scmp.ge.s32.totalorder %s11, 4
    %s21 = sphi 0, %s23
    %s24 = sphi 0, %s21
    %s25 = sphi 0, %s24
    %s41 = sphi 0, %s25
    %s45 = sphi 0, %s45
    %s47 = sphi 0, %s45
    %s48 = sphi 0, %s47
    %s62 = sphi 0, %s48
    %s66 = sphi 0, %s66
    %s68 = sphi 0, %s66
    %s69 = sphi 0, %s68
    %s83 = sphi 0, %s69
    %s87 = sphi 0, %s87
    %s89 = sphi 0, %s87
    %s90 = sphi 0, %s89
    %s104 = sphi 0, %s90
    %s108 = sphi 0, %s108
    %s110 = sphi 0, %s108
    %s111 = sphi 0, %s110
    %s125 = sphi 0, %s111
    %s131 = sphi 0, %s133
    %s134 = sphi 0, %s131
    %s135 = sphi 0, %s134
    %s151 = sphi 0, %s135
  $region4: #{textembedding_forward.6} parent=0 // loop_header_branch
    %14 = sbr.rel (%p12) target = $region8
  $region5: #{textembedding_forward.6} parent=0 // loop_body
    %s16 = ssub.s32 %s11, 1
    %s17 = ssub.s32 %s11, 2
    %s18 = sadd.s32 %s11, 1
    %s19 = ssub.s32 %s11, %s18
    %p20 = scmp.eq.s32.totalorder %s19, 0
    %s22 = sadd.s32 %s21, 1
    %s23 = scalar_select %p20, %s21, %s22
    %p26 = pneg %p20
    %p27 = scmp.eq.s32.totalorder %s11, 1
    %p28 = por %p26, %p27
    %p29 = scmp.ne.s32.totalorder %s21, %s24
    %p30 = scmp.eq.s32.totalorder %s11, 0
    %p31 = por %p29, %p30
    %p32 = scmp.ne.s32.totalorder %s21, %s24
    %p33 = scmp.eq.s32.totalorder %s16, 1
    %p34 = por %p32, %p33
    %p35 = scmp.ne.s32.totalorder %s24, %s25
    %p36 = scmp.eq.s32.totalorder %s16, 0
    %p37 = por %p35, %p36
    %p38 = scmp.ne.s32.totalorder %s24, %s25
    %p39 = scmp.eq.s32.totalorder %s17, 1
    %p40 = por %p38, %p39
    %p42 = scmp.ne.s32.totalorder %s25, %s41
    %p43 = scmp.eq.s32.totalorder %s17, 0
    %p44 = por %p42, %p43
    %s46 = sadd.s32 %s45, 1
    %p49 = scmp.eq.s32.totalorder %s11, 1
    %p50 = scmp.ne.s32.totalorder %s45, %s47
    %p51 = scmp.eq.s32.totalorder %s11, 0
    %p52 = por %p50, %p51
    %p53 = scmp.ne.s32.totalorder %s45, %s47
    %p54 = scmp.eq.s32.totalorder %s16, 1
    %p55 = por %p53, %p54
    %p56 = scmp.ne.s32.totalorder %s47, %s48
    %p57 = scmp.eq.s32.totalorder %s16, 0
    %p58 = por %p56, %p57
    %p59 = scmp.ne.s32.totalorder %s47, %s48
    %p60 = scmp.eq.s32.totalorder %s17, 1
    %p61 = por %p59, %p60
    %p63 = scmp.ne.s32.totalorder %s48, %s62
    %p64 = scmp.eq.s32.totalorder %s17, 0
    %p65 = por %p63, %p64
    %s67 = sadd.s32 %s66, 1
    %p70 = scmp.eq.s32.totalorder %s11, 1
    %p71 = scmp.ne.s32.totalorder %s66, %s68
    %p72 = scmp.eq.s32.totalorder %s11, 0
    %p73 = por %p71, %p72
    %p74 = scmp.ne.s32.totalorder %s66, %s68
    %p75 = scmp.eq.s32.totalorder %s16, 1
    %p76 = por %p74, %p75
    %p77 = scmp.ne.s32.totalorder %s68, %s69
    %p78 = scmp.eq.s32.totalorder %s16, 0
    %p79 = por %p77, %p78
    %p80 = scmp.ne.s32.totalorder %s68, %s69
    %p81 = scmp.eq.s32.totalorder %s17, 1
    %p82 = por %p80, %p81
    %p84 = scmp.ne.s32.totalorder %s69, %s83
    %p85 = scmp.eq.s32.totalorder %s17, 0
    %p86 = por %p84, %p85
    %s88 = sadd.s32 %s87, 1
    %p91 = scmp.eq.s32.totalorder %s11, 1
    %p92 = scmp.ne.s32.totalorder %s87, %s89
    %p93 = scmp.eq.s32.totalorder %s11, 0
    %p94 = por %p92, %p93
    %p95 = scmp.ne.s32.totalorder %s87, %s89
    %p96 = scmp.eq.s32.totalorder %s16, 1
    %p97 = por %p95, %p96
    %p98 = scmp.ne.s32.totalorder %s89, %s90
    %p99 = scmp.eq.s32.totalorder %s16, 0
    %p100 = por %p98, %p99
    %p101 = scmp.ne.s32.totalorder %s89, %s90
    %p102 = scmp.eq.s32.totalorder %s17, 1
    %p103 = por %p101, %p102
    %p105 = scmp.ne.s32.totalorder %s90, %s104
    %p106 = scmp.eq.s32.totalorder %s17, 0
    %p107 = por %p105, %p106
    %s109 = sadd.s32 %s108, 1
    %p112 = scmp.eq.s32.totalorder %s11, 1
    %p113 = scmp.ne.s32.totalorder %s108, %s110
    %p114 = scmp.eq.s32.totalorder %s11, 0
    %p115 = por %p113, %p114
    %p116 = scmp.ne.s32.totalorder %s108, %s110
    %p117 = scmp.eq.s32.totalorder %s16, 1
    %p118 = por %p116, %p117
    %p119 = scmp.ne.s32.totalorder %s110, %s111
    %p120 = scmp.eq.s32.totalorder %s16, 0
    %p121 = por %p119, %p120
    %p122 = scmp.ne.s32.totalorder %s110, %s111
    %p123 = scmp.eq.s32.totalorder %s17, 1
    %p124 = por %p122, %p123
    %p126 = scmp.ne.s32.totalorder %s111, %s125
    %p127 = scmp.eq.s32.totalorder %s17, 0
    %p128 = por %p126, %p127
    %s129 = ssub.s32 %s11, %s18
    %p130 = scmp.eq.s32.totalorder %s129, 0
    %s132 = sadd.s32 %s131, 1
    %s133 = scalar_select %p130, %s131, %s132
    %p136 = pneg %p130
    %p137 = scmp.eq.s32.totalorder %s11, 1
    %p138 = por %p136, %p137
    %p139 = scmp.ne.s32.totalorder %s131, %s134
    %p140 = scmp.eq.s32.totalorder %s11, 0
    %p141 = por %p139, %p140
    %p142 = scmp.ne.s32.totalorder %s131, %s134
    %p143 = scmp.eq.s32.totalorder %s16, 1
    %p144 = por %p142, %p143
    %p145 = scmp.ne.s32.totalorder %s134, %s135
    %p146 = scmp.eq.s32.totalorder %s16, 0
    %p147 = por %p145, %p146
    %p148 = scmp.ne.s32.totalorder %s134, %s135
    %p149 = scmp.eq.s32.totalorder %s17, 1
    %p150 = por %p148, %p149
    %p152 = scmp.ne.s32.totalorder %s135, %s151
    %p153 = scmp.eq.s32.totalorder %s17, 0
    %p154 = por %p152, %p153
    %p155 = scmp.le.s32.totalorder 1, %s11
    %p156 = scmp.lt.s32.totalorder %s11, 3
    %p157 = pnand %p155, %p156
    %p158 = pneg %p157
    // Predicated region
    $region9: #{textembedding_forward.6} parent=5 // pred_check
      _
    $region10: #{textembedding_forward.6} parent=5 // pred_check_branch
      %160 = sbr.rel (%p157) target = $region12
    $region11: #{textembedding_forward.6} parent=5 // pred_region
      %s161 = ssub.s32 %s11, 1
      // Predicated region
      $region13: #{textembedding_forward.6} parent=11 // pred_check
        %p162 = pneg %p58
      $region14: #{textembedding_forward.6} parent=11 // pred_check_branch
        %164 = sbr.rel (%p162) target = $region16
      $region15: #{textembedding_forward.6} parent=11 // pred_region
        _
      $region16: #{textembedding_forward.6} parent=11 // pred_fallthru
        _
      // Predicated region
      $region17: #{textembedding_forward.6} parent=11 // pred_check
        %p165 = pneg %p79
      $region18: #{textembedding_forward.6} parent=11 // pred_check_branch
        %167 = sbr.rel (%p165) target = $region20
      $region19: #{textembedding_forward.6} parent=11 // pred_region
        _
      $region20: #{textembedding_forward.6} parent=11 // pred_fallthru
        _
      // Predicated region
      $region21: #{textembedding_forward.6} parent=11 // pred_check
        %p168 = pneg %p100
      $region22: #{textembedding_forward.6} parent=11 // pred_check_branch
        %170 = sbr.rel (%p168) target = $region24
      $region23: #{textembedding_forward.6} parent=11 // pred_region
        _
      $region24: #{textembedding_forward.6} parent=11 // pred_fallthru
        _
      // Predicated region
      $region25: #{textembedding_forward.6} parent=11 // pred_check
        %p171 = pneg %p121
      $region26: #{textembedding_forward.6} parent=11 // pred_check_branch
        %173 = sbr.rel (%p171) target = $region28
      $region27: #{textembedding_forward.6} parent=11 // pred_region
        _
      $region28: #{textembedding_forward.6} parent=11 // pred_fallthru
        _
    $region12: #{textembedding_forward.6} parent=5 // pred_fallthru
      _
    %p174 = scmp.lt.s32.totalorder %s11, 2
    // Predicated region
    $region29: #{textembedding_forward.6} parent=5 // pred_check
      %p175 = pneg %p174
    $region30: #{textembedding_forward.6} parent=5 // pred_check_branch
      %177 = sbr.rel (%p175) target = $region32
    $region31: #{textembedding_forward.6} parent=5 // pred_region
      // Predicated region
      $region33: #{textembedding_forward.6} parent=31 // pred_check
        %p178 = pneg %p31
      $region34: #{textembedding_forward.6} parent=31 // pred_check_branch
        %180 = sbr.rel (%p178) target = $region36
      $region35: #{textembedding_forward.6} parent=31 // pred_region
        %p181 = scmp.lt.s32.totalorder %s11, 1
        %s182 = scalar_select %p181, %s11, 1
        %s183 = smul.addr %s182, 8
        %s184 = scalar_lea.vmem %s0, %s183
      $region36: #{textembedding_forward.6} parent=31 // pred_fallthru
        _
    $region32: #{textembedding_forward.6} parent=5 // pred_fallthru
      _
    %p185 = scmp.le.s32.totalorder 1, %s11
    %p186 = scmp.lt.s32.totalorder %s11, 3
    %p187 = pnand %p185, %p186
    %p188 = pneg %p187
    // Predicated region
    $region37: #{textembedding_forward.6} parent=5 // pred_check
      _
    $region38: #{textembedding_forward.6} parent=5 // pred_check_branch
      %190 = sbr.rel (%p187) target = $region40
    $region39: #{textembedding_forward.6} parent=5 // pred_region
      %s191 = ssub.s32 %s11, 1
      %p192 = scmp.lt.s32.totalorder %s16, 1
      %s193 = scalar_select %p192, %s16, 1
      %s194 = smul.addr %s193, 8
      %s195 = scalar_lea.vmem %s0, %s194
      %p196 = pneg %p37
      %p197 = pneg %p34
      %p198 = pneg %p58
      %p199 = pneg %p55
      %p200 = pneg %p79
      %p201 = pneg %p76
      %p202 = pneg %p100
      %p203 = pneg %p97
      %p204 = pneg %p121
      %p205 = pneg %p118
      %p206 = pneg %p147
      %p207 = pneg %p144
      %p208 = scmp.lt.s32.totalorder %s16, 1
      %s209 = scalar_select %p208, %s16, 1
      %s210 = smul.addr %s209, 8
      %s211 = scalar_lea.vmem %s5, %s210
      %p212 = scmp.lt.s32.totalorder %s16, 1
      %s213 = scalar_select %p212, %s16, 1
      %s214 = smul.addr %s213, 8
      %s215 = scalar_lea.vmem %s0, %s214
      %p216 = scmp.lt.s32.totalorder %s16, 1
      %s217 = scalar_select %p216, %s16, 1
      %s218 = smul.addr %s217, 8
      %s219 = scalar_lea.vmem %s5, %s218
      %v221 = vld [vmem:[%s215] sm:$0xff]
      %v222 = vlaneseq
      %v223 = vand.u32 %v222, 127
      %224 = vset.pattern.permute.xlu0 0
      %225 = vperm.xlu0 %224, %v221
      %v226 = vpop.permute.xlu0 %225
      %vm227 = vcmp.eq.s32.totalorder %v223, %v226
      %v228 = vsel %vm227, 1, 0
      %v229 = vcvt.s32.f32 %v228
      %v230 = vld [vmem:[%s1] sm:$0xff]
      %v231 = vld [vmem:[%s1 + $0x8] sm:$0xff]
      %v232 = vld [vmem:[%s1 + $0x10] sm:$0xff]
      %v233 = vld [vmem:[%s1 + $0x18] sm:$0xff]
      %v234 = vld [vmem:[%s1 + $0x20] sm:$0xff]
      %v235 = vld [vmem:[%s1 + $0x28] sm:$0xff]
      %v236 = vld [vmem:[%s1 + $0x30] sm:$0xff]
      %v237 = vld [vmem:[%s1 + $0x38] sm:$0xff]
      %v238 = vld [vmem:[%s1 + $0x40] sm:$0xff]
      %v239 = vld [vmem:[%s1 + $0x48] sm:$0xff]
      %v240 = vld [vmem:[%s1 + $0x50] sm:$0xff]
      %v241 = vld [vmem:[%s1 + $0x58] sm:$0xff]
      %v242 = vld [vmem:[%s1 + $0x60] sm:$0xf]
      %vm243 = vcmask 818176
      %v245 = vsel %vm243, %v229, 0
      %vm247 = vcmask 1043456
      %v249 = vsel %vm247, %v242, 0
      %251 = vmatprep.subr.mxu0 0.0
      %252 = vmatpush1.msra.mxu0 %v230
      %253 = vmatprep.subr.mxu0 0.0
      %254 = vmatpush1.msra.mxu0 %v231
      %255 = vmatprep.subr.mxu0 0.0
      %256 = vmatpush1.msra.mxu0 %v232
      %257 = vmatprep.subr.mxu0 0.0
      %258 = vmatpush1.msra.mxu0 %v233
      %259 = vmatprep.subr.mxu0 0.0
      %260 = vmatpush1.msra.mxu0 %v234
      %261 = vmatprep.subr.mxu0 0.0
      %262 = vmatpush1.msra.mxu0 %v235
      %263 = vmatprep.subr.mxu0 0.0
      %264 = vmatpush1.msra.mxu0 %v236
      %265 = vmatprep.subr.mxu0 0.0
      %266 = vmatpush1.msra.mxu0 %v237
      %267 = vmatprep.subr.mxu0 0.0
      %268 = vmatpush1.msra.mxu0 %v238
      %269 = vmatprep.subr.mxu0 0.0
      %270 = vmatpush1.msra.mxu0 %v239
      %271 = vmatprep.subr.mxu0 0.0
      %272 = vmatpush1.msra.mxu0 %v240
      %273 = vmatprep.subr.mxu0 0.0
      %274 = vmatpush1.msra.mxu0 %v241
      %275 = vmatprep.subr.mxu0 0.0
      %276 = vmatpush1.msra.mxu0 %v249
      %277 = vmatprep.subr.mxu0 0.0
      %278 = vmatpush1.msra.mxu0 0.0
      %279 = vmatprep.subr.mxu0 0.0
      %280 = vmatpush1.msra.mxu0 0.0
      %281 = vmatprep.subr.mxu0 0.0
      %282 = vmatpush1.msra.mxu0 0.0
      %283 = vmatprep.subr.mxu0 0.0
      %284 = vmatpush1.msra.mxu0 0.0
      %285 = vmatprep.subr.mxu0 0.0
      %286 = vmatpush1.msra.mxu0 0.0
      %287 = vmatprep.subr.mxu0 0.0
      %288 = vmatpush1.msra.mxu0 0.0
      %289 = vmatprep.subr.mxu0 0.0
      %290 = vmatpush1.msra.mxu0 0.0
      %291 = vmatprep.subr.mxu0 0.0
      %292 = vmatpush1.msra.mxu0 0.0
      %293 = vmatprep.subr.mxu0 0.0
      %294 = vmatpush1.msra.mxu0 0.0
      %295 = vmatprep.subr.mxu0 0.0
      %296 = vmatpush1.msra.mxu0 0.0
      %297 = vmatprep.subr.mxu0 0.0
      %298 = vmatpush1.msra.mxu0 0.0
      %299 = vmatprep.subr.mxu0 0.0
      %300 = vmatpush1.msra.mxu0 0.0
      %301 = vmatprep.subr.mxu0 0.0
      %302 = vmatpush1.msra.mxu0 0.0
      %303 = vmatprep.subr.mxu0 0.0
      %304 = vmatpush1.msra.mxu0 0.0
      %305 = vmatprep.subr.mxu0 0.0
      %306 = vmatpush1.msra.mxu0 0.0
      %307 = vmatprep.subr.mxu0 0.0
      %308 = vmatpush1.msra.mxu0 0.0
      %309 = vmatprep.subr.mxu0 0.0
      %310 = vmatpush1.msra.mxu0 0.0
      %311 = vmatprep.subr.mxu0 0.0
      %312 = vmatpush1.msra.mxu0 0.0
      %313 = vmatprep.subr.mxu0 0.0
      %314 = vmatpush1.msra.mxu0 0.0
      %315 = vmatprep.mubr.f32.mxu0 0.0
      %316 = vmatmul.mubr.f32.gmra.mrb[0].mxu0 %v245
      %v317 = vpop.f32.mrb[0].mxu0
      %v318 = vadd.f32 0.0, %v317
      %v319 = vpop.f32.mrb[0].mxu0
      %320 = vdwg.mxu0
      %v321 = vpack.c.bf16 %v318, %v318
      %v322 = vld [vmem:[%s2] sm:$0xf]
      %v323 = vld [vmem:[%s2 + $0x4] sm:$0xf]
      %v324 = vld [vmem:[%s2 + $0x8] sm:$0xf]
      %v325 = vld [vmem:[%s2 + $0xc] sm:$0xf]
      %v326 = vld [vmem:[%s3] sm:$0x1]
      %v328 = vlaneseq
      %v329 = vshrl.u32 %v328, 7
      %v330 = vsub.s32 0, %v329
      %v331 = vrot.slane %v326, %v330
      %v337 = vunpack.c.l.b16 %v322
      %v338 = vunpack.c.l.b16 %v323
      %v339 = vunpack.c.l.b16 %v324
      %v340 = vunpack.c.l.b16 %v325
      %v341 = vpack.c.b16 %v338, %v337
      %v342 = vpack.c.b16 %v340, %v339
      %vm345 = vcmask 261120
      %v347 = vsel %vm345, %v321, 0
      %349 = vmatprep.subr.bf16.mxu0 0
      %350 = vmatpush1.bf16.msra.mxu0 %v341
      %351 = vmatprep.subr.bf16.mxu0 0
      %352 = vmatpush1.bf16.msra.mxu0 %v342
      %353 = vmatprep.subr.bf16.mxu0 0
      %354 = vmatpush1.bf16.msra.mxu0 0
      %355 = vmatprep.subr.bf16.mxu0 0
      %356 = vmatpush1.bf16.msra.mxu0 0
      %357 = vmatprep.subr.bf16.mxu0 0
      %358 = vmatpush1.bf16.msra.mxu0 0
      %359 = vmatprep.subr.bf16.mxu0 0
      %360 = vmatpush1.bf16.msra.mxu0 0
      %361 = vmatprep.subr.bf16.mxu0 0
      %362 = vmatpush1.bf16.msra.mxu0 0
      %363 = vmatprep.subr.bf16.mxu0 0
      %364 = vmatpush1.bf16.msra.mxu0 0
      %365 = vmatprep.subr.bf16.mxu0 0
      %366 = vmatpush1.bf16.msra.mxu0 0
      %367 = vmatprep.subr.bf16.mxu0 0
      %368 = vmatpush1.bf16.msra.mxu0 0
      %369 = vmatprep.subr.bf16.mxu0 0
      %370 = vmatpush1.bf16.msra.mxu0 0
      %371 = vmatprep.subr.bf16.mxu0 0
      %372 = vmatpush1.bf16.msra.mxu0 0
      %373 = vmatprep.subr.bf16.mxu0 0
      %374 = vmatpush1.bf16.msra.mxu0 0
      %375 = vmatprep.subr.bf16.mxu0 0
      %376 = vmatpush1.bf16.msra.mxu0 0
      %377 = vmatprep.subr.bf16.mxu0 0
      %378 = vmatpush1.bf16.msra.mxu0 0
      %379 = vmatprep.subr.bf16.mxu0 0
      %380 = vmatpush1.bf16.msra.mxu0 0
      %381 = vmatprep.mubr.bf16.mxu0 0
      %382 = vmatmul.mubr.bf16.gmra.mrb[0].mxu0 %v347
      %v383 = vpop.f32.mrb[0].mxu0
      %v384 = vadd.f32 %v331, %v383
      %v385 = vpop.f32.mrb[0].mxu0
      %v386 = vpop.f32.mrb[0].mxu0
      %v387 = vpop.f32.mrb[0].mxu0
      %388 = vdwg.mxu0
      %v389 = vmax.f32 %v384, 0.0
      %v390 = vmul.f32 %v389, 5.656854
      %v391 = vld [vmem:[%s4] sm:$0xff]
      %v392 = vadd.f32 %v390, %v391
      %393 = vst.msk [vmem:[%s219] sm:$0xff] %vm345, %v392
      %p394 = scmp.lt.s32.totalorder %s16, 1
      %s395 = scalar_select %p394, %s16, 1
      %s396 = smul.addr %s395, 8
      %s397 = scalar_lea.vmem %s5, %s396
      // Predicated region
      $region41: #{textembedding_forward.6} parent=39 // pred_check
        %p398 = pneg %p144
      $region42: #{textembedding_forward.6} parent=39 // pred_check_branch
        %400 = sbr.rel (%p398) target = $region44
      $region43: #{textembedding_forward.6} parent=39 // pred_region
        _
      $region44: #{textembedding_forward.6} parent=39 // pred_fallthru
        _
    $region40: #{textembedding_forward.6} parent=5 // pred_fallthru
      _
    %p401 = scmp.le.s32.totalorder 2, %s11
    // Predicated region
    $region45: #{textembedding_forward.6} parent=5 // pred_check
      %p402 = pneg %p401
    $region46: #{textembedding_forward.6} parent=5 // pred_check_branch
      %404 = sbr.rel (%p402) target = $region48
    $region47: #{textembedding_forward.6} parent=5 // pred_region
      %s405 = ssub.s32 %s11, 2
      // Predicated region
      $region49: #{textembedding_forward.6} parent=47 // pred_check
        %p406 = pneg %p150
      $region50: #{textembedding_forward.6} parent=47 // pred_check_branch
        %408 = sbr.rel (%p406) target = $region52
      $region51: #{textembedding_forward.6} parent=47 // pred_region
        %p409 = scmp.lt.s32.totalorder %s17, 1
        %s410 = scalar_select %p409, %s17, 1
        %s411 = smul.addr %s410, 8
        %s412 = scalar_lea.vmem %s5, %s411
      $region52: #{textembedding_forward.6} parent=47 // pred_fallthru
        _
    $region48: #{textembedding_forward.6} parent=5 // pred_fallthru
      _
  $region6: #{textembedding_forward.6} parent=0 // loop_footer
    %s15 = sadd.s32 1, %s11
  $region7: #{textembedding_forward.6} parent=0 // loop_footer_branch
    %10 = sbr.rel target = $region3
  $region8: #{textembedding_forward.6} parent=0 // loop_exit
    _

// kernel: textembedding_forward.7
$region0: #{textembedding_forward.7}
  #allocation0 [shape = 'u32[]', space=smem, size = 0x4, offset = 0x4, fixed_abs, tag = 'smem constant byte address 0x4 - core index']
  #allocation1 [shape = 'u32[144,128]{1,0:T(1,128)}', space=vmem, size = 0x12000, scoped, tag = 'internal scratch']
  #allocation2 [shape = 's32[1]{0}', space=sflag, size = 0x4, scoped, tag = 'scoped memory for textembedding_forward.7']
  #allocation3 [shape = 'u8[512]{0}', space=smem, size = 0x200, scoped, tag = 'prefetched SMEM operand 0']
  %s0 = inlined_call_operand.vmem [shape: s32[2], index: 0, kind: input, shape index: {}]
  %s1 = inlined_call_operand.vmem [shape: f32[2,8,32], index: 1, kind: input, shape index: {}]
  %s2 = inlined_call_operand.vmem [shape: f32[1,32], index: 2, kind: input, shape index: {}]
  %s3 = inlined_call_operand.vmem [shape: f32[1,32], index: 3, kind: input, shape index: {}]
  %s4 = inlined_call_operand.vmem [shape: bf16[32,32], index: 4, kind: input, shape index: {}]
  %s5 = inlined_call_operand.vmem [shape: f32[1,32], index: 5, kind: input, shape index: {}]
  %s6 = inlined_call_operand.vmem [shape: bf16[32,32], index: 6, kind: input, shape index: {}]
  %s7 = inlined_call_operand.vmem [shape: f32[1,32], index: 7, kind: input, shape index: {}]
  %s8 = inlined_call_operand.vmem [shape: bf16[32,32], index: 8, kind: input, shape index: {}]
  %s9 = inlined_call_operand.vmem [shape: f32[1,32], index: 9, kind: input, shape index: {}]
  %s10 = inlined_call_operand.vmem [shape: bf16[32,32], index: 10, kind: input, shape index: {}]
  %s11 = inlined_call_operand.vmem [shape: f32[1,32], index: 11, kind: input, shape index: {}]
  %s12 = inlined_call_operand.vmem [shape: f32[2,8,32], index: 12, kind: output, shape index: {}]
  %s13 = sld [smem:[#allocation0]]
  $region77: #{textembedding_forward.7} parent=0
    _
  %s15 = ssub.s32 1, %s13
  %s16 = scalar_select 0, %s15, %s13
  %s17 = sshll.u32 %s0, 4
  %s18 = int_to_ptr.vmem [resolvable:$true] %s17
  %20 = dma.vmem_to_smem %s18, 16, [#allocation3], [#allocation2]
  %21 = dma.done [#allocation2], 16
  %22 = sfence
  loop: start=0, step=1, limit=4
  $region2: #{textembedding_forward.7} parent=0 // loop_pre_header
    _
  $region3: #{textembedding_forward.7} parent=0 // loop_header
    %s24 = sphi 0, %s28
    %p25 = scmp.ge.s32.totalorder %s24, 4
    %s34 = sphi 0, %s36
    %s37 = sphi 0, %s34
    %s38 = sphi 0, %s37
    %s54 = sphi 0, %s38
    %s58 = sphi 0, %s58
    %s60 = sphi 0, %s58
    %s61 = sphi 0, %s60
    %s75 = sphi 0, %s61
    %s79 = sphi 0, %s79
    %s81 = sphi 0, %s79
    %s82 = sphi 0, %s81
    %s96 = sphi 0, %s82
    %s100 = sphi 0, %s100
    %s102 = sphi 0, %s100
    %s103 = sphi 0, %s102
    %s117 = sphi 0, %s103
    %s121 = sphi 0, %s121
    %s123 = sphi 0, %s121
    %s124 = sphi 0, %s123
    %s138 = sphi 0, %s124
    %s142 = sphi 0, %s142
    %s144 = sphi 0, %s142
    %s145 = sphi 0, %s144
    %s159 = sphi 0, %s145
    %s163 = sphi 0, %s163
    %s165 = sphi 0, %s163
    %s166 = sphi 0, %s165
    %s180 = sphi 0, %s166
    %s184 = sphi 0, %s184
    %s186 = sphi 0, %s184
    %s187 = sphi 0, %s186
    %s201 = sphi 0, %s187
    %s205 = sphi 0, %s205
    %s207 = sphi 0, %s205
    %s208 = sphi 0, %s207
    %s222 = sphi 0, %s208
    %s226 = sphi 0, %s226
    %s228 = sphi 0, %s226
    %s229 = sphi 0, %s228
    %s243 = sphi 0, %s229
    %s247 = sphi 0, %s247
    %s249 = sphi 0, %s247
    %s250 = sphi 0, %s249
    %s264 = sphi 0, %s250
    %s270 = sphi 0, %s272
    %s273 = sphi 0, %s270
    %s274 = sphi 0, %s273
    %s290 = sphi 0, %s274
  $region4: #{textembedding_forward.7} parent=0 // loop_header_branch
    %27 = sbr.rel (%p25) target = $region8
  $region5: #{textembedding_forward.7} parent=0 // loop_body
    %s29 = ssub.s32 %s24, 1
    %s30 = ssub.s32 %s24, 2
    %s31 = sadd.s32 %s24, 1
    %s32 = ssub.s32 %s24, %s31
    %p33 = scmp.eq.s32.totalorder %s32, 0
    %s35 = sadd.s32 %s34, 1
    %s36 = scalar_select %p33, %s34, %s35
    %p39 = pneg %p33
    %p40 = scmp.eq.s32.totalorder %s24, 1
    %p41 = por %p39, %p40
    %p42 = scmp.ne.s32.totalorder %s34, %s37
    %p43 = scmp.eq.s32.totalorder %s24, 0
    %p44 = por %p42, %p43
    %p45 = scmp.ne.s32.totalorder %s34, %s37
    %p46 = scmp.eq.s32.totalorder %s29, 1
    %p47 = por %p45, %p46
    %p48 = scmp.ne.s32.totalorder %s37, %s38
    %p49 = scmp.eq.s32.totalorder %s29, 0
    %p50 = por %p48, %p49
    %p51 = scmp.ne.s32.totalorder %s37, %s38
    %p52 = scmp.eq.s32.totalorder %s30, 1
    %p53 = por %p51, %p52
    %p55 = scmp.ne.s32.totalorder %s38, %s54
    %p56 = scmp.eq.s32.totalorder %s30, 0
    %p57 = por %p55, %p56
    %s59 = sadd.s32 %s58, 1
    %p62 = scmp.eq.s32.totalorder %s24, 1
    %p63 = scmp.ne.s32.totalorder %s58, %s60
    %p64 = scmp.eq.s32.totalorder %s24, 0
    %p65 = por %p63, %p64
    %p66 = scmp.ne.s32.totalorder %s58, %s60
    %p67 = scmp.eq.s32.totalorder %s29, 1
    %p68 = por %p66, %p67
    %p69 = scmp.ne.s32.totalorder %s60, %s61
    %p70 = scmp.eq.s32.totalorder %s29, 0
    %p71 = por %p69, %p70
    %p72 = scmp.ne.s32.totalorder %s60, %s61
    %p73 = scmp.eq.s32.totalorder %s30, 1
    %p74 = por %p72, %p73
    %p76 = scmp.ne.s32.totalorder %s61, %s75
    %p77 = scmp.eq.s32.totalorder %s30, 0
    %p78 = por %p76, %p77
    %s80 = sadd.s32 %s79, 1
    %p83 = scmp.eq.s32.totalorder %s24, 1
    %p84 = scmp.ne.s32.totalorder %s79, %s81
    %p85 = scmp.eq.s32.totalorder %s24, 0
    %p86 = por %p84, %p85
    %p87 = scmp.ne.s32.totalorder %s79, %s81
    %p88 = scmp.eq.s32.totalorder %s29, 1
    %p89 = por %p87, %p88
    %p90 = scmp.ne.s32.totalorder %s81, %s82
    %p91 = scmp.eq.s32.totalorder %s29, 0
    %p92 = por %p90, %p91
    %p93 = scmp.ne.s32.totalorder %s81, %s82
    %p94 = scmp.eq.s32.totalorder %s30, 1
    %p95 = por %p93, %p94
    %p97 = scmp.ne.s32.totalorder %s82, %s96
    %p98 = scmp.eq.s32.totalorder %s30, 0
    %p99 = por %p97, %p98
    %s101 = sadd.s32 %s100, 1
    %p104 = scmp.eq.s32.totalorder %s24, 1
    %p105 = scmp.ne.s32.totalorder %s100, %s102
    %p106 = scmp.eq.s32.totalorder %s24, 0
    %p107 = por %p105, %p106
    %p108 = scmp.ne.s32.totalorder %s100, %s102
    %p109 = scmp.eq.s32.totalorder %s29, 1
    %p110 = por %p108, %p109
    %p111 = scmp.ne.s32.totalorder %s102, %s103
    %p112 = scmp.eq.s32.totalorder %s29, 0
    %p113 = por %p111, %p112
    %p114 = scmp.ne.s32.totalorder %s102, %s103
    %p115 = scmp.eq.s32.totalorder %s30, 1
    %p116 = por %p114, %p115
    %p118 = scmp.ne.s32.totalorder %s103, %s117
    %p119 = scmp.eq.s32.totalorder %s30, 0
    %p120 = por %p118, %p119
    %s122 = sadd.s32 %s121, 1
    %p125 = scmp.eq.s32.totalorder %s24, 1
    %p126 = scmp.ne.s32.totalorder %s121, %s123
    %p127 = scmp.eq.s32.totalorder %s24, 0
    %p128 = por %p126, %p127
    %p129 = scmp.ne.s32.totalorder %s121, %s123
    %p130 = scmp.eq.s32.totalorder %s29, 1
    %p131 = por %p129, %p130
    %p132 = scmp.ne.s32.totalorder %s123, %s124
    %p133 = scmp.eq.s32.totalorder %s29, 0
    %p134 = por %p132, %p133
    %p135 = scmp.ne.s32.totalorder %s123, %s124
    %p136 = scmp.eq.s32.totalorder %s30, 1
    %p137 = por %p135, %p136
    %p139 = scmp.ne.s32.totalorder %s124, %s138
    %p140 = scmp.eq.s32.totalorder %s30, 0
    %p141 = por %p139, %p140
    %s143 = sadd.s32 %s142, 1
    %p146 = scmp.eq.s32.totalorder %s24, 1
    %p147 = scmp.ne.s32.totalorder %s142, %s144
    %p148 = scmp.eq.s32.totalorder %s24, 0
    %p149 = por %p147, %p148
    %p150 = scmp.ne.s32.totalorder %s142, %s144
    %p151 = scmp.eq.s32.totalorder %s29, 1
    %p152 = por %p150, %p151
    %p153 = scmp.ne.s32.totalorder %s144, %s145
    %p154 = scmp.eq.s32.totalorder %s29, 0
    %p155 = por %p153, %p154
    %p156 = scmp.ne.s32.totalorder %s144, %s145
    %p157 = scmp.eq.s32.totalorder %s30, 1
    %p158 = por %p156, %p157
    %p160 = scmp.ne.s32.totalorder %s145, %s159
    %p161 = scmp.eq.s32.totalorder %s30, 0
    %p162 = por %p160, %p161
    %s164 = sadd.s32 %s163, 1
    %p167 = scmp.eq.s32.totalorder %s24, 1
    %p168 = scmp.ne.s32.totalorder %s163, %s165
    %p169 = scmp.eq.s32.totalorder %s24, 0
    %p170 = por %p168, %p169
    %p171 = scmp.ne.s32.totalorder %s163, %s165
    %p172 = scmp.eq.s32.totalorder %s29, 1
    %p173 = por %p171, %p172
    %p174 = scmp.ne.s32.totalorder %s165, %s166
    %p175 = scmp.eq.s32.totalorder %s29, 0
    %p176 = por %p174, %p175
    %p177 = scmp.ne.s32.totalorder %s165, %s166
    %p178 = scmp.eq.s32.totalorder %s30, 1
    %p179 = por %p177, %p178
    %p181 = scmp.ne.s32.totalorder %s166, %s180
    %p182 = scmp.eq.s32.totalorder %s30, 0
    %p183 = por %p181, %p182
    %s185 = sadd.s32 %s184, 1
    %p188 = scmp.eq.s32.totalorder %s24, 1
    %p189 = scmp.ne.s32.totalorder %s184, %s186
    %p190 = scmp.eq.s32.totalorder %s24, 0
    %p191 = por %p189, %p190
    %p192 = scmp.ne.s32.totalorder %s184, %s186
    %p193 = scmp.eq.s32.totalorder %s29, 1
    %p194 = por %p192, %p193
    %p195 = scmp.ne.s32.totalorder %s186, %s187
    %p196 = scmp.eq.s32.totalorder %s29, 0
    %p197 = por %p195, %p196
    %p198 = scmp.ne.s32.totalorder %s186, %s187
    %p199 = scmp.eq.s32.totalorder %s30, 1
    %p200 = por %p198, %p199
    %p202 = scmp.ne.s32.totalorder %s187, %s201
    %p203 = scmp.eq.s32.totalorder %s30, 0
    %p204 = por %p202, %p203
    %s206 = sadd.s32 %s205, 1
    %p209 = scmp.eq.s32.totalorder %s24, 1
    %p210 = scmp.ne.s32.totalorder %s205, %s207
    %p211 = scmp.eq.s32.totalorder %s24, 0
    %p212 = por %p210, %p211
    %p213 = scmp.ne.s32.totalorder %s205, %s207
    %p214 = scmp.eq.s32.totalorder %s29, 1
    %p215 = por %p213, %p214
    %p216 = scmp.ne.s32.totalorder %s207, %s208
    %p217 = scmp.eq.s32.totalorder %s29, 0
    %p218 = por %p216, %p217
    %p219 = scmp.ne.s32.totalorder %s207, %s208
    %p220 = scmp.eq.s32.totalorder %s30, 1
    %p221 = por %p219, %p220
    %p223 = scmp.ne.s32.totalorder %s208, %s222
    %p224 = scmp.eq.s32.totalorder %s30, 0
    %p225 = por %p223, %p224
    %s227 = sadd.s32 %s226, 1
    %p230 = scmp.eq.s32.totalorder %s24, 1
    %p231 = scmp.ne.s32.totalorder %s226, %s228
    %p232 = scmp.eq.s32.totalorder %s24, 0
    %p233 = por %p231, %p232
    %p234 = scmp.ne.s32.totalorder %s226, %s228
    %p235 = scmp.eq.s32.totalorder %s29, 1
    %p236 = por %p234, %p235
    %p237 = scmp.ne.s32.totalorder %s228, %s229
    %p238 = scmp.eq.s32.totalorder %s29, 0
    %p239 = por %p237, %p238
    %p240 = scmp.ne.s32.totalorder %s228, %s229
    %p241 = scmp.eq.s32.totalorder %s30, 1
    %p242 = por %p240, %p241
    %p244 = scmp.ne.s32.totalorder %s229, %s243
    %p245 = scmp.eq.s32.totalorder %s30, 0
    %p246 = por %p244, %p245
    %s248 = sadd.s32 %s247, 1
    %p251 = scmp.eq.s32.totalorder %s24, 1
    %p252 = scmp.ne.s32.totalorder %s247, %s249
    %p253 = scmp.eq.s32.totalorder %s24, 0
    %p254 = por %p252, %p253
    %p255 = scmp.ne.s32.totalorder %s247, %s249
    %p256 = scmp.eq.s32.totalorder %s29, 1
    %p257 = por %p255, %p256
    %p258 = scmp.ne.s32.totalorder %s249, %s250
    %p259 = scmp.eq.s32.totalorder %s29, 0
    %p260 = por %p258, %p259
    %p261 = scmp.ne.s32.totalorder %s249, %s250
    %p262 = scmp.eq.s32.totalorder %s30, 1
    %p263 = por %p261, %p262
    %p265 = scmp.ne.s32.totalorder %s250, %s264
    %p266 = scmp.eq.s32.totalorder %s30, 0
    %p267 = por %p265, %p266
    %s268 = ssub.s32 %s24, %s31
    %p269 = scmp.eq.s32.totalorder %s268, 0
    %s271 = sadd.s32 %s270, 1
    %s272 = scalar_select %p269, %s270, %s271
    %p275 = pneg %p269
    %p276 = scmp.eq.s32.totalorder %s24, 1
    %p277 = por %p275, %p276
    %p278 = scmp.ne.s32.totalorder %s270, %s273
    %p279 = scmp.eq.s32.totalorder %s24, 0
    %p280 = por %p278, %p279
    %p281 = scmp.ne.s32.totalorder %s270, %s273
    %p282 = scmp.eq.s32.totalorder %s29, 1
    %p283 = por %p281, %p282
    %p284 = scmp.ne.s32.totalorder %s273, %s274
    %p285 = scmp.eq.s32.totalorder %s29, 0
    %p286 = por %p284, %p285
    %p287 = scmp.ne.s32.totalorder %s273, %s274
    %p288 = scmp.eq.s32.totalorder %s30, 1
    %p289 = por %p287, %p288
    %p291 = scmp.ne.s32.totalorder %s274, %s290
    %p292 = scmp.eq.s32.totalorder %s30, 0
    %p293 = por %p291, %p292
    %p294 = scmp.le.s32.totalorder 1, %s24
    %p295 = scmp.lt.s32.totalorder %s24, 3
    %p296 = pnand %p294, %p295
    %p297 = pneg %p296
    // Predicated region
    $region9: #{textembedding_forward.7} parent=5 // pred_check
      _
    $region10: #{textembedding_forward.7} parent=5 // pred_check_branch
      %299 = sbr.rel (%p296) target = $region12
    $region11: #{textembedding_forward.7} parent=5 // pred_region
      %s300 = ssub.s32 %s24, 1
      // Predicated region
      $region13: #{textembedding_forward.7} parent=11 // pred_check
        %p301 = pneg %p71
      $region14: #{textembedding_forward.7} parent=11 // pred_check_branch
        %303 = sbr.rel (%p301) target = $region16
      $region15: #{textembedding_forward.7} parent=11 // pred_region
        _
      $region16: #{textembedding_forward.7} parent=11 // pred_fallthru
        _
      // Predicated region
      $region17: #{textembedding_forward.7} parent=11 // pred_check
        %p304 = pneg %p92
      $region18: #{textembedding_forward.7} parent=11 // pred_check_branch
        %306 = sbr.rel (%p304) target = $region20
      $region19: #{textembedding_forward.7} parent=11 // pred_region
        _
      $region20: #{textembedding_forward.7} parent=11 // pred_fallthru
        _
      // Predicated region
      $region21: #{textembedding_forward.7} parent=11 // pred_check
        %p307 = pneg %p113
      $region22: #{textembedding_forward.7} parent=11 // pred_check_branch
        %309 = sbr.rel (%p307) target = $region24
      $region23: #{textembedding_forward.7} parent=11 // pred_region
        _
      $region24: #{textembedding_forward.7} parent=11 // pred_fallthru
        _
      // Predicated region
      $region25: #{textembedding_forward.7} parent=11 // pred_check
        %p310 = pneg %p134
      $region26: #{textembedding_forward.7} parent=11 // pred_check_branch
        %312 = sbr.rel (%p310) target = $region28
      $region27: #{textembedding_forward.7} parent=11 // pred_region
        _
      $region28: #{textembedding_forward.7} parent=11 // pred_fallthru
        _
      // Predicated region
      $region29: #{textembedding_forward.7} parent=11 // pred_check
        %p313 = pneg %p155
      $region30: #{textembedding_forward.7} parent=11 // pred_check_branch
        %315 = sbr.rel (%p313) target = $region32
      $region31: #{textembedding_forward.7} parent=11 // pred_region
        _
      $region32: #{textembedding_forward.7} parent=11 // pred_fallthru
        _
      // Predicated region
      $region33: #{textembedding_forward.7} parent=11 // pred_check
        %p316 = pneg %p176
      $region34: #{textembedding_forward.7} parent=11 // pred_check_branch
        %318 = sbr.rel (%p316) target = $region36
      $region35: #{textembedding_forward.7} parent=11 // pred_region
        _
      $region36: #{textembedding_forward.7} parent=11 // pred_fallthru
        _
      // Predicated region
      $region37: #{textembedding_forward.7} parent=11 // pred_check
        %p319 = pneg %p197
      $region38: #{textembedding_forward.7} parent=11 // pred_check_branch
        %321 = sbr.rel (%p319) target = $region40
      $region39: #{textembedding_forward.7} parent=11 // pred_region
        _
      $region40: #{textembedding_forward.7} parent=11 // pred_fallthru
        _
      // Predicated region
      $region41: #{textembedding_forward.7} parent=11 // pred_check
        %p322 = pneg %p218
      $region42: #{textembedding_forward.7} parent=11 // pred_check_branch
        %324 = sbr.rel (%p322) target = $region44
      $region43: #{textembedding_forward.7} parent=11 // pred_region
        _
      $region44: #{textembedding_forward.7} parent=11 // pred_fallthru
        _
      // Predicated region
      $region45: #{textembedding_forward.7} parent=11 // pred_check
        %p325 = pneg %p239
      $region46: #{textembedding_forward.7} parent=11 // pred_check_branch
        %327 = sbr.rel (%p325) target = $region48
      $region47: #{textembedding_forward.7} parent=11 // pred_region
        _
      $region48: #{textembedding_forward.7} parent=11 // pred_fallthru
        _
      // Predicated region
      $region49: #{textembedding_forward.7} parent=11 // pred_check
        %p328 = pneg %p260
      $region50: #{textembedding_forward.7} parent=11 // pred_check_branch
        %330 = sbr.rel (%p328) target = $region52
      $region51: #{textembedding_forward.7} parent=11 // pred_region
        _
      $region52: #{textembedding_forward.7} parent=11 // pred_fallthru
        _
    $region12: #{textembedding_forward.7} parent=5 // pred_fallthru
      _
    %p331 = scmp.lt.s32.totalorder %s24, 2
    // Predicated region
    $region53: #{textembedding_forward.7} parent=5 // pred_check
      %p332 = pneg %p331
    $region54: #{textembedding_forward.7} parent=5 // pred_check_branch
      %334 = sbr.rel (%p332) target = $region56
    $region55: #{textembedding_forward.7} parent=5 // pred_region
      // Predicated region
      $region57: #{textembedding_forward.7} parent=55 // pred_check
        %p335 = pneg %p44
      $region58: #{textembedding_forward.7} parent=55 // pred_check_branch
        %337 = sbr.rel (%p335) target = $region60
      $region59: #{textembedding_forward.7} parent=55 // pred_region
        %p338 = scmp.lt.s32.totalorder %s24, 1
        %s339 = scalar_select %p338, %s24, 1
        %s340 = smul.addr %s339, 8
        %s341 = scalar_lea.vmem %s1, %s340
      $region60: #{textembedding_forward.7} parent=55 // pred_fallthru
        _
    $region56: #{textembedding_forward.7} parent=5 // pred_fallthru
      _
    %p342 = scmp.le.s32.totalorder 1, %s24
    %p343 = scmp.lt.s32.totalorder %s24, 3
    %p344 = pnand %p342, %p343
    %p345 = pneg %p344
    // Predicated region
    $region61: #{textembedding_forward.7} parent=5 // pred_check
      _
    $region62: #{textembedding_forward.7} parent=5 // pred_check_branch
      %347 = sbr.rel (%p344) target = $region64
    $region63: #{textembedding_forward.7} parent=5 // pred_region
      %s348 = ssub.s32 %s24, 1
      %p349 = scmp.lt.s32.totalorder %s29, 1
      %s350 = scalar_select %p349, %s29, 1
      %s351 = smul.addr %s350, 8
      %s352 = scalar_lea.vmem %s1, %s351
      %p353 = pneg %p50
      %p354 = pneg %p47
      %p355 = pneg %p71
      %p356 = pneg %p68
      %p357 = pneg %p92
      %p358 = pneg %p89
      %p359 = pneg %p113
      %p360 = pneg %p110
      %p361 = pneg %p134
      %p362 = pneg %p131
      %p363 = pneg %p155
      %p364 = pneg %p152
      %p365 = pneg %p176
      %p366 = pneg %p173
      %p367 = pneg %p197
      %p368 = pneg %p194
      %p369 = pneg %p218
      %p370 = pneg %p215
      %p371 = pneg %p239
      %p372 = pneg %p236
      %p373 = pneg %p260
      %p374 = pneg %p257
      %p375 = pneg %p286
      %p376 = pneg %p283
      %p377 = scmp.lt.s32.totalorder %s29, 1
      %s378 = scalar_select %p377, %s29, 1
      %s379 = smul.addr %s378, 8
      %s380 = scalar_lea.vmem %s12, %s379
      %p381 = scmp.lt.s32.totalorder %s29, 1
      %s382 = scalar_select %p381, %s29, 1
      %s383 = smul.addr %s382, 8
      %s384 = scalar_lea.vmem %s1, %s383
      %p385 = scmp.lt.s32.totalorder %s29, 1
      %s386 = scalar_select %p385, %s29, 1
      %s387 = smul.addr %s386, 8
      %s388 = scalar_lea.vmem %s12, %s387
      %v390 = vld [vmem:[%s384] sm:$0xff]
      %v391 = vld [vmem:[%s2] sm:$0x1]
      %v392 = vld [vmem:[%s3] sm:$0x1]
      %vm393 = vcmask 261120
      %v394 = vsel %vm393, %v390, 0.0
      %395 = vadd.xlane.f32.xlu0 %v394
      %v396 = vpop.xlane.xlu0 %395
      %v397 = vrcp.pop 32.0
      %v398 = vmul.f32 %v396, %v397
      %v399 = vsub.f32 %v390, %v398
      %v400 = vmul.f32 %v399, %v399
      %v401 = vsel %vm393, %v400, 0.0
      %402 = vadd.xlane.f32.xlu0 %v401
      %v403 = vpop.xlane.xlu0 %402
      %v404 = vmul.f32 %v403, %v397
      %v405 = vadd.f32 %v404, 1e-05
      %v406 = vrsqrt.pop %v405
      %v407 = vmul.f32 %v399, %v406
      %v409 = vlaneseq
      %v410 = vshrl.u32 %v409, 7
      %v411 = vsub.s32 0, %v410
      %v412 = vrot.slane %v391, %v411
      %v414 = vmul.f32 %v407, %v412
      %v416 = vlaneseq
      %v417 = vshrl.u32 %v416, 7
      %v418 = vsub.s32 0, %v417
      %v419 = vrot.slane %v392, %v418
      %v421 = vadd.f32 %v414, %v419
      %v422 = vpack.c.bf16 %v421, %v421
      %v423 = vld [vmem:[%s4] sm:$0xf]
      %v424 = vld [vmem:[%s4 + $0x4] sm:$0xf]
      %v425 = vld [vmem:[%s4 + $0x8] sm:$0xf]
      %v426 = vld [vmem:[%s4 + $0xc] sm:$0xf]
      %v427 = vld [vmem:[%s5] sm:$0x1]
      %v429 = vlaneseq
      %v430 = vshrl.u32 %v429, 7
      %v431 = vsub.s32 0, %v430
      %v432 = vrot.slane %v427, %v431
      %v438 = vunpack.c.l.b16 %v423
      %v439 = vunpack.c.l.b16 %v424
      %v440 = vunpack.c.l.b16 %v425
      %v441 = vunpack.c.l.b16 %v426
      %v442 = vpack.c.b16 %v439, %v438
      %v443 = vpack.c.b16 %v441, %v440
      %v447 = vsel %vm393, %v422, 0
      %449 = vmatprep.subr.bf16.mxu0 0
      %450 = vmatpush1.bf16.msra.mxu0 %v442
      %451 = vmatprep.subr.bf16.mxu0 0
      %452 = vmatpush1.bf16.msra.mxu0 %v443
      %453 = vmatprep.subr.bf16.mxu0 0
      %454 = vmatpush1.bf16.msra.mxu0 0
      %455 = vmatprep.subr.bf16.mxu0 0
      %456 = vmatpush1.bf16.msra.mxu0 0
      %457 = vmatprep.subr.bf16.mxu0 0
      %458 = vmatpush1.bf16.msra.mxu0 0
      %459 = vmatprep.subr.bf16.mxu0 0
      %460 = vmatpush1.bf16.msra.mxu0 0
      %461 = vmatprep.subr.bf16.mxu0 0
      %462 = vmatpush1.bf16.msra.mxu0 0
      %463 = vmatprep.subr.bf16.mxu0 0
      %464 = vmatpush1.bf16.msra.mxu0 0
      %465 = vmatprep.subr.bf16.mxu0 0
      %466 = vmatpush1.bf16.msra.mxu0 0
      %467 = vmatprep.subr.bf16.mxu0 0
      %468 = vmatpush1.bf16.msra.mxu0 0
      %469 = vmatprep.subr.bf16.mxu0 0
      %470 = vmatpush1.bf16.msra.mxu0 0
      %471 = vmatprep.subr.bf16.mxu0 0
      %472 = vmatpush1.bf16.msra.mxu0 0
      %473 = vmatprep.subr.bf16.mxu0 0
      %474 = vmatpush1.bf16.msra.mxu0 0
      %475 = vmatprep.subr.bf16.mxu0 0
      %476 = vmatpush1.bf16.msra.mxu0 0
      %477 = vmatprep.subr.bf16.mxu0 0
      %478 = vmatpush1.bf16.msra.mxu0 0
      %479 = vmatprep.subr.bf16.mxu0 0
      %480 = vmatpush1.bf16.msra.mxu0 0
      %481 = vmatprep.mubr.bf16.mxu0 0
      %482 = vmatmul.mubr.bf16.gmra.mrb[0].mxu0 %v447
      %v483 = vpop.f32.mrb[0].mxu0
      %v484 = vadd.f32 %v432, %v483
      %v485 = vpop.f32.mrb[0].mxu0
      %v486 = vpop.f32.mrb[0].mxu0
      %v487 = vpop.f32.mrb[0].mxu0
      %488 = vdwg.mxu0
      %v489 = vld [vmem:[%s6] sm:$0xf]
      %v490 = vld [vmem:[%s6 + $0x4] sm:$0xf]
      %v491 = vld [vmem:[%s6 + $0x8] sm:$0xf]
      %v492 = vld [vmem:[%s6 + $0xc] sm:$0xf]
      %v493 = vld [vmem:[%s7] sm:$0x1]
      %v495 = vlaneseq
      %v496 = vshrl.u32 %v495, 7
      %v497 = vsub.s32 0, %v496
      %v498 = vrot.slane %v493, %v497
      %v504 = vunpack.c.l.b16 %v489
      %v505 = vunpack.c.l.b16 %v490
      %v506 = vunpack.c.l.b16 %v491
      %v507 = vunpack.c.l.b16 %v492
      %v508 = vpack.c.b16 %v505, %v504
      %v509 = vpack.c.b16 %v507, %v506
      %512 = vmatprep.subr.bf16.mxu0 0
      %513 = vmatpush1.bf16.msra.mxu0 %v508
      %514 = vmatprep.subr.bf16.mxu0 0
      %515 = vmatpush1.bf16.msra.mxu0 %v509
      %516 = vmatprep.subr.bf16.mxu0 0
      %517 = vmatpush1.bf16.msra.mxu0 0
      %518 = vmatprep.subr.bf16.mxu0 0
      %519 = vmatpush1.bf16.msra.mxu0 0
      %520 = vmatprep.subr.bf16.mxu0 0
      %521 = vmatpush1.bf16.msra.mxu0 0
      %522 = vmatprep.subr.bf16.mxu0 0
      %523 = vmatpush1.bf16.msra.mxu0 0
      %524 = vmatprep.subr.bf16.mxu0 0
      %525 = vmatpush1.bf16.msra.mxu0 0
      %526 = vmatprep.subr.bf16.mxu0 0
      %527 = vmatpush1.bf16.msra.mxu0 0
      %528 = vmatprep.subr.bf16.mxu0 0
      %529 = vmatpush1.bf16.msra.mxu0 0
      %530 = vmatprep.subr.bf16.mxu0 0
      %531 = vmatpush1.bf16.msra.mxu0 0
      %532 = vmatprep.subr.bf16.mxu0 0
      %533 = vmatpush1.bf16.msra.mxu0 0
      %534 = vmatprep.subr.bf16.mxu0 0
      %535 = vmatpush1.bf16.msra.mxu0 0
      %536 = vmatprep.subr.bf16.mxu0 0
      %537 = vmatpush1.bf16.msra.mxu0 0
      %538 = vmatprep.subr.bf16.mxu0 0
      %539 = vmatpush1.bf16.msra.mxu0 0
      %540 = vmatprep.subr.bf16.mxu0 0
      %541 = vmatpush1.bf16.msra.mxu0 0
      %542 = vmatprep.subr.bf16.mxu0 0
      %543 = vmatpush1.bf16.msra.mxu0 0
      %544 = vmatprep.mubr.bf16.mxu0 0
      %545 = vmatmul.mubr.bf16.gmra.mrb[0].mxu0 %v447
      %v546 = vpop.f32.mrb[0].mxu0
      %v547 = vadd.f32 %v498, %v546
      %v548 = vpop.f32.mrb[0].mxu0
      %v549 = vpop.f32.mrb[0].mxu0
      %v550 = vpop.f32.mrb[0].mxu0
      %551 = vdwg.mxu0
      %v552 = vld [vmem:[%s8] sm:$0xf]
      %v553 = vld [vmem:[%s8 + $0x4] sm:$0xf]
      %v554 = vld [vmem:[%s8 + $0x8] sm:$0xf]
      %v555 = vld [vmem:[%s8 + $0xc] sm:$0xf]
      %v556 = vld [vmem:[%s9] sm:$0x1]
      %v558 = vlaneseq
      %v559 = vshrl.u32 %v558, 7
      %v560 = vsub.s32 0, %v559
      %v561 = vrot.slane %v556, %v560
      %v567 = vunpack.c.l.b16 %v552
      %v568 = vunpack.c.l.b16 %v553
      %v569 = vunpack.c.l.b16 %v554
      %v570 = vunpack.c.l.b16 %v555
      %v571 = vpack.c.b16 %v568, %v567
      %v572 = vpack.c.b16 %v570, %v569
      %575 = vmatprep.subr.bf16.mxu0 0
      %576 = vmatpush1.bf16.msra.mxu0 %v571
      %577 = vmatprep.subr.bf16.mxu0 0
      %578 = vmatpush1.bf16.msra.mxu0 %v572
      %579 = vmatprep.subr.bf16.mxu0 0
      %580 = vmatpush1.bf16.msra.mxu0 0
      %581 = vmatprep.subr.bf16.mxu0 0
      %582 = vmatpush1.bf16.msra.mxu0 0
      %583 = vmatprep.subr.bf16.mxu0 0
      %584 = vmatpush1.bf16.msra.mxu0 0
      %585 = vmatprep.subr.bf16.mxu0 0
      %586 = vmatpush1.bf16.msra.mxu0 0
      %587 = vmatprep.subr.bf16.mxu0 0
      %588 = vmatpush1.bf16.msra.mxu0 0
      %589 = vmatprep.subr.bf16.mxu0 0
      %590 = vmatpush1.bf16.msra.mxu0 0
      %591 = vmatprep.subr.bf16.mxu0 0
      %592 = vmatpush1.bf16.msra.mxu0 0
      %593 = vmatprep.subr.bf16.mxu0 0
      %594 = vmatpush1.bf16.msra.mxu0 0
      %595 = vmatprep.subr.bf16.mxu0 0
      %596 = vmatpush1.bf16.msra.mxu0 0
      %597 = vmatprep.subr.bf16.mxu0 0
      %598 = vmatpush1.bf16.msra.mxu0 0
      %599 = vmatprep.subr.bf16.mxu0 0
      %600 = vmatpush1.bf16.msra.mxu0 0
      %601 = vmatprep.subr.bf16.mxu0 0
      %602 = vmatpush1.bf16.msra.mxu0 0
      %603 = vmatprep.subr.bf16.mxu0 0
      %604 = vmatpush1.bf16.msra.mxu0 0
      %605 = vmatprep.subr.bf16.mxu0 0
      %606 = vmatpush1.bf16.msra.mxu0 0
      %607 = vmatprep.mubr.bf16.mxu0 0
      %608 = vmatmul.mubr.bf16.gmra.mrb[0].mxu0 %v447
      %v609 = vpop.f32.mrb[0].mxu0
      %v610 = vadd.f32 %v561, %v609
      %v611 = vpop.f32.mrb[0].mxu0
      %v612 = vpop.f32.mrb[0].mxu0
      %v613 = vpop.f32.mrb[0].mxu0
      %614 = vdwg.mxu0
      %v615 = vmul.f32 %v484, 0.35355338
      %s616 = sld [smem:[#allocation3 + %s29]]
      %v617 = vlaneseq
      %v618 = vand.u32 %v617, 127
      %v619 = vstv %s616
      %vm620 = vcmp.lt.s32.totalorder %v618, %v619
      %v621 = vsel %vm620, 0.0, -1e+09
      %v622 = vpack.c.bf16 %v615, %v615
      %v623 = vpack.c.bf16 %v547, %v547
      %v624 = vpack.c.bf16 %v610, %v610
      %vm625 = vcmask 64512
      %v627 = vsel %vm625, %v622, 0
      %v630 = vsel %vm625, %v623, 0
      %632 = vmatprep.subr.bf16.mxu0 0
      %633 = vmatpush1.bf16.xpose.msra.mxu0 %v630
      %634 = vmatprep.subr.bf16.mxu0 0
      %635 = vmatpush1.bf16.xpose.msra.mxu0 0
      %636 = vmatprep.subr.bf16.mxu0 0
      %637 = vmatpush1.bf16.xpose.msra.mxu0 0
      %638 = vmatprep.subr.bf16.mxu0 0
      %639 = vmatpush1.bf16.xpose.msra.mxu0 0
      %640 = vmatprep.subr.bf16.mxu0 0
      %641 = vmatpush1.bf16.xpose.msra.mxu0 0
      %642 = vmatprep.subr.bf16.mxu0 0
      %643 = vmatpush1.bf16.xpose.msra.mxu0 0
      %644 = vmatprep.subr.bf16.mxu0 0
      %645 = vmatpush1.bf16.xpose.msra.mxu0 0
      %646 = vmatprep.subr.bf16.mxu0 0
      %647 = vmatpush1.bf16.xpose.msra.mxu0 0
      %648 = vmatprep.subr.bf16.mxu0 0
      %649 = vmatpush1.bf16.xpose.msra.mxu0 0
      %650 = vmatprep.subr.bf16.mxu0 0
      %651 = vmatpush1.bf16.xpose.msra.mxu0 0
      %652 = vmatprep.subr.bf16.mxu0 0
      %653 = vmatpush1.bf16.xpose.msra.mxu0 0
      %654 = vmatprep.subr.bf16.mxu0 0
      %655 = vmatpush1.bf16.xpose.msra.mxu0 0
      %656 = vmatprep.subr.bf16.mxu0 0
      %657 = vmatpush1.bf16.xpose.msra.mxu0 0
      %658 = vmatprep.subr.bf16.mxu0 0
      %659 = vmatpush1.bf16.xpose.msra.mxu0 0
      %660 = vmatprep.subr.bf16.mxu0 0
      %661 = vmatpush1.bf16.xpose.msra.mxu0 0
      %662 = vmatprep.subr.bf16.mxu0 0
      %663 = vmatpush1.bf16.xpose.msra.mxu0 0
      %664 = vmatprep.mubr.bf16.mxu0 0
      %665 = vmatmul.mubr.bf16.gmra.mrb[0].mxu0 %v627
      %v666 = vpop.f32.mrb[0].mxu0
      %v667 = vadd.f32 %v621, %v666
      %v668 = vpop.f32.mrb[0].mxu0
      %v669 = vpop.f32.mrb[0].mxu0
      %v670 = vpop.f32.mrb[0].mxu0
      %671 = vdwg.mxu0
      %v672 = vsel %vm625, %v667, -inf
      %673 = vmax.xlane.f32.xlu0 %v672
      %v674 = vpop.xlane.xlu0 %673
      %v675 = vsub.f32 %v667, %v674
      %v676 = vmul.f32 %v675, 1.442695
      %v677 = vpow.pop %v676
      %v678 = vsel %vm625, %v677, 0.0
      %679 = vadd.xlane.f32.xlu0 %v678
      %v680 = vpop.xlane.xlu0 %679
      %v681 = vpack.c.bf16 %v677, %v677
      %v683 = vsel %vm625, %v681, 0
      %vm685 = vcmask 1043456
      %v687 = vsel %vm685, %v624, 0
      %689 = vmatprep.subr.bf16.mxu0 0
      %690 = vmatpush1.bf16.msra.mxu0 %v687
      %691 = vmatprep.subr.bf16.mxu0 0
      %692 = vmatpush1.bf16.msra.mxu0 0
      %693 = vmatprep.subr.bf16.mxu0 0
      %694 = vmatpush1.bf16.msra.mxu0 0
      %695 = vmatprep.subr.bf16.mxu0 0
      %696 = vmatpush1.bf16.msra.mxu0 0
      %697 = vmatprep.subr.bf16.mxu0 0
      %698 = vmatpush1.bf16.msra.mxu0 0
      %699 = vmatprep.subr.bf16.mxu0 0
      %700 = vmatpush1.bf16.msra.mxu0 0
      %701 = vmatprep.subr.bf16.mxu0 0
      %702 = vmatpush1.bf16.msra.mxu0 0
      %703 = vmatprep.subr.bf16.mxu0 0
      %704 = vmatpush1.bf16.msra.mxu0 0
      %705 = vmatprep.subr.bf16.mxu0 0
      %706 = vmatpush1.bf16.msra.mxu0 0
      %707 = vmatprep.subr.bf16.mxu0 0
      %708 = vmatpush1.bf16.msra.mxu0 0
      %709 = vmatprep.subr.bf16.mxu0 0
      %710 = vmatpush1.bf16.msra.mxu0 0
      %711 = vmatprep.subr.bf16.mxu0 0
      %712 = vmatpush1.bf16.msra.mxu0 0
      %713 = vmatprep.subr.bf16.mxu0 0
      %714 = vmatpush1.bf16.msra.mxu0 0
      %715 = vmatprep.subr.bf16.mxu0 0
      %716 = vmatpush1.bf16.msra.mxu0 0
      %717 = vmatprep.subr.bf16.mxu0 0
      %718 = vmatpush1.bf16.msra.mxu0 0
      %719 = vmatprep.subr.bf16.mxu0 0
      %720 = vmatpush1.bf16.msra.mxu0 0
      %721 = vmatprep.mubr.bf16.mxu0 0
      %722 = vmatmul.mubr.bf16.gmra.mrb[0].mxu0 %v683
      %v723 = vpop.f32.mrb[0].mxu0
      %v724 = vadd.f32 0.0, %v723
      %v725 = vpop.f32.mrb[0].mxu0
      %v726 = vpop.f32.mrb[0].mxu0
      %v727 = vpop.f32.mrb[0].mxu0
      %728 = vdwg.mxu0
      %v729 = vrcp.pop %v680
      %v730 = vmul.f32 %v724, %v729
      %732 = vrot.lane.b32.xlu0 %v622, 120
      %v733 = vpop.permute.xlu0 %732
      %735 = vrot.lane.b32.xlu0 %v623, 120
      %v736 = vpop.permute.xlu0 %735
      %v738 = vsel %vm625, %v733, 0
      %v741 = vsel %vm625, %v736, 0
      %743 = vmatprep.subr.bf16.mxu0 0
      %744 = vmatpush1.bf16.xpose.msra.mxu0 %v741
      %745 = vmatprep.subr.bf16.mxu0 0
      %746 = vmatpush1.bf16.xpose.msra.mxu0 0
      %747 = vmatprep.subr.bf16.mxu0 0
      %748 = vmatpush1.bf16.xpose.msra.mxu0 0
      %749 = vmatprep.subr.bf16.mxu0 0
      %750 = vmatpush1.bf16.xpose.msra.mxu0 0
      %751 = vmatprep.subr.bf16.mxu0 0
      %752 = vmatpush1.bf16.xpose.msra.mxu0 0
      %753 = vmatprep.subr.bf16.mxu0 0
      %754 = vmatpush1.bf16.xpose.msra.mxu0 0
      %755 = vmatprep.subr.bf16.mxu0 0
      %756 = vmatpush1.bf16.xpose.msra.mxu0 0
      %757 = vmatprep.subr.bf16.mxu0 0
      %758 = vmatpush1.bf16.xpose.msra.mxu0 0
      %759 = vmatprep.subr.bf16.mxu0 0
      %760 = vmatpush1.bf16.xpose.msra.mxu0 0
      %761 = vmatprep.subr.bf16.mxu0 0
      %762 = vmatpush1.bf16.xpose.msra.mxu0 0
      %763 = vmatprep.subr.bf16.mxu0 0
      %764 = vmatpush1.bf16.xpose.msra.mxu0 0
      %765 = vmatprep.subr.bf16.mxu0 0
      %766 = vmatpush1.bf16.xpose.msra.mxu0 0
      %767 = vmatprep.subr.bf16.mxu0 0
      %768 = vmatpush1.bf16.xpose.msra.mxu0 0
      %769 = vmatprep.subr.bf16.mxu0 0
      %770 = vmatpush1.bf16.xpose.msra.mxu0 0
      %771 = vmatprep.subr.bf16.mxu0 0
      %772 = vmatpush1.bf16.xpose.msra.mxu0 0
      %773 = vmatprep.subr.bf16.mxu0 0
      %774 = vmatpush1.bf16.xpose.msra.mxu0 0
      %775 = vmatprep.mubr.bf16.mxu0 0
      %776 = vmatmul.mubr.bf16.gmra.mrb[0].mxu0 %v738
      %v777 = vpop.f32.mrb[0].mxu0
      %v778 = vadd.f32 %v621, %v777
      %v779 = vpop.f32.mrb[0].mxu0
      %v780 = vpop.f32.mrb[0].mxu0
      %v781 = vpop.f32.mrb[0].mxu0
      %782 = vdwg.mxu0
      %v783 = vsel %vm625, %v778, -inf
      %784 = vmax.xlane.f32.xlu0 %v783
      %v785 = vpop.xlane.xlu0 %784
      %v786 = vsub.f32 %v778, %v785
      %v787 = vmul.f32 %v786, 1.442695
      %v788 = vpow.pop %v787
      %v789 = vsel %vm625, %v788, 0.0
      %790 = vadd.xlane.f32.xlu0 %v789
      %v791 = vpop.xlane.xlu0 %790
      %v792 = vpack.c.bf16 %v788, %v788
      %794 = vrot.lane.b32.xlu0 %v624, 120
      %v795 = vpop.permute.xlu0 %794
      %v797 = vsel %vm625, %v792, 0
      %v800 = vsel %vm685, %v795, 0
      %802 = vmatprep.subr.bf16.mxu0 0
      %803 = vmatpush1.bf16.msra.mxu0 %v800
      %804 = vmatprep.subr.bf16.mxu0 0
      %805 = vmatpush1.bf16.msra.mxu0 0
      %806 = vmatprep.subr.bf16.mxu0 0
      %807 = vmatpush1.bf16.msra.mxu0 0
      %808 = vmatprep.subr.bf16.mxu0 0
      %809 = vmatpush1.bf16.msra.mxu0 0
      %810 = vmatprep.subr.bf16.mxu0 0
      %811 = vmatpush1.bf16.msra.mxu0 0
      %812 = vmatprep.subr.bf16.mxu0 0
      %813 = vmatpush1.bf16.msra.mxu0 0
      %814 = vmatprep.subr.bf16.mxu0 0
      %815 = vmatpush1.bf16.msra.mxu0 0
      %816 = vmatprep.subr.bf16.mxu0 0
      %817 = vmatpush1.bf16.msra.mxu0 0
      %818 = vmatprep.subr.bf16.mxu0 0
      %819 = vmatpush1.bf16.msra.mxu0 0
      %820 = vmatprep.subr.bf16.mxu0 0
      %821 = vmatpush1.bf16.msra.mxu0 0
      %822 = vmatprep.subr.bf16.mxu0 0
      %823 = vmatpush1.bf16.msra.mxu0 0
      %824 = vmatprep.subr.bf16.mxu0 0
      %825 = vmatpush1.bf16.msra.mxu0 0
      %826 = vmatprep.subr.bf16.mxu0 0
      %827 = vmatpush1.bf16.msra.mxu0 0
      %828 = vmatprep.subr.bf16.mxu0 0
      %829 = vmatpush1.bf16.msra.mxu0 0
      %830 = vmatprep.subr.bf16.mxu0 0
      %831 = vmatpush1.bf16.msra.mxu0 0
      %832 = vmatprep.subr.bf16.mxu0 0
      %833 = vmatpush1.bf16.msra.mxu0 0
      %834 = vmatprep.mubr.bf16.mxu0 0
      %835 = vmatmul.mubr.bf16.gmra.mrb[0].mxu0 %v797
      %v836 = vpop.f32.mrb[0].mxu0
      %v837 = vadd.f32 0.0, %v836
      %v838 = vpop.f32.mrb[0].mxu0
      %v839 = vpop.f32.mrb[0].mxu0
      %v840 = vpop.f32.mrb[0].mxu0
      %841 = vdwg.mxu0
      %v842 = vrcp.pop %v791
      %v843 = vmul.f32 %v837, %v842
      %844 = vrot.lane.b32.xlu0 %v622, 112
      %v845 = vpop.permute.xlu0 %844
      %846 = vrot.lane.b32.xlu0 %v623, 112
      %v847 = vpop.permute.xlu0 %846
      %v849 = vsel %vm625, %v845, 0
      %v852 = vsel %vm625, %v847, 0
      %854 = vmatprep.subr.bf16.mxu0 0
      %855 = vmatpush1.bf16.xpose.msra.mxu0 %v852
      %856 = vmatprep.subr.bf16.mxu0 0
      %857 = vmatpush1.bf16.xpose.msra.mxu0 0
      %858 = vmatprep.subr.bf16.mxu0 0
      %859 = vmatpush1.bf16.xpose.msra.mxu0 0
      %860 = vmatprep.subr.bf16.mxu0 0
      %861 = vmatpush1.bf16.xpose.msra.mxu0 0
      %862 = vmatprep.subr.bf16.mxu0 0
      %863 = vmatpush1.bf16.xpose.msra.mxu0 0
      %864 = vmatprep.subr.bf16.mxu0 0
      %865 = vmatpush1.bf16.xpose.msra.mxu0 0
      %866 = vmatprep.subr.bf16.mxu0 0
      %867 = vmatpush1.bf16.xpose.msra.mxu0 0
      %868 = vmatprep.subr.bf16.mxu0 0
      %869 = vmatpush1.bf16.xpose.msra.mxu0 0
      %870 = vmatprep.subr.bf16.mxu0 0
      %871 = vmatpush1.bf16.xpose.msra.mxu0 0
      %872 = vmatprep.subr.bf16.mxu0 0
      %873 = vmatpush1.bf16.xpose.msra.mxu0 0
      %874 = vmatprep.subr.bf16.mxu0 0
      %875 = vmatpush1.bf16.xpose.msra.mxu0 0
      %876 = vmatprep.subr.bf16.mxu0 0
      %877 = vmatpush1.bf16.xpose.msra.mxu0 0
      %878 = vmatprep.subr.bf16.mxu0 0
      %879 = vmatpush1.bf16.xpose.msra.mxu0 0
      %880 = vmatprep.subr.bf16.mxu0 0
      %881 = vmatpush1.bf16.xpose.msra.mxu0 0
      %882 = vmatprep.subr.bf16.mxu0 0
      %883 = vmatpush1.bf16.xpose.msra.mxu0 0
      %884 = vmatprep.subr.bf16.mxu0 0
      %885 = vmatpush1.bf16.xpose.msra.mxu0 0
      %886 = vmatprep.mubr.bf16.mxu0 0
      %887 = vmatmul.mubr.bf16.gmra.mrb[0].mxu0 %v849
      %v888 = vpop.f32.mrb[0].mxu0
      %v889 = vadd.f32 %v621, %v888
      %v890 = vpop.f32.mrb[0].mxu0
      %v891 = vpop.f32.mrb[0].mxu0
      %v892 = vpop.f32.mrb[0].mxu0
      %893 = vdwg.mxu0
      %v894 = vsel %vm625, %v889, -inf
      %895 = vmax.xlane.f32.xlu0 %v894
      %v896 = vpop.xlane.xlu0 %895
      %v897 = vsub.f32 %v889, %v896
      %v898 = vmul.f32 %v897, 1.442695
      %v899 = vpow.pop %v898
      %v900 = vsel %vm625, %v899, 0.0
      %901 = vadd.xlane.f32.xlu0 %v900
      %v902 = vpop.xlane.xlu0 %901
      %v903 = vpack.c.bf16 %v899, %v899
      %904 = vrot.lane.b32.xlu0 %v624, 112
      %v905 = vpop.permute.xlu0 %904
      %v907 = vsel %vm625, %v903, 0
      %v910 = vsel %vm685, %v905, 0
      %912 = vmatprep.subr.bf16.mxu0 0
      %913 = vmatpush1.bf16.msra.mxu0 %v910
      %914 = vmatprep.subr.bf16.mxu0 0
      %915 = vmatpush1.bf16.msra.mxu0 0
      %916 = vmatprep.subr.bf16.mxu0 0
      %917 = vmatpush1.bf16.msra.mxu0 0
      %918 = vmatprep.subr.bf16.mxu0 0
      %919 = vmatpush1.bf16.msra.mxu0 0
      %920 = vmatprep.subr.bf16.mxu0 0
      %921 = vmatpush1.bf16.msra.mxu0 0
      %922 = vmatprep.subr.bf16.mxu0 0
      %923 = vmatpush1.bf16.msra.mxu0 0
      %924 = vmatprep.subr.bf16.mxu0 0
      %925 = vmatpush1.bf16.msra.mxu0 0
      %926 = vmatprep.subr.bf16.mxu0 0
      %927 = vmatpush1.bf16.msra.mxu0 0
      %928 = vmatprep.subr.bf16.mxu0 0
      %929 = vmatpush1.bf16.msra.mxu0 0
      %930 = vmatprep.subr.bf16.mxu0 0
      %931 = vmatpush1.bf16.msra.mxu0 0
      %932 = vmatprep.subr.bf16.mxu0 0
      %933 = vmatpush1.bf16.msra.mxu0 0
      %934 = vmatprep.subr.bf16.mxu0 0
      %935 = vmatpush1.bf16.msra.mxu0 0
      %936 = vmatprep.subr.bf16.mxu0 0
      %937 = vmatpush1.bf16.msra.mxu0 0
      %938 = vmatprep.subr.bf16.mxu0 0
      %939 = vmatpush1.bf16.msra.mxu0 0
      %940 = vmatprep.subr.bf16.mxu0 0
      %941 = vmatpush1.bf16.msra.mxu0 0
      %942 = vmatprep.subr.bf16.mxu0 0
      %943 = vmatpush1.bf16.msra.mxu0 0
      %944 = vmatprep.mubr.bf16.mxu0 0
      %945 = vmatmul.mubr.bf16.gmra.mrb[0].mxu0 %v907
      %v946 = vpop.f32.mrb[0].mxu0
      %v947 = vadd.f32 0.0, %v946
      %v948 = vpop.f32.mrb[0].mxu0
      %v949 = vpop.f32.mrb[0].mxu0
      %v950 = vpop.f32.mrb[0].mxu0
      %951 = vdwg.mxu0
      %v952 = vrcp.pop %v902
      %v953 = vmul.f32 %v947, %v952
      %954 = vrot.lane.b32.xlu0 %v622, 104
      %v955 = vpop.permute.xlu0 %954
      %956 = vrot.lane.b32.xlu0 %v623, 104
      %v957 = vpop.permute.xlu0 %956
      %v959 = vsel %vm625, %v955, 0
      %v962 = vsel %vm625, %v957, 0
      %964 = vmatprep.subr.bf16.mxu0 0
      %965 = vmatpush1.bf16.xpose.msra.mxu0 %v962
      %966 = vmatprep.subr.bf16.mxu0 0
      %967 = vmatpush1.bf16.xpose.msra.mxu0 0
      %968 = vmatprep.subr.bf16.mxu0 0
      %969 = vmatpush1.bf16.xpose.msra.mxu0 0
      %970 = vmatprep.subr.bf16.mxu0 0
      %971 = vmatpush1.bf16.xpose.msra.mxu0 0
      %972 = vmatprep.subr.bf16.mxu0 0
      %973 = vmatpush1.bf16.xpose.msra.mxu0 0
      %974 = vmatprep.subr.bf16.mxu0 0
      %975 = vmatpush1.bf16.xpose.msra.mxu0 0
      %976 = vmatprep.subr.bf16.mxu0 0
      %977 = vmatpush1.bf16.xpose.msra.mxu0 0
      %978 = vmatprep.subr.bf16.mxu0 0
      %979 = vmatpush1.bf16.xpose.msra.mxu0 0
      %980 = vmatprep.subr.bf16.mxu0 0
      %981 = vmatpush1.bf16.xpose.msra.mxu0 0
      %982 = vmatprep.subr.bf16.mxu0 0
      %983 = vmatpush1.bf16.xpose.msra.mxu0 0
      %984 = vmatprep.subr.bf16.mxu0 0
      %985 = vmatpush1.bf16.xpose.msra.mxu0 0
      %986 = vmatprep.subr.bf16.mxu0 0
      %987 = vmatpush1.bf16.xpose.msra.mxu0 0
      %988 = vmatprep.subr.bf16.mxu0 0
      %989 = vmatpush1.bf16.xpose.msra.mxu0 0
      %990 = vmatprep.subr.bf16.mxu0 0
      %991 = vmatpush1.bf16.xpose.msra.mxu0 0
      %992 = vmatprep.subr.bf16.mxu0 0
      %993 = vmatpush1.bf16.xpose.msra.mxu0 0
      %994 = vmatprep.subr.bf16.mxu0 0
      %995 = vmatpush1.bf16.xpose.msra.mxu0 0
      %996 = vmatprep.mubr.bf16.mxu0 0
      %997 = vmatmul.mubr.bf16.gmra.mrb[0].mxu0 %v959
      %v998 = vpop.f32.mrb[0].mxu0
      %v999 = vadd.f32 %v621, %v998
      %v1000 = vpop.f32.mrb[0].mxu0
      %v1001 = vpop.f32.mrb[0].mxu0
      %v1002 = vpop.f32.mrb[0].mxu0
      %1003 = vdwg.mxu0
      %v1004 = vsel %vm625, %v999, -inf
      %1005 = vmax.xlane.f32.xlu0 %v1004
      %v1006 = vpop.xlane.xlu0 %1005
      %v1007 = vsub.f32 %v999, %v1006
      %v1008 = vmul.f32 %v1007, 1.442695
      %v1009 = vpow.pop %v1008
      %v1010 = vsel %vm625, %v1009, 0.0
      %1011 = vadd.xlane.f32.xlu0 %v1010
      %v1012 = vpop.xlane.xlu0 %1011
      %v1013 = vpack.c.bf16 %v1009, %v1009
      %1014 = vrot.lane.b32.xlu0 %v624, 104
      %v1015 = vpop.permute.xlu0 %1014
      %v1017 = vsel %vm625, %v1013, 0
      %v1020 = vsel %vm685, %v1015, 0
      %1022 = vmatprep.subr.bf16.mxu0 0
      %1023 = vmatpush1.bf16.msra.mxu0 %v1020
      %1024 = vmatprep.subr.bf16.mxu0 0
      %1025 = vmatpush1.bf16.msra.mxu0 0
      %1026 = vmatprep.subr.bf16.mxu0 0
      %1027 = vmatpush1.bf16.msra.mxu0 0
      %1028 = vmatprep.subr.bf16.mxu0 0
      %1029 = vmatpush1.bf16.msra.mxu0 0
      %1030 = vmatprep.subr.bf16.mxu0 0
      %1031 = vmatpush1.bf16.msra.mxu0 0
      %1032 = vmatprep.subr.bf16.mxu0 0
      %1033 = vmatpush1.bf16.msra.mxu0 0
      %1034 = vmatprep.subr.bf16.mxu0 0
      %1035 = vmatpush1.bf16.msra.mxu0 0
      %1036 = vmatprep.subr.bf16.mxu0 0
      %1037 = vmatpush1.bf16.msra.mxu0 0
      %1038 = vmatprep.subr.bf16.mxu0 0
      %1039 = vmatpush1.bf16.msra.mxu0 0
      %1040 = vmatprep.subr.bf16.mxu0 0
      %1041 = vmatpush1.bf16.msra.mxu0 0
      %1042 = vmatprep.subr.bf16.mxu0 0
      %1043 = vmatpush1.bf16.msra.mxu0 0
      %1044 = vmatprep.subr.bf16.mxu0 0
      %1045 = vmatpush1.bf16.msra.mxu0 0
      %1046 = vmatprep.subr.bf16.mxu0 0
      %1047 = vmatpush1.bf16.msra.mxu0 0
      %1048 = vmatprep.subr.bf16.mxu0 0
      %1049 = vmatpush1.bf16.msra.mxu0 0
      %1050 = vmatprep.subr.bf16.mxu0 0
      %1051 = vmatpush1.bf16.msra.mxu0 0
      %1052 = vmatprep.subr.bf16.mxu0 0
      %1053 = vmatpush1.bf16.msra.mxu0 0
      %1054 = vmatprep.mubr.bf16.mxu0 0
      %1055 = vmatmul.mubr.bf16.gmra.mrb[0].mxu0 %v1017
      %v1056 = vpop.f32.mrb[0].mxu0
      %v1057 = vadd.f32 0.0, %v1056
      %v1058 = vpop.f32.mrb[0].mxu0
      %v1059 = vpop.f32.mrb[0].mxu0
      %v1060 = vpop.f32.mrb[0].mxu0
      %1061 = vdwg.mxu0
      %v1062 = vrcp.pop %v1012
      %v1063 = vmul.f32 %v1057, %v1062
      %1065 = vrot.lane.b32.xlu0 %v843, 8
      %v1066 = vpop.permute.xlu0 %1065
      %1069 = vrot.lane.b32.xlu0 %v953, 16
      %v1070 = vpop.permute.xlu0 %1069
      %1073 = vrot.lane.b32.xlu0 %v1063, 24
      %v1074 = vpop.permute.xlu0 %1073
      %v1076 = vsel %vm625, %v730, %v1066
      %vm1077 = vcmask 130048
      %v1078 = vsel %vm1077, %v1076, %v1070
      %vm1079 = vcmask 195584
      %v1080 = vsel %vm1079, %v1078, %v1074
      %v1081 = vpack.c.bf16 %v1080, %v1080
      %v1082 = vld [vmem:[%s10] sm:$0xf]
      %v1083 = vld [vmem:[%s10 + $0x4] sm:$0xf]
      %v1084 = vld [vmem:[%s10 + $0x8] sm:$0xf]
      %v1085 = vld [vmem:[%s10 + $0xc] sm:$0xf]
      %v1086 = vld [vmem:[%s11] sm:$0x1]
      %v1088 = vlaneseq
      %v1089 = vshrl.u32 %v1088, 7
      %v1090 = vsub.s32 0, %v1089
      %v1091 = vrot.slane %v1086, %v1090
      %v1097 = vunpack.c.l.b16 %v1082
      %v1098 = vunpack.c.l.b16 %v1083
      %v1099 = vunpack.c.l.b16 %v1084
      %v1100 = vunpack.c.l.b16 %v1085
      %v1101 = vpack.c.b16 %v1098, %v1097
      %v1102 = vpack.c.b16 %v1100, %v1099
      %v1106 = vsel %vm393, %v1081, 0
      %1108 = vmatprep.subr.bf16.mxu0 0
      %1109 = vmatpush1.bf16.msra.mxu0 %v1101
      %1110 = vmatprep.subr.bf16.mxu0 0
      %1111 = vmatpush1.bf16.msra.mxu0 %v1102
      %1112 = vmatprep.subr.bf16.mxu0 0
      %1113 = vmatpush1.bf16.msra.mxu0 0
      %1114 = vmatprep.subr.bf16.mxu0 0
      %1115 = vmatpush1.bf16.msra.mxu0 0
      %1116 = vmatprep.subr.bf16.mxu0 0
      %1117 = vmatpush1.bf16.msra.mxu0 0
      %1118 = vmatprep.subr.bf16.mxu0 0
      %1119 = vmatpush1.bf16.msra.mxu0 0
      %1120 = vmatprep.subr.bf16.mxu0 0
      %1121 = vmatpush1.bf16.msra.mxu0 0
      %1122 = vmatprep.subr.bf16.mxu0 0
      %1123 = vmatpush1.bf16.msra.mxu0 0
      %1124 = vmatprep.subr.bf16.mxu0 0
      %1125 = vmatpush1.bf16.msra.mxu0 0
      %1126 = vmatprep.subr.bf16.mxu0 0
      %1127 = vmatpush1.bf16.msra.mxu0 0
      %1128 = vmatprep.subr.bf16.mxu0 0
      %1129 = vmatpush1.bf16.msra.mxu0 0
      %1130 = vmatprep.subr.bf16.mxu0 0
      %1131 = vmatpush1.bf16.msra.mxu0 0
      %1132 = vmatprep.subr.bf16.mxu0 0
      %1133 = vmatpush1.bf16.msra.mxu0 0
      %1134 = vmatprep.subr.bf16.mxu0 0
      %1135 = vmatpush1.bf16.msra.mxu0 0
      %1136 = vmatprep.subr.bf16.mxu0 0
      %1137 = vmatpush1.bf16.msra.mxu0 0
      %1138 = vmatprep.subr.bf16.mxu0 0
      %1139 = vmatpush1.bf16.msra.mxu0 0
      %1140 = vmatprep.mubr.bf16.mxu0 0
      %1141 = vmatmul.mubr.bf16.gmra.mrb[0].mxu0 %v1106
      %v1142 = vpop.f32.mrb[0].mxu0
      %v1143 = vadd.f32 %v1091, %v1142
      %v1144 = vpop.f32.mrb[0].mxu0
      %v1145 = vpop.f32.mrb[0].mxu0
      %v1146 = vpop.f32.mrb[0].mxu0
      %1147 = vdwg.mxu0
      %v1148 = vadd.f32 %v390, %v1143
      %1149 = vst.msk [vmem:[%s388] sm:$0xff] %vm393, %v1148
      %p1150 = scmp.lt.s32.totalorder %s29, 1
      %s1151 = scalar_select %p1150, %s29, 1
      %s1152 = smul.addr %s1151, 8
      %s1153 = scalar_lea.vmem %s12, %s1152
      // Predicated region
      $region65: #{textembedding_forward.7} parent=63 // pred_check
        %p1154 = pneg %p283
      $region66: #{textembedding_forward.7} parent=63 // pred_check_branch
        %1156 = sbr.rel (%p1154) target = $region68
      $region67: #{textembedding_forward.7} parent=63 // pred_region
        _
      $region68: #{textembedding_forward.7} parent=63 // pred_fallthru
        _
    $region64: #{textembedding_forward.7} parent=5 // pred_fallthru
      _
    %p1157 = scmp.le.s32.totalorder 2, %s24
    // Predicated region
    $region69: #{textembedding_forward.7} parent=5 // pred_check
      %p1158 = pneg %p1157
    $region70: #{textembedding_forward.7} parent=5 // pred_check_branch
      %1160 = sbr.rel (%p1158) target = $region72
    $region71: #{textembedding_forward.7} parent=5 // pred_region
      %s1161 = ssub.s32 %s24, 2
      // Predicated region
      $region73: #{textembedding_forward.7} parent=71 // pred_check
        %p1162 = pneg %p289
      $region74: #{textembedding_forward.7} parent=71 // pred_check_branch
        %1164 = sbr.rel (%p1162) target = $region76
      $region75: #{textembedding_forward.7} parent=71 // pred_region
        %p1165 = scmp.lt.s32.totalorder %s30, 1
        %s1166 = scalar_select %p1165, %s30, 1
        %s1167 = smul.addr %s1166, 8
        %s1168 = scalar_lea.vmem %s12, %s1167
      $region76: #{textembedding_forward.7} parent=71 // pred_fallthru
        _
    $region72: #{textembedding_forward.7} parent=5 // pred_fallthru
      _
  $region6: #{textembedding_forward.7} parent=0 // loop_footer
    %s28 = sadd.s32 1, %s24
  $region7: #{textembedding_forward.7} parent=0 // loop_footer_branch
    %23 = sbr.rel target = $region3
  $region8: #{textembedding_forward.7} parent=0 // loop_exit
    _

</llo_original>
